<compile_context>
chip_gen: v7x
topology: tpu7x:2x2x1
jax: 0.10.0
libtpu: 0.0.40
codegen_flags: <defaults>
</compile_context>

<pallas_src>
import functools
import math

import numpy as np
import jax
import jax.numpy as jnp
from jax import lax
from jax.experimental import pallas as pl
from jax.experimental.pallas import tpu as pltpu


TT_MAX = 256  # output-row tile size (rows per MXU matmul)


# ------------------------------- Pallas kernel -------------------------------
def _make_conv_kernel(S, Kq, K, TT, U, apply_lrelu):
    """One (rows, Cout_blk) output tile: sum over taps of (TT,Cin_blk)@(Cin_blk,Cout_blk)."""

    def kernel(x_ref, w_ref, b_ref, o_ref):
        cout = o_ref.shape[-1]
        acc = jnp.zeros((TT, cout), jnp.float32)
        for r in range(S):              # static unroll over stride phases
            for q in range(Kq):         # static unroll over folded taps
                if q * S + r >= K:      # tap exists only as zero padding
                    continue
                # contiguous (TT, Cin_blk) load — no strided slice, no reshape
                xk = x_ref[0, r * U + q: r * U + q + TT, :]
                acc = acc + jnp.dot(xk, w_ref[0, r * Kq + q],
                                    preferred_element_type=jnp.float32)
        acc = acc + b_ref[0].astype(jnp.float32)
        if apply_lrelu:
            acc = jnp.where(acc >= 0, acc, 0.1 * acc)     # F.leaky_relu(x, 0.1)
        o_ref[0] = acc.astype(o_ref.dtype)

    return kernel


@functools.lru_cache(maxsize=None)
def _get_conv_call(n_bt, S, Kq, K, TT, U, cin_blk, cout_blk, n_co, dense_in,
                   apply_lrelu):
    """Build (and cache) the jitted pallas_call for one layer configuration."""
    kernel = _make_conv_kernel(S, Kq, K, TT, U, apply_lrelu)

    if dense_in:
        x_map = lambda co, bt: (bt, 0, 0)       # every Cout tile reads the full Cin
    else:
        x_map = lambda co, bt: (bt, 0, co)      # super-group co reads its own Cin block

    call = pl.pallas_call(
        kernel,
        out_shape=jax.ShapeDtypeStruct((n_bt, TT, n_co * cout_blk), jnp.bfloat16),
        grid=(n_co, n_bt),
        in_specs=[
            pl.BlockSpec((1, S * U, cin_blk), x_map),
            pl.BlockSpec((1, S * Kq, cin_blk, cout_blk),
                         lambda co, bt: (co, 0, 0, 0)),
            pl.BlockSpec((1, 1, cout_blk), lambda co, bt: (co, 0, 0)),
        ],
        out_specs=pl.BlockSpec((1, TT, cout_blk), lambda co, bt: (bt, 0, co)),
        compiler_params=pltpu.CompilerParams(
            dimension_semantics=("parallel", "parallel")),
    )
    return jax.jit(call)


def conv1d_pallas(x, layer, *, apply_lrelu, tt_max=TT_MAX):
    """x: (B, L, Cin_eff) bf16 channels-last. Returns (B, L_out, Cout) bf16."""
    B, L, cin_eff = x.shape
    assert cin_eff == layer["cin_eff"], (cin_eff, layer["cin_eff"])
    K, S, P, Kq = layer["K"], layer["stride"], layer["pad"], layer["Kq"]

    L_out = (L + 2 * P - K) // S + 1
    TT = min(tt_max, L_out)
    n_t = -(-L_out // TT)
    U = TT + Kq - 1

    # ONE gather builds zero padding + halo + stride-phase fold:
    #   tile[t, r, u, :] = x[(t*TT + u)*S + r - P, :]   (zeros outside [0, L))
    idx = ((np.arange(n_t)[:, None, None] * TT + np.arange(U)[None, None, :]) * S
           + np.arange(S)[None, :, None] - P)                       # (n_t, S, U)
    valid = jnp.asarray((idx >= 0) & (idx < L))
    idx_c = jnp.asarray(np.clip(idx, 0, L - 1).astype(np.int32))
    xg = jnp.take(x, idx_c, axis=1, mode="clip")                    # (B, n_t, S, U, C)
    xg = jnp.where(valid[None, :, :, :, None], xg, 0.0).astype(jnp.bfloat16)
    xg = xg.reshape(B * n_t, S * U, cin_eff)

    call = _get_conv_call(B * n_t, S, Kq, K, TT, U,
                          layer["cin_blk"], layer["cout_blk"], layer["n_co"],
                          layer["dense_in"], apply_lrelu)
    out = call(xg, layer["w"], layer["b"])
    out = out.reshape(B, n_t * TT, layer["n_co"] * layer["cout_blk"])
    return out[:, :L_out, :layer["cout"]]


# ------------------------------ layer preparation -----------------------------
def _prepare_conv_layer(w, b, stride, pad, groups):
    """w: (Cout, Cin//groups, K) torch layout, f32; b: (Cout,) f32."""
    Cout, Cin_g, K = w.shape
    Cin = Cin_g * groups
    S = stride
    Kq = -(-K // S)

    # choose super-groups so both channel blocks are >=128 wide (or full extent)
    if groups == 1:
        gps, Gp = 1, 1
    else:
        Cout_g = Cout // groups
        gps = max(1, 128 // Cin_g, 128 // Cout_g)
        gps = min(gps, groups)
        if groups % gps != 0:
            gps = groups
        Gp = groups // gps

    if Gp > 1:
        # per-super-group block-diagonal weights: (Gp, K, gps*Cin_g, gps*Cout_g)
        Cout_g = Cout // groups
        wr = w.reshape(Gp, gps, Cout_g, Cin_g, K)
        eye = jnp.eye(gps, dtype=w.dtype)
        wblk = jnp.einsum('sjoik,aj->skaijo', wr, eye)
        w_blocks = wblk.reshape(Gp, K, gps * Cin_g, gps * Cout_g)
        n_co, cin_blk, cout_blk = Gp, gps * Cin_g, gps * Cout_g
        dense_in = False
        cin_eff = Cin
        b_eff = b
    else:
        # dense (or fully fused grouped) effective weight (K, Cin, Cout)
        if groups == 1:
            w_full = jnp.transpose(w, (2, 1, 0))
        else:
            Cout_g = Cout // groups
            wr = w.reshape(groups, Cout_g, Cin_g, K)
            eye = jnp.eye(groups, dtype=w.dtype)
            w_full = jnp.einsum('hoik,gh->kgiho', wr, eye).reshape(K, Cin, Cout)
        cin_eff, cout_eff, b_eff = Cin, Cout, b
        if cin_eff < 8:                        # layer 0: pad Cin 1 -> 8 lanes
            w_full = jnp.pad(w_full, ((0, 0), (0, 8 - cin_eff), (0, 0)))
            cin_eff = 8
        if cout_eff < 128:                     # conv_post: pad Cout 1 -> 128 lanes
            w_full = jnp.pad(w_full, ((0, 0), (0, 0), (0, 128 - cout_eff)))
            b_eff = jnp.pad(b, (0, 128 - cout_eff))
            cout_eff = 128
        # tile output channels (256-wide tiles for the 1024-channel layers)
        n_co = cout_eff // 256 if (cout_eff % 256 == 0 and cout_eff >= 512) else 1
        cout_blk = cout_eff // n_co
        cin_blk = cin_eff
        dense_in = True
        w_blocks = jnp.transpose(w_full.reshape(K, cin_eff, n_co, cout_blk),
                                 (2, 0, 1, 3))              # (n_co, K, cin, cout_blk)

    # stride-phase fold of the tap axis: tap k = q*S + r -> index r*Kq + q
    w_pad = jnp.pad(w_blocks, ((0, 0), (0, S * Kq - K), (0, 0), (0, 0)))
    w_pad = w_pad.reshape(n_co, Kq, S, cin_blk, cout_blk)
    w_kern = jnp.transpose(w_pad, (0, 2, 1, 3, 4)).reshape(
        n_co, S * Kq, cin_blk, cout_blk).astype(jnp.bfloat16)
    b_kern = b_eff.reshape(n_co, 1, cout_blk).astype(jnp.float32)

    return {"w": w_kern, "b": b_kern, "K": K, "Kq": Kq, "stride": S, "pad": pad,
            "groups": groups, "cin": Cin, "cout": Cout, "cin_eff": cin_eff,
            "n_co": n_co, "cin_blk": cin_blk, "cout_blk": cout_blk,
            "dense_in": dense_in, "w_raw": w, "b_raw": b}


def init_discriminator_s(key):
    # (Cin, Cout, K, stride, groups, pad) — matches DiscriminatorS.__init__
    cfgs = [
        (1,    128,  15, 1, 1,  7),
        (128,  128,  41, 2, 4,  20),
        (128,  256,  41, 2, 16, 20),
        (256,  512,  41, 4, 16, 20),
        (512,  1024, 41, 4, 16, 20),
        (1024, 1024, 41, 1, 16, 20),
        (1024, 1024, 5,  1, 1,  2),
        (1024, 1,    3,  1, 1,  1),   # conv_post
    ]
    layers = []
    for cin, cout, k, s, g, p in cfgs:
        key, kw, kb = jax.random.split(key, 3)
        bound = 1.0 / math.sqrt((cin // g) * k)
        w = jax.random.uniform(kw, (cout, cin // g, k), jnp.float32, -bound, bound)
        b = jax.random.uniform(kb, (cout,), jnp.float32, -bound, bound)
        layers.append(_prepare_conv_layer(w, b, s, p, g))
    return layers, key


# --------------------------------- forward -----------------------------------
def discriminator_s_forward(x, layers):
    """x: (B, 1, T) f32 audio. Returns (logits (B, L_post), fmap list of (B, L, C) bf16)."""
    B, C, _ = x.shape
    h = jnp.transpose(x, (0, 2, 1)).astype(jnp.bfloat16)        # channels-last
    if layers[0]["cin_eff"] > C:
        h = jnp.pad(h, ((0, 0), (0, 0), (0, layers[0]["cin_eff"] - C)))
    fmap = []
    n = len(layers)
    for i, layer in enumerate(layers):
        h = conv1d_pallas(h, layer, apply_lrelu=(i < n - 1))
        fmap.append(h)   # fmaps kept channels-last (B, L, C) — transpose only if needed
    logits = h.reshape(B, -1).astype(jnp.float32)               # conv_post has Cout == 1
    return logits, fmap


def avg_pool1d_k4_s2_p2(x):
    """AvgPool1d(4, 2, padding=2), count_include_pad=True. x: (B, 1, T)."""
    _, _, T = x.shape
    xp = jnp.pad(x, ((0, 0), (0, 0), (2, 2)))
    L_out = T // 2 + 1
    acc = xp[:, :, 0:2 * L_out - 1:2]
    for k in range(1, 4):
        acc = acc + xp[:, :, k:k + 2 * L_out - 1:2]
    return acc * 0.25


def multi_scale_discriminator_forward(y, y_hat, discs):
    y_d_rs, y_d_gs, fmap_rs, fmap_gs = [], [], [], []
    for i, layers in enumerate(discs):
        if i != 0:
            y = avg_pool1d_k4_s2_p2(y)
            y_hat = avg_pool1d_k4_s2_p2(y_hat)
        r, fr = discriminator_s_forward(y, layers)
        g, fg = discriminator_s_forward(y_hat, layers)
        y_d_rs.append(r)
        fmap_rs.append(fr)
        y_d_gs.append(g)
        fmap_gs.append(fg)
    return y_d_rs, y_d_gs, fmap_rs, fmap_gs


# ---------------------------- pure-JAX reference ------------------------------
def _reference_disc_s(x, layers):
    """lax.conv reference mirroring the kernel's bf16-in / f32-accumulate numerics."""
    h = x.astype(jnp.bfloat16).astype(jnp.float32)
    fmap = []
    n = len(layers)
    for i, layer in enumerate(layers):
        w = layer["w_raw"].astype(jnp.bfloat16).astype(jnp.float32)
        out = lax.conv_general_dilated(
            h, w, window_strides=(layer["stride"],),
            padding=((layer["pad"], layer["pad"]),),
            dimension_numbers=("NCH", "OIH", "NCH"),
            feature_group_count=layer["groups"],
            precision=lax.Precision.HIGHEST)
        out = out + layer["b_raw"].reshape(1, -1, 1)
        if i < n - 1:
            out = jnp.where(out >= 0, out, 0.1 * out)
        h = out.astype(jnp.bfloat16).astype(jnp.float32)
        fmap.append(h)
    return h.reshape(h.shape[0], -1), fmap


def reference_msd_forward(y, y_hat, discs):
    y_d_rs, y_d_gs, fmap_rs, fmap_gs = [], [], [], []
    for i, layers in enumerate(discs):
        if i != 0:
            y = avg_pool1d_k4_s2_p2(y)
            y_hat = avg_pool1d_k4_s2_p2(y_hat)
        r, fr = _reference_disc_s(y, layers)
        g, fg = _reference_disc_s(y_hat, layers)
        y_d_rs.append(r)
        fmap_rs.append(fr)
        y_d_gs.append(g)
        fmap_gs.append(fg)
    return y_d_rs, y_d_gs, fmap_rs, fmap_gs


# ------------------------------------ main ------------------------------------
if __name__ == "__main__":
    key = jax.random.PRNGKey(0)
    key, ky, kg = jax.random.split(key, 3)

    B, T = 2, 128
    y = jax.random.normal(ky, (B, 1, T), jnp.float32)
    y_hat = jax.random.normal(kg, (B, 1, T), jnp.float32)

    discs = []
    for _ in range(3):
        layers, key = init_discriminator_s(key)
        discs.append(layers)

    result = multi_scale_discriminator_forward(y, y_hat, discs)
    result = jax.block_until_ready(result)
    y_d_rs, y_d_gs, fmap_rs, fmap_gs = result

    # validate against the pure-JAX reference (fmaps compared channels-last)
    ref_rs, ref_gs, ref_frs, ref_fgs = reference_msd_forward(y, y_hat, discs)

    def check(a, r):
        np.testing.assert_allclose(np.asarray(a.astype(jnp.float32)),
                                   np.asarray(r.astype(jnp.float32)),
                                   rtol=3e-2, atol=3e-2)

    for a, r in zip(y_d_rs, ref_rs):
        check(a, r)
    for a, r in zip(y_d_gs, ref_gs):
        check(a, r)
    for fa, fr in zip(fmap_rs, ref_frs):
        for a, r in zip(fa, fr):
            check(a, jnp.transpose(r, (0, 2, 1)))
    for fa, fr in zip(fmap_gs, ref_fgs):
        for a, r in zip(fa, fr):
            check(a, jnp.transpose(r, (0, 2, 1)))

    print("KERNEL_OK")
</pallas_src>

<mosaic_0001>
module attributes {stable_mosaic.version = 11 : i64} {
  func.func @kernel(%arg0: i32, %arg1: i32, %arg2: memref<1x142x8xbf16, #tpu.memory_space<vmem>>, %arg3: memref<1x15x8x128xbf16, #tpu.memory_space<vmem>>, %arg4: memref<1x1x128xf32, #tpu.memory_space<vmem>>, %arg5: memref<1x128x128xbf16, #tpu.memory_space<vmem>>) attributes {dimension_semantics = [#tpu.dimension_semantics<parallel>, #tpu.dimension_semantics<parallel>], iteration_bounds = array<i64: 1, 2>, scalar_prefetch = 0 : i64, scratch_operands = 0 : i64, tpu.core_type = #tpu.core_type<tc>, window_params = [{transform_indices = @transform_0, window_bounds = array<i64: 1, 142, 8>}, {transform_indices = @transform_1, window_bounds = array<i64: 1, 15, 8, 128>}, {transform_indices = @transform_2, window_bounds = array<i64: 1, 1, 128>}, {transform_indices = @transform_3, window_bounds = array<i64: 1, 128, 128>}]} {
    %cst = arith.constant 0.000000e+00 : f32
    %0 = vector.broadcast %cst : f32 to vector<128x128xf32>
    %c0 = arith.constant 0 : index
    %c0_0 = arith.constant 0 : index
    %c0_1 = arith.constant 0 : index
    %1 = vector.load %arg2[%c0, %c0_0, %c0_1] : memref<1x142x8xbf16, #tpu.memory_space<vmem>>, vector<1x128x8xbf16>
    %2 = vector.shape_cast %1 : vector<1x128x8xbf16> to vector<128x8xbf16>
    %c0_2 = arith.constant 0 : index
    %c0_3 = arith.constant 0 : index
    %c0_4 = arith.constant 0 : index
    %c0_5 = arith.constant 0 : index
    %3 = vector.load %arg3[%c0_2, %c0_3, %c0_4, %c0_5] : memref<1x15x8x128xbf16, #tpu.memory_space<vmem>>, vector<1x1x8x128xbf16>
    %4 = vector.shape_cast %3 : vector<1x1x8x128xbf16> to vector<8x128xbf16>
    %cst_6 = arith.constant dense<0.000000e+00> : vector<128x128xf32>
    %5 = tpu.matmul %2, %4, %cst_6 {dimension_numbers = #tpu.dot_dimension_numbers<[1], [0], [0], [1], [0, 0, 1, 1], [], []>} : vector<128x8xbf16>, vector<8x128xbf16>, vector<128x128xf32> -> vector<128x128xf32>
    %6 = arith.addf %0, %5 : vector<128x128xf32>
    %c0_7 = arith.constant 0 : index
    %c1 = arith.constant 1 : index
    %c0_8 = arith.constant 0 : index
    %7 = vector.load %arg2[%c0_7, %c1, %c0_8] : memref<1x142x8xbf16, #tpu.memory_space<vmem>>, vector<1x128x8xbf16>
    %8 = vector.shape_cast %7 : vector<1x128x8xbf16> to vector<128x8xbf16>
    %c0_9 = arith.constant 0 : index
    %c1_10 = arith.constant 1 : index
    %c0_11 = arith.constant 0 : index
    %c0_12 = arith.constant 0 : index
    %9 = vector.load %arg3[%c0_9, %c1_10, %c0_11, %c0_12] : memref<1x15x8x128xbf16, #tpu.memory_space<vmem>>, vector<1x1x8x128xbf16>
    %10 = vector.shape_cast %9 : vector<1x1x8x128xbf16> to vector<8x128xbf16>
    %cst_13 = arith.constant dense<0.000000e+00> : vector<128x128xf32>
    %11 = tpu.matmul %8, %10, %cst_13 {dimension_numbers = #tpu.dot_dimension_numbers<[1], [0], [0], [1], [0, 0, 1, 1], [], []>} : vector<128x8xbf16>, vector<8x128xbf16>, vector<128x128xf32> -> vector<128x128xf32>
    %12 = arith.addf %6, %11 : vector<128x128xf32>
    %c0_14 = arith.constant 0 : index
    %c2 = arith.constant 2 : index
    %c0_15 = arith.constant 0 : index
    %13 = vector.load %arg2[%c0_14, %c2, %c0_15] : memref<1x142x8xbf16, #tpu.memory_space<vmem>>, vector<1x128x8xbf16>
    %14 = vector.shape_cast %13 : vector<1x128x8xbf16> to vector<128x8xbf16>
    %c0_16 = arith.constant 0 : index
    %c2_17 = arith.constant 2 : index
    %c0_18 = arith.constant 0 : index
    %c0_19 = arith.constant 0 : index
    %15 = vector.load %arg3[%c0_16, %c2_17, %c0_18, %c0_19] : memref<1x15x8x128xbf16, #tpu.memory_space<vmem>>, vector<1x1x8x128xbf16>
    %16 = vector.shape_cast %15 : vector<1x1x8x128xbf16> to vector<8x128xbf16>
    %cst_20 = arith.constant dense<0.000000e+00> : vector<128x128xf32>
    %17 = tpu.matmul %14, %16, %cst_20 {dimension_numbers = #tpu.dot_dimension_numbers<[1], [0], [0], [1], [0, 0, 1, 1], [], []>} : vector<128x8xbf16>, vector<8x128xbf16>, vector<128x128xf32> -> vector<128x128xf32>
    %18 = arith.addf %12, %17 : vector<128x128xf32>
    %c0_21 = arith.constant 0 : index
    %c3 = arith.constant 3 : index
    %c0_22 = arith.constant 0 : index
    %19 = vector.load %arg2[%c0_21, %c3, %c0_22] : memref<1x142x8xbf16, #tpu.memory_space<vmem>>, vector<1x128x8xbf16>
    %20 = vector.shape_cast %19 : vector<1x128x8xbf16> to vector<128x8xbf16>
    %c0_23 = arith.constant 0 : index
    %c3_24 = arith.constant 3 : index
    %c0_25 = arith.constant 0 : index
    %c0_26 = arith.constant 0 : index
    %21 = vector.load %arg3[%c0_23, %c3_24, %c0_25, %c0_26] : memref<1x15x8x128xbf16, #tpu.memory_space<vmem>>, vector<1x1x8x128xbf16>
    %22 = vector.shape_cast %21 : vector<1x1x8x128xbf16> to vector<8x128xbf16>
    %cst_27 = arith.constant dense<0.000000e+00> : vector<128x128xf32>
    %23 = tpu.matmul %20, %22, %cst_27 {dimension_numbers = #tpu.dot_dimension_numbers<[1], [0], [0], [1], [0, 0, 1, 1], [], []>} : vector<128x8xbf16>, vector<8x128xbf16>, vector<128x128xf32> -> vector<128x128xf32>
    %24 = arith.addf %18, %23 : vector<128x128xf32>
    %c0_28 = arith.constant 0 : index
    %c4 = arith.constant 4 : index
    %c0_29 = arith.constant 0 : index
    %25 = vector.load %arg2[%c0_28, %c4, %c0_29] : memref<1x142x8xbf16, #tpu.memory_space<vmem>>, vector<1x128x8xbf16>
    %26 = vector.shape_cast %25 : vector<1x128x8xbf16> to vector<128x8xbf16>
    %c0_30 = arith.constant 0 : index
    %c4_31 = arith.constant 4 : index
    %c0_32 = arith.constant 0 : index
    %c0_33 = arith.constant 0 : index
    %27 = vector.load %arg3[%c0_30, %c4_31, %c0_32, %c0_33] : memref<1x15x8x128xbf16, #tpu.memory_space<vmem>>, vector<1x1x8x128xbf16>
    %28 = vector.shape_cast %27 : vector<1x1x8x128xbf16> to vector<8x128xbf16>
    %cst_34 = arith.constant dense<0.000000e+00> : vector<128x128xf32>
    %29 = tpu.matmul %26, %28, %cst_34 {dimension_numbers = #tpu.dot_dimension_numbers<[1], [0], [0], [1], [0, 0, 1, 1], [], []>} : vector<128x8xbf16>, vector<8x128xbf16>, vector<128x128xf32> -> vector<128x128xf32>
    %30 = arith.addf %24, %29 : vector<128x128xf32>
    %c0_35 = arith.constant 0 : index
    %c5 = arith.constant 5 : index
    %c0_36 = arith.constant 0 : index
    %31 = vector.load %arg2[%c0_35, %c5, %c0_36] : memref<1x142x8xbf16, #tpu.memory_space<vmem>>, vector<1x128x8xbf16>
    %32 = vector.shape_cast %31 : vector<1x128x8xbf16> to vector<128x8xbf16>
    %c0_37 = arith.constant 0 : index
    %c5_38 = arith.constant 5 : index
    %c0_39 = arith.constant 0 : index
    %c0_40 = arith.constant 0 : index
    %33 = vector.load %arg3[%c0_37, %c5_38, %c0_39, %c0_40] : memref<1x15x8x128xbf16, #tpu.memory_space<vmem>>, vector<1x1x8x128xbf16>
    %34 = vector.shape_cast %33 : vector<1x1x8x128xbf16> to vector<8x128xbf16>
    %cst_41 = arith.constant dense<0.000000e+00> : vector<128x128xf32>
    %35 = tpu.matmul %32, %34, %cst_41 {dimension_numbers = #tpu.dot_dimension_numbers<[1], [0], [0], [1], [0, 0, 1, 1], [], []>} : vector<128x8xbf16>, vector<8x128xbf16>, vector<128x128xf32> -> vector<128x128xf32>
    %36 = arith.addf %30, %35 : vector<128x128xf32>
    %c0_42 = arith.constant 0 : index
    %c6 = arith.constant 6 : index
    %c0_43 = arith.constant 0 : index
    %37 = vector.load %arg2[%c0_42, %c6, %c0_43] : memref<1x142x8xbf16, #tpu.memory_space<vmem>>, vector<1x128x8xbf16>
    %38 = vector.shape_cast %37 : vector<1x128x8xbf16> to vector<128x8xbf16>
    %c0_44 = arith.constant 0 : index
    %c6_45 = arith.constant 6 : index
    %c0_46 = arith.constant 0 : index
    %c0_47 = arith.constant 0 : index
    %39 = vector.load %arg3[%c0_44, %c6_45, %c0_46, %c0_47] : memref<1x15x8x128xbf16, #tpu.memory_space<vmem>>, vector<1x1x8x128xbf16>
    %40 = vector.shape_cast %39 : vector<1x1x8x128xbf16> to vector<8x128xbf16>
    %cst_48 = arith.constant dense<0.000000e+00> : vector<128x128xf32>
    %41 = tpu.matmul %38, %40, %cst_48 {dimension_numbers = #tpu.dot_dimension_numbers<[1], [0], [0], [1], [0, 0, 1, 1], [], []>} : vector<128x8xbf16>, vector<8x128xbf16>, vector<128x128xf32> -> vector<128x128xf32>
    %42 = arith.addf %36, %41 : vector<128x128xf32>
    %c0_49 = arith.constant 0 : index
    %c7 = arith.constant 7 : index
    %c0_50 = arith.constant 0 : index
    %43 = vector.load %arg2[%c0_49, %c7, %c0_50] : memref<1x142x8xbf16, #tpu.memory_space<vmem>>, vector<1x128x8xbf16>
    %44 = vector.shape_cast %43 : vector<1x128x8xbf16> to vector<128x8xbf16>
    %c0_51 = arith.constant 0 : index
    %c7_52 = arith.constant 7 : index
    %c0_53 = arith.constant 0 : index
    %c0_54 = arith.constant 0 : index
    %45 = vector.load %arg3[%c0_51, %c7_52, %c0_53, %c0_54] : memref<1x15x8x128xbf16, #tpu.memory_space<vmem>>, vector<1x1x8x128xbf16>
    %46 = vector.shape_cast %45 : vector<1x1x8x128xbf16> to vector<8x128xbf16>
    %cst_55 = arith.constant dense<0.000000e+00> : vector<128x128xf32>
    %47 = tpu.matmul %44, %46, %cst_55 {dimension_numbers = #tpu.dot_dimension_numbers<[1], [0], [0], [1], [0, 0, 1, 1], [], []>} : vector<128x8xbf16>, vector<8x128xbf16>, vector<128x128xf32> -> vector<128x128xf32>
    %48 = arith.addf %42, %47 : vector<128x128xf32>
    %c0_56 = arith.constant 0 : index
    %c8 = arith.constant 8 : index
    %c0_57 = arith.constant 0 : index
    %49 = vector.load %arg2[%c0_56, %c8, %c0_57] : memref<1x142x8xbf16, #tpu.memory_space<vmem>>, vector<1x128x8xbf16>
    %50 = vector.shape_cast %49 : vector<1x128x8xbf16> to vector<128x8xbf16>
    %c0_58 = arith.constant 0 : index
    %c8_59 = arith.constant 8 : index
    %c0_60 = arith.constant 0 : index
    %c0_61 = arith.constant 0 : index
    %51 = vector.load %arg3[%c0_58, %c8_59, %c0_60, %c0_61] : memref<1x15x8x128xbf16, #tpu.memory_space<vmem>>, vector<1x1x8x128xbf16>
    %52 = vector.shape_cast %51 : vector<1x1x8x128xbf16> to vector<8x128xbf16>
    %cst_62 = arith.constant dense<0.000000e+00> : vector<128x128xf32>
    %53 = tpu.matmul %50, %52, %cst_62 {dimension_numbers = #tpu.dot_dimension_numbers<[1], [0], [0], [1], [0, 0, 1, 1], [], []>} : vector<128x8xbf16>, vector<8x128xbf16>, vector<128x128xf32> -> vector<128x128xf32>
    %54 = arith.addf %48, %53 : vector<128x128xf32>
    %c0_63 = arith.constant 0 : index
    %c9 = arith.constant 9 : index
    %c0_64 = arith.constant 0 : index
    %55 = vector.load %arg2[%c0_63, %c9, %c0_64] : memref<1x142x8xbf16, #tpu.memory_space<vmem>>, vector<1x128x8xbf16>
    %56 = vector.shape_cast %55 : vector<1x128x8xbf16> to vector<128x8xbf16>
    %c0_65 = arith.constant 0 : index
    %c9_66 = arith.constant 9 : index
    %c0_67 = arith.constant 0 : index
    %c0_68 = arith.constant 0 : index
    %57 = vector.load %arg3[%c0_65, %c9_66, %c0_67, %c0_68] : memref<1x15x8x128xbf16, #tpu.memory_space<vmem>>, vector<1x1x8x128xbf16>
    %58 = vector.shape_cast %57 : vector<1x1x8x128xbf16> to vector<8x128xbf16>
    %cst_69 = arith.constant dense<0.000000e+00> : vector<128x128xf32>
    %59 = tpu.matmul %56, %58, %cst_69 {dimension_numbers = #tpu.dot_dimension_numbers<[1], [0], [0], [1], [0, 0, 1, 1], [], []>} : vector<128x8xbf16>, vector<8x128xbf16>, vector<128x128xf32> -> vector<128x128xf32>
    %60 = arith.addf %54, %59 : vector<128x128xf32>
    %c0_70 = arith.constant 0 : index
    %c10 = arith.constant 10 : index
    %c0_71 = arith.constant 0 : index
    %61 = vector.load %arg2[%c0_70, %c10, %c0_71] : memref<1x142x8xbf16, #tpu.memory_space<vmem>>, vector<1x128x8xbf16>
    %62 = vector.shape_cast %61 : vector<1x128x8xbf16> to vector<128x8xbf16>
    %c0_72 = arith.constant 0 : index
    %c10_73 = arith.constant 10 : index
    %c0_74 = arith.constant 0 : index
    %c0_75 = arith.constant 0 : index
    %63 = vector.load %arg3[%c0_72, %c10_73, %c0_74, %c0_75] : memref<1x15x8x128xbf16, #tpu.memory_space<vmem>>, vector<1x1x8x128xbf16>
    %64 = vector.shape_cast %63 : vector<1x1x8x128xbf16> to vector<8x128xbf16>
    %cst_76 = arith.constant dense<0.000000e+00> : vector<128x128xf32>
    %65 = tpu.matmul %62, %64, %cst_76 {dimension_numbers = #tpu.dot_dimension_numbers<[1], [0], [0], [1], [0, 0, 1, 1], [], []>} : vector<128x8xbf16>, vector<8x128xbf16>, vector<128x128xf32> -> vector<128x128xf32>
    %66 = arith.addf %60, %65 : vector<128x128xf32>
    %c0_77 = arith.constant 0 : index
    %c11 = arith.constant 11 : index
    %c0_78 = arith.constant 0 : index
    %67 = vector.load %arg2[%c0_77, %c11, %c0_78] : memref<1x142x8xbf16, #tpu.memory_space<vmem>>, vector<1x128x8xbf16>
    %68 = vector.shape_cast %67 : vector<1x128x8xbf16> to vector<128x8xbf16>
    %c0_79 = arith.constant 0 : index
    %c11_80 = arith.constant 11 : index
    %c0_81 = arith.constant 0 : index
    %c0_82 = arith.constant 0 : index
    %69 = vector.load %arg3[%c0_79, %c11_80, %c0_81, %c0_82] : memref<1x15x8x128xbf16, #tpu.memory_space<vmem>>, vector<1x1x8x128xbf16>
    %70 = vector.shape_cast %69 : vector<1x1x8x128xbf16> to vector<8x128xbf16>
    %cst_83 = arith.constant dense<0.000000e+00> : vector<128x128xf32>
    %71 = tpu.matmul %68, %70, %cst_83 {dimension_numbers = #tpu.dot_dimension_numbers<[1], [0], [0], [1], [0, 0, 1, 1], [], []>} : vector<128x8xbf16>, vector<8x128xbf16>, vector<128x128xf32> -> vector<128x128xf32>
    %72 = arith.addf %66, %71 : vector<128x128xf32>
    %c0_84 = arith.constant 0 : index
    %c12 = arith.constant 12 : index
    %c0_85 = arith.constant 0 : index
    %73 = vector.load %arg2[%c0_84, %c12, %c0_85] : memref<1x142x8xbf16, #tpu.memory_space<vmem>>, vector<1x128x8xbf16>
    %74 = vector.shape_cast %73 : vector<1x128x8xbf16> to vector<128x8xbf16>
    %c0_86 = arith.constant 0 : index
    %c12_87 = arith.constant 12 : index
    %c0_88 = arith.constant 0 : index
    %c0_89 = arith.constant 0 : index
    %75 = vector.load %arg3[%c0_86, %c12_87, %c0_88, %c0_89] : memref<1x15x8x128xbf16, #tpu.memory_space<vmem>>, vector<1x1x8x128xbf16>
    %76 = vector.shape_cast %75 : vector<1x1x8x128xbf16> to vector<8x128xbf16>
    %cst_90 = arith.constant dense<0.000000e+00> : vector<128x128xf32>
    %77 = tpu.matmul %74, %76, %cst_90 {dimension_numbers = #tpu.dot_dimension_numbers<[1], [0], [0], [1], [0, 0, 1, 1], [], []>} : vector<128x8xbf16>, vector<8x128xbf16>, vector<128x128xf32> -> vector<128x128xf32>
    %78 = arith.addf %72, %77 : vector<128x128xf32>
    %c0_91 = arith.constant 0 : index
    %c13 = arith.constant 13 : index
    %c0_92 = arith.constant 0 : index
    %79 = vector.load %arg2[%c0_91, %c13, %c0_92] : memref<1x142x8xbf16, #tpu.memory_space<vmem>>, vector<1x128x8xbf16>
    %80 = vector.shape_cast %79 : vector<1x128x8xbf16> to vector<128x8xbf16>
    %c0_93 = arith.constant 0 : index
    %c13_94 = arith.constant 13 : index
    %c0_95 = arith.constant 0 : index
    %c0_96 = arith.constant 0 : index
    %81 = vector.load %arg3[%c0_93, %c13_94, %c0_95, %c0_96] : memref<1x15x8x128xbf16, #tpu.memory_space<vmem>>, vector<1x1x8x128xbf16>
    %82 = vector.shape_cast %81 : vector<1x1x8x128xbf16> to vector<8x128xbf16>
    %cst_97 = arith.constant dense<0.000000e+00> : vector<128x128xf32>
    %83 = tpu.matmul %80, %82, %cst_97 {dimension_numbers = #tpu.dot_dimension_numbers<[1], [0], [0], [1], [0, 0, 1, 1], [], []>} : vector<128x8xbf16>, vector<8x128xbf16>, vector<128x128xf32> -> vector<128x128xf32>
    %84 = arith.addf %78, %83 : vector<128x128xf32>
    %c0_98 = arith.constant 0 : index
    %c14 = arith.constant 14 : index
    %c0_99 = arith.constant 0 : index
    %85 = vector.load %arg2[%c0_98, %c14, %c0_99] : memref<1x142x8xbf16, #tpu.memory_space<vmem>>, vector<1x128x8xbf16>
    %86 = vector.shape_cast %85 : vector<1x128x8xbf16> to vector<128x8xbf16>
    %c0_100 = arith.constant 0 : index
    %c14_101 = arith.constant 14 : index
    %c0_102 = arith.constant 0 : index
    %c0_103 = arith.constant 0 : index
    %87 = vector.load %arg3[%c0_100, %c14_101, %c0_102, %c0_103] : memref<1x15x8x128xbf16, #tpu.memory_space<vmem>>, vector<1x1x8x128xbf16>
    %88 = vector.shape_cast %87 : vector<1x1x8x128xbf16> to vector<8x128xbf16>
    %cst_104 = arith.constant dense<0.000000e+00> : vector<128x128xf32>
    %89 = tpu.matmul %86, %88, %cst_104 {dimension_numbers = #tpu.dot_dimension_numbers<[1], [0], [0], [1], [0, 0, 1, 1], [], []>} : vector<128x8xbf16>, vector<8x128xbf16>, vector<128x128xf32> -> vector<128x128xf32>
    %90 = arith.addf %84, %89 : vector<128x128xf32>
    %c0_105 = arith.constant 0 : index
    %c0_106 = arith.constant 0 : index
    %c0_107 = arith.constant 0 : index
    %91 = vector.load %arg4[%c0_105, %c0_106, %c0_107] : memref<1x1x128xf32, #tpu.memory_space<vmem>>, vector<1x1x128xf32>
    %92 = vector.shape_cast %91 : vector<1x1x128xf32> to vector<1x128xf32>
    %93 = vector.broadcast %92 : vector<1x128xf32> to vector<128x128xf32>
    %94 = arith.addf %90, %93 : vector<128x128xf32>
    %cst_108 = arith.constant 0.000000e+00 : f32
    %95 = vector.broadcast %cst_108 : f32 to vector<128x128xf32>
    %96 = arith.cmpf oge, %94, %95 : vector<128x128xf32>
    %cst_109 = arith.constant 1.000000e-01 : f32
    %97 = vector.broadcast %cst_109 : f32 to vector<128x128xf32>
    %98 = arith.mulf %97, %94 : vector<128x128xf32>
    %99 = arith.select %96, %94, %98 : vector<128x128xi1>, vector<128x128xf32>
    %100 = arith.truncf %99 : vector<128x128xf32> to vector<128x128xbf16>
    %c0_110 = arith.constant 0 : index
    %c0_111 = arith.constant 0 : index
    %c0_112 = arith.constant 0 : index
    %101 = vector.load %arg5[%c0_110, %c0_111, %c0_112] : memref<1x128x128xbf16, #tpu.memory_space<vmem>>, vector<1x128x128xbf16>
    %102 = vector.shape_cast %101 : vector<1x128x128xbf16> to vector<128x128xbf16>
    %103 = vector.shape_cast %100 : vector<128x128xbf16> to vector<1x128x128xbf16>
    tpu.vector_store %arg5[%c0_110, %c0_111, %c0_112], %103 {strides = array<i32>} : memref<1x128x128xbf16, #tpu.memory_space<vmem>>, vector<1x128x128xbf16>,
    return
  }
  func.func @transform_0(%arg0: i32, %arg1: i32) -> (i32, i32, i32) {
    %c0_i32 = arith.constant 0 : i32
    %c0_i32_0 = arith.constant 0 : i32
    %c0_i32_1 = arith.constant 0 : i32
    return %arg1, %c0_i32, %c0_i32_0 : i32, i32, i32
  }
  func.func @transform_1(%arg0: i32, %arg1: i32) -> (i32, i32, i32, i32) {
    %c0_i32 = arith.constant 0 : i32
    %c0_i32_0 = arith.constant 0 : i32
    %c0_i32_1 = arith.constant 0 : i32
    %c0_i32_2 = arith.constant 0 : i32
    return %arg0, %c0_i32, %c0_i32_0, %c0_i32_1 : i32, i32, i32, i32
  }
  func.func @transform_2(%arg0: i32, %arg1: i32) -> (i32, i32, i32) {
    %c0_i32 = arith.constant 0 : i32
    %c0_i32_0 = arith.constant 0 : i32
    %c0_i32_1 = arith.constant 0 : i32
    return %arg0, %c0_i32, %c0_i32_0 : i32, i32, i32
  }
  func.func @transform_3(%arg0: i32, %arg1: i32) -> (i32, i32, i32) {
    %c0_i32 = arith.constant 0 : i32
    %c0_i32_0 = arith.constant 0 : i32
    return %arg1, %c0_i32, %arg0 : i32, i32, i32
  }
}

</mosaic_0001>

<llo_original>
// kernel: tpu_custom_call.1
$region0: #{tpu_custom_call.1}
  #allocation0 [shape = 'u32[]', space=smem, size = 0x4, offset = 0x4, fixed_abs, tag = 'smem constant byte address 0x4 - core index']
  #allocation1 [shape = 'u32[144,128]{1,0:T(1,128)}', space=vmem, size = 0x12000, scoped, tag = 'internal scratch']
  %s0 = inlined_call_operand.vmem [shape: bf16[2,142,8], index: 0, kind: input, shape index: {}]
  %s1 = inlined_call_operand.vmem [shape: bf16[1,15,8,128], index: 1, kind: input, shape index: {}]
  %s2 = inlined_call_operand.vmem [shape: f32[1,1,128], index: 2, kind: input, shape index: {}]
  %s3 = inlined_call_operand.hbm [shape: bf16[2,128,128], index: 3, kind: output, shape index: {}]
  %s4 = sld [smem:[#allocation0]]
  $region45: #{tpu_custom_call.1} parent=0
    _
  %s6 = ssub.s32 1, %s4
  %s7 = scalar_select 0, %s6, %s4
  $region1: #{tpu_custom_call.1} parent=0
    #allocation2 [shape = 'u8[65536]{0}', space=vmem, size = 0x10000, scoped, tag = 'output window, operand 0']
    #allocation3 [shape = 's32[2]{0}', space=sflag, size = 0x8, scoped, tag = 'scoped memory for tpu_custom_call.1']
    %8 = vsyncpa [#allocation3], 0
    %s9 = scalar_lea.sflag [#allocation3], 1
    %10 = vsyncpa %s9, 0
    loop: start=0, step=1, limit=4
    $region2: #{tpu_custom_call.1} parent=1 // loop_pre_header
      _
    $region3: #{tpu_custom_call.1} parent=1 // loop_header
      %s12 = sphi 0, %s16
      %p13 = scmp.ge.s32.totalorder %s12, 4
      %s19 = sphi 0, %s31
      %s20 = sphi 0, %s27
      %s21 = sphi 0, %s19
      %s22 = sphi 0, %s20
      %s23 = sphi 0, %s21
      %s24 = sphi 0, %s22
      %s34 = sphi 0, %s36
      %s37 = sphi 0, %s34
      %s38 = sphi 0, %s37
      %s54 = sphi 0, %s38
      %s60 = sphi 0, %s62
      %s63 = sphi 0, %s60
      %s64 = sphi 0, %s63
      %s80 = sphi 0, %s64
      %s86 = sphi 0, %s88
      %s89 = sphi 0, %s86
      %s90 = sphi 0, %s89
      %s106 = sphi 0, %s90
      %s114 = sphi 0, %s116
      %s117 = sphi 0, %s114
      %s118 = sphi 0, %s117
      %s134 = sphi 0, %s118
    $region4: #{tpu_custom_call.1} parent=1 // loop_header_branch
      %15 = sbr.rel (%p13) target = $region8
    $region5: #{tpu_custom_call.1} parent=1 // loop_body
      %s17 = ssub.s32 %s12, 1
      %s18 = ssub.s32 %s12, 2
      %s25 = sadd.s32 1, %s20
      %p26 = scmp.ge.s32.totalorder %s25, 2
      %s27 = scalar_select %p26, 0, %s25
      %s28 = sadd.s32 1, %s19
      %s29 = scalar_select %p26, %s28, %s19
      %p30 = scmp.ge.s32.totalorder %s29, 1
      %s31 = scalar_select %p30, 0, %s29
      %s32 = ssub.s32 %s20, %s27
      %p33 = scmp.eq.s32.totalorder %s32, 0
      %s35 = sadd.s32 %s34, 1
      %s36 = scalar_select %p33, %s34, %s35
      %p39 = pneg %p33
      %p40 = scmp.eq.s32.totalorder %s12, 1
      %p41 = por %p39, %p40
      %p42 = scmp.ne.s32.totalorder %s34, %s37
      %p43 = scmp.eq.s32.totalorder %s12, 0
      %p44 = por %p42, %p43
      %p45 = scmp.ne.s32.totalorder %s34, %s37
      %p46 = scmp.eq.s32.totalorder %s17, 1
      %p47 = por %p45, %p46
      %p48 = scmp.ne.s32.totalorder %s37, %s38
      %p49 = scmp.eq.s32.totalorder %s17, 0
      %p50 = por %p48, %p49
      %p51 = scmp.ne.s32.totalorder %s37, %s38
      %p52 = scmp.eq.s32.totalorder %s18, 1
      %p53 = por %p51, %p52
      %p55 = scmp.ne.s32.totalorder %s38, %s54
      %p56 = scmp.eq.s32.totalorder %s18, 0
      %p57 = por %p55, %p56
      %s58 = ssub.s32 %s19, %s31
      %p59 = scmp.eq.s32.totalorder %s58, 0
      %s61 = sadd.s32 %s60, 1
      %s62 = scalar_select %p59, %s60, %s61
      %p65 = pneg %p59
      %p66 = scmp.eq.s32.totalorder %s12, 1
      %p67 = por %p65, %p66
      %p68 = scmp.ne.s32.totalorder %s60, %s63
      %p69 = scmp.eq.s32.totalorder %s12, 0
      %p70 = por %p68, %p69
      %p71 = scmp.ne.s32.totalorder %s60, %s63
      %p72 = scmp.eq.s32.totalorder %s17, 1
      %p73 = por %p71, %p72
      %p74 = scmp.ne.s32.totalorder %s63, %s64
      %p75 = scmp.eq.s32.totalorder %s17, 0
      %p76 = por %p74, %p75
      %p77 = scmp.ne.s32.totalorder %s63, %s64
      %p78 = scmp.eq.s32.totalorder %s18, 1
      %p79 = por %p77, %p78
      %p81 = scmp.ne.s32.totalorder %s64, %s80
      %p82 = scmp.eq.s32.totalorder %s18, 0
      %p83 = por %p81, %p82
      %s84 = ssub.s32 %s19, %s31
      %p85 = scmp.eq.s32.totalorder %s84, 0
      %s87 = sadd.s32 %s86, 1
      %s88 = scalar_select %p85, %s86, %s87
      %p91 = pneg %p85
      %p92 = scmp.eq.s32.totalorder %s12, 1
      %p93 = por %p91, %p92
      %p94 = scmp.ne.s32.totalorder %s86, %s89
      %p95 = scmp.eq.s32.totalorder %s12, 0
      %p96 = por %p94, %p95
      %p97 = scmp.ne.s32.totalorder %s86, %s89
      %p98 = scmp.eq.s32.totalorder %s17, 1
      %p99 = por %p97, %p98
      %p100 = scmp.ne.s32.totalorder %s89, %s90
      %p101 = scmp.eq.s32.totalorder %s17, 0
      %p102 = por %p100, %p101
      %p103 = scmp.ne.s32.totalorder %s89, %s90
      %p104 = scmp.eq.s32.totalorder %s18, 1
      %p105 = por %p103, %p104
      %p107 = scmp.ne.s32.totalorder %s90, %s106
      %p108 = scmp.eq.s32.totalorder %s18, 0
      %p109 = por %p107, %p108
      %s110 = ssub.s32 %s20, %s27
      %s111 = ssub.s32 %s19, %s31
      %s112 = sor.u32 %s110, %s111
      %p113 = scmp.eq.s32.totalorder %s112, 0
      %s115 = sadd.s32 %s114, 1
      %s116 = scalar_select %p113, %s114, %s115
      %p119 = pneg %p113
      %p120 = scmp.eq.s32.totalorder %s12, 1
      %p121 = por %p119, %p120
      %p122 = scmp.ne.s32.totalorder %s114, %s117
      %p123 = scmp.eq.s32.totalorder %s12, 0
      %p124 = por %p122, %p123
      %p125 = scmp.ne.s32.totalorder %s114, %s117
      %p126 = scmp.eq.s32.totalorder %s17, 1
      %p127 = por %p125, %p126
      %p128 = scmp.ne.s32.totalorder %s117, %s118
      %p129 = scmp.eq.s32.totalorder %s17, 0
      %p130 = por %p128, %p129
      %p131 = scmp.ne.s32.totalorder %s117, %s118
      %p132 = scmp.eq.s32.totalorder %s18, 1
      %p133 = por %p131, %p132
      %p135 = scmp.ne.s32.totalorder %s118, %s134
      %p136 = scmp.eq.s32.totalorder %s18, 0
      %p137 = por %p135, %p136
      %p138 = scmp.le.s32.totalorder 1, %s12
      %p139 = scmp.lt.s32.totalorder %s12, 3
      %p140 = pnand %p138, %p139
      %p141 = pneg %p140
      // Predicated region
      $region9: #{tpu_custom_call.1} parent=5 // pred_check
        _
      $region10: #{tpu_custom_call.1} parent=5 // pred_check_branch
        %143 = sbr.rel (%p140) target = $region12
      $region11: #{tpu_custom_call.1} parent=5 // pred_region
        %s144 = ssub.s32 %s12, 1
        // Predicated region
        $region13: #{tpu_custom_call.1} parent=11 // pred_check
          %p145 = pneg %p76
        $region14: #{tpu_custom_call.1} parent=11 // pred_check_branch
          %147 = sbr.rel (%p145) target = $region16
        $region15: #{tpu_custom_call.1} parent=11 // pred_region
          %p148 = scmp.lt.s32.totalorder %s21, 0
          %s149 = scalar_select %p148, %s21, 0
          %s150 = smul.addr %s149, 15
          %s151 = smul.addr %s150, 4
          %s152 = scalar_lea.vmem %s1, %s151
        $region16: #{tpu_custom_call.1} parent=11 // pred_fallthru
          _
        // Predicated region
        $region17: #{tpu_custom_call.1} parent=11 // pred_check
          %p153 = pneg %p102
        $region18: #{tpu_custom_call.1} parent=11 // pred_check_branch
          %155 = sbr.rel (%p153) target = $region20
        $region19: #{tpu_custom_call.1} parent=11 // pred_region
          %p156 = scmp.lt.s32.totalorder %s21, 0
          %s157 = scalar_select %p156, %s21, 0
          %s158 = scalar_lea.vmem %s2, %s157
        $region20: #{tpu_custom_call.1} parent=11 // pred_fallthru
          _
      $region12: #{tpu_custom_call.1} parent=5 // pred_fallthru
        _
      %p159 = scmp.lt.s32.totalorder %s12, 2
      // Predicated region
      $region21: #{tpu_custom_call.1} parent=5 // pred_check
        %p160 = pneg %p159
      $region22: #{tpu_custom_call.1} parent=5 // pred_check_branch
        %162 = sbr.rel (%p160) target = $region24
      $region23: #{tpu_custom_call.1} parent=5 // pred_region
        // Predicated region
        $region25: #{tpu_custom_call.1} parent=23 // pred_check
          %p163 = pneg %p44
        $region26: #{tpu_custom_call.1} parent=23 // pred_check_branch
          %165 = sbr.rel (%p163) target = $region28
        $region27: #{tpu_custom_call.1} parent=23 // pred_region
          %p166 = scmp.lt.s32.totalorder %s20, 1
          %s167 = scalar_select %p166, %s20, 1
          %s168 = smul.addr %s167, 18
          %s169 = smul.addr %s168, 4
          %s170 = scalar_lea.vmem %s0, %s169
        $region28: #{tpu_custom_call.1} parent=23 // pred_fallthru
          _
      $region24: #{tpu_custom_call.1} parent=5 // pred_fallthru
        _
      %p171 = scmp.le.s32.totalorder 1, %s12
      %p172 = scmp.lt.s32.totalorder %s12, 3
      %p173 = pnand %p171, %p172
      %p174 = pneg %p173
      // Predicated region
      $region29: #{tpu_custom_call.1} parent=5 // pred_check
        _
      $region30: #{tpu_custom_call.1} parent=5 // pred_check_branch
        %176 = sbr.rel (%p173) target = $region32
      $region31: #{tpu_custom_call.1} parent=5 // pred_region
        %s177 = ssub.s32 %s12, 1
        %p178 = scmp.lt.s32.totalorder %s22, 1
        %s179 = scalar_select %p178, %s22, 1
        %s180 = smul.addr %s179, 18
        %s181 = smul.addr %s180, 4
        %s182 = scalar_lea.vmem %s0, %s181
        %p183 = pneg %p50
        %p184 = pneg %p47
        %p185 = scmp.lt.s32.totalorder %s21, 0
        %s186 = scalar_select %p185, %s21, 0
        %s187 = smul.addr %s186, 15
        %s188 = smul.addr %s187, 4
        %s189 = scalar_lea.vmem %s1, %s188
        %p190 = pneg %p76
        %p191 = pneg %p73
        %p192 = scmp.lt.s32.totalorder %s21, 0
        %s193 = scalar_select %p192, %s21, 0
        %s194 = scalar_lea.vmem %s2, %s193
        %p195 = pneg %p102
        %p196 = pneg %p99
        %p197 = pneg %p130
        %p198 = pneg %p127
        %s199 = sand.u32 %s117, 1
        %s200 = scalar_lea.sflag [#allocation3], %s199
        %s201 = sand.u32 %s117, 1
        %s202 = smul.addr %s201, 64
        %s203 = scalar_lea.vmem [#allocation2], %s202
        %p204 = scmp.lt.s32.totalorder %s22, 1
        %s205 = scalar_select %p204, %s22, 1
        %s206 = smul.addr %s205, 18
        %s207 = smul.addr %s206, 4
        %s208 = scalar_lea.vmem %s0, %s207
        %p209 = scmp.lt.s32.totalorder %s21, 0
        %s210 = scalar_select %p209, %s21, 0
        %s211 = smul.addr %s210, 15
        %s212 = smul.addr %s211, 4
        %s213 = scalar_lea.vmem %s1, %s212
        %p214 = scmp.lt.s32.totalorder %s21, 0
        %s215 = scalar_select %p214, %s21, 0
        %s216 = scalar_lea.vmem %s2, %s215
        %v218 = vld [vmem:[%s208] sm:$0xf]
        %v219 = vld [vmem:[%s208 + $0x4] sm:$0xf]
        %v220 = vld [vmem:[%s208 + $0x8] sm:$0xf]
        %v221 = vld [vmem:[%s208 + $0xc] sm:$0xf]
        %v222 = vld [vmem:[%s208 + $0x10] sm:$0xf]
        %v223 = vld [vmem:[%s208 + $0x14] sm:$0xf]
        %v224 = vld [vmem:[%s208 + $0x18] sm:$0xf]
        %v225 = vld [vmem:[%s208 + $0x1c] sm:$0xf]
        %v226 = vld [vmem:[%s208 + $0x20] sm:$0xf]
        %v227 = vld [vmem:[%s208 + $0x24] sm:$0xf]
        %v228 = vld [vmem:[%s208 + $0x28] sm:$0xf]
        %v229 = vld [vmem:[%s208 + $0x2c] sm:$0xf]
        %v230 = vld [vmem:[%s208 + $0x30] sm:$0xf]
        %v231 = vld [vmem:[%s208 + $0x34] sm:$0xf]
        %v232 = vld [vmem:[%s208 + $0x38] sm:$0xf]
        %v233 = vld [vmem:[%s208 + $0x3c] sm:$0xf]
        %v234 = vld [vmem:[%s213] sm:$0xf]
        %v235 = vld [vmem:[%s208 + $0x40] sm:$0x1]
        %s236 = scalar_lea.vmem %s213, 4
        %v237 = vld [vmem:[%s236] sm:$0xf]
        %v255 = vunpack.c.l.b16 %v218
        %v256 = vunpack.c.l.b16 %v219
        %v257 = vunpack.c.l.b16 %v220
        %v258 = vunpack.c.l.b16 %v221
        %v259 = vunpack.c.l.b16 %v222
        %v260 = vunpack.c.l.b16 %v223
        %v261 = vunpack.c.l.b16 %v224
        %v262 = vunpack.c.l.b16 %v225
        %v263 = vunpack.c.l.b16 %v226
        %v264 = vunpack.c.l.b16 %v227
        %v265 = vunpack.c.l.b16 %v228
        %v266 = vunpack.c.l.b16 %v229
        %v267 = vunpack.c.l.b16 %v230
        %v268 = vunpack.c.l.b16 %v231
        %v269 = vunpack.c.l.b16 %v232
        %v270 = vunpack.c.l.b16 %v233
        %v271 = vunpack.c.l.b16 %v235
        %v272 = vpack.c.b16 %v256, %v255
        %v273 = vpack.c.b16 %v258, %v257
        %v274 = vpack.c.b16 %v260, %v259
        %v275 = vpack.c.b16 %v262, %v261
        %v276 = vpack.c.b16 %v264, %v263
        %v277 = vpack.c.b16 %v266, %v265
        %v278 = vpack.c.b16 %v268, %v267
        %v279 = vpack.c.b16 %v270, %v269
        %v280 = vpack.c.b16 %v271, %v271
        %vm281 = vsmask.f32 7424
        %v283 = vshrl.u32 %v272, 16
        %v285 = vshll.u32 %v272, 16
        %v287 = vrot.slane %v285, 1
        %v288 = vor.u32 %v283, %v287
        %v290 = vshll.u32 %v273, 16
        %v292 = vrot.slane %v290, 1
        %v293 = vsel %vm281, %v288, %v292
        %v294 = vshrl.u32 %v273, 16
        %v296 = vor.u32 %v294, %v292
        %v298 = vshll.u32 %v274, 16
        %v300 = vrot.slane %v298, 1
        %v301 = vsel %vm281, %v296, %v300
        %v302 = vshrl.u32 %v274, 16
        %v304 = vor.u32 %v302, %v300
        %v306 = vshll.u32 %v275, 16
        %v308 = vrot.slane %v306, 1
        %v309 = vsel %vm281, %v304, %v308
        %v310 = vshrl.u32 %v275, 16
        %v312 = vor.u32 %v310, %v308
        %v314 = vshll.u32 %v276, 16
        %v316 = vrot.slane %v314, 1
        %v317 = vsel %vm281, %v312, %v316
        %v318 = vshrl.u32 %v276, 16
        %v320 = vor.u32 %v318, %v316
        %v322 = vshll.u32 %v277, 16
        %v324 = vrot.slane %v322, 1
        %v325 = vsel %vm281, %v320, %v324
        %v326 = vshrl.u32 %v277, 16
        %v328 = vor.u32 %v326, %v324
        %v330 = vshll.u32 %v278, 16
        %v332 = vrot.slane %v330, 1
        %v333 = vsel %vm281, %v328, %v332
        %v334 = vshrl.u32 %v278, 16
        %v336 = vor.u32 %v334, %v332
        %v338 = vshll.u32 %v279, 16
        %v340 = vrot.slane %v338, 1
        %v341 = vsel %vm281, %v336, %v340
        %v342 = vshrl.u32 %v279, 16
        %v344 = vor.u32 %v342, %v340
        %v346 = vshll.u32 %v280, 16
        %v348 = vrot.slane %v346, 1
        %v349 = vsel %vm281, %v344, %v348
        %vm350 = vcmask 64512
        %v352 = vsel %vm350, %v293, 0
        %v355 = vsel %vm350, %v301, 0
        %v358 = vsel %vm350, %v309, 0
        %v361 = vsel %vm350, %v317, 0
        %v364 = vsel %vm350, %v325, 0
        %v367 = vsel %vm350, %v333, 0
        %v370 = vsel %vm350, %v341, 0
        %v373 = vsel %vm350, %v349, 0
        %vm375 = vcmask 1043456
        %v377 = vsel %vm375, %v237, 0
        %379 = vmatprep.subr.bf16.mxu0 0
        %380 = vmatpush1.bf16.msra.mxu0 %v377
        %381 = vmatprep.subr.bf16.mxu0 0
        %382 = vmatpush1.bf16.msra.mxu0 0
        %383 = vmatprep.subr.bf16.mxu0 0
        %384 = vmatpush1.bf16.msra.mxu0 0
        %385 = vmatprep.subr.bf16.mxu0 0
        %386 = vmatpush1.bf16.msra.mxu0 0
        %387 = vmatprep.subr.bf16.mxu0 0
        %388 = vmatpush1.bf16.msra.mxu0 0
        %389 = vmatprep.subr.bf16.mxu0 0
        %390 = vmatpush1.bf16.msra.mxu0 0
        %391 = vmatprep.subr.bf16.mxu0 0
        %392 = vmatpush1.bf16.msra.mxu0 0
        %393 = vmatprep.subr.bf16.mxu0 0
        %394 = vmatpush1.bf16.msra.mxu0 0
        %395 = vmatprep.subr.bf16.mxu0 0
        %396 = vmatpush1.bf16.msra.mxu0 0
        %397 = vmatprep.subr.bf16.mxu0 0
        %398 = vmatpush1.bf16.msra.mxu0 0
        %399 = vmatprep.subr.bf16.mxu0 0
        %400 = vmatpush1.bf16.msra.mxu0 0
        %401 = vmatprep.subr.bf16.mxu0 0
        %402 = vmatpush1.bf16.msra.mxu0 0
        %403 = vmatprep.subr.bf16.mxu0 0
        %404 = vmatpush1.bf16.msra.mxu0 0
        %405 = vmatprep.subr.bf16.mxu0 0
        %406 = vmatpush1.bf16.msra.mxu0 0
        %407 = vmatprep.subr.bf16.mxu0 0
        %408 = vmatpush1.bf16.msra.mxu0 0
        %409 = vmatprep.subr.bf16.mxu0 0
        %410 = vmatpush1.bf16.msra.mxu0 0
        %411 = vmatprep.mubr.bf16.mxu0 0
        %412 = vmatmul.mubr.bf16.gmra.mrb[0].mxu0 %v352
        %v413 = vpop.f32.mrb[0].mxu0
        %v414 = vadd.f32 0.0, %v413
        %v415 = vpop.f32.mrb[0].mxu0
        %v416 = vpop.f32.mrb[0].mxu0
        %v417 = vadd.f32 0.0, %v416
        %v418 = vpop.f32.mrb[0].mxu0
        %419 = vmatprep.mubr.bf16.mxu0 0
        %420 = vmatmul.mubr.bf16.gmra.mrb[0].mxu0 %v355
        %v421 = vpop.f32.mrb[0].mxu0
        %v422 = vadd.f32 0.0, %v421
        %v423 = vpop.f32.mrb[0].mxu0
        %v424 = vpop.f32.mrb[0].mxu0
        %v425 = vadd.f32 0.0, %v424
        %v426 = vpop.f32.mrb[0].mxu0
        %427 = vmatprep.mubr.bf16.mxu0 0
        %428 = vmatmul.mubr.bf16.gmra.mrb[0].mxu0 %v358
        %v429 = vpop.f32.mrb[0].mxu0
        %v430 = vadd.f32 0.0, %v429
        %v431 = vpop.f32.mrb[0].mxu0
        %v432 = vpop.f32.mrb[0].mxu0
        %v433 = vadd.f32 0.0, %v432
        %v434 = vpop.f32.mrb[0].mxu0
        %435 = vmatprep.mubr.bf16.mxu0 0
        %436 = vmatmul.mubr.bf16.gmra.mrb[0].mxu0 %v361
        %v437 = vpop.f32.mrb[0].mxu0
        %v438 = vadd.f32 0.0, %v437
        %v439 = vpop.f32.mrb[0].mxu0
        %v440 = vpop.f32.mrb[0].mxu0
        %v441 = vadd.f32 0.0, %v440
        %v442 = vpop.f32.mrb[0].mxu0
        %443 = vmatprep.mubr.bf16.mxu0 0
        %444 = vmatmul.mubr.bf16.gmra.mrb[0].mxu0 %v364
        %v445 = vpop.f32.mrb[0].mxu0
        %v446 = vadd.f32 0.0, %v445
        %v447 = vpop.f32.mrb[0].mxu0
        %v448 = vpop.f32.mrb[0].mxu0
        %v449 = vadd.f32 0.0, %v448
        %v450 = vpop.f32.mrb[0].mxu0
        %451 = vmatprep.mubr.bf16.mxu0 0
        %452 = vmatmul.mubr.bf16.gmra.mrb[0].mxu0 %v367
        %v453 = vpop.f32.mrb[0].mxu0
        %v454 = vadd.f32 0.0, %v453
        %v455 = vpop.f32.mrb[0].mxu0
        %v456 = vpop.f32.mrb[0].mxu0
        %v457 = vadd.f32 0.0, %v456
        %v458 = vpop.f32.mrb[0].mxu0
        %459 = vmatprep.mubr.bf16.mxu0 0
        %460 = vmatmul.mubr.bf16.gmra.mrb[0].mxu0 %v370
        %v461 = vpop.f32.mrb[0].mxu0
        %v462 = vadd.f32 0.0, %v461
        %v463 = vpop.f32.mrb[0].mxu0
        %v464 = vpop.f32.mrb[0].mxu0
        %v465 = vadd.f32 0.0, %v464
        %v466 = vpop.f32.mrb[0].mxu0
        %467 = vmatprep.mubr.bf16.mxu0 0
        %468 = vmatmul.mubr.bf16.gmra.mrb[0].mxu0 %v373
        %v469 = vpop.f32.mrb[0].mxu0
        %v470 = vadd.f32 0.0, %v469
        %v471 = vpop.f32.mrb[0].mxu0
        %v472 = vpop.f32.mrb[0].mxu0
        %v473 = vadd.f32 0.0, %v472
        %v474 = vpop.f32.mrb[0].mxu0
        %475 = vdwg.mxu0
        %v476 = vsel %vm350, %v272, 0
        %v478 = vsel %vm350, %v273, 0
        %v480 = vsel %vm350, %v274, 0
        %v482 = vsel %vm350, %v275, 0
        %v484 = vsel %vm350, %v276, 0
        %v486 = vsel %vm350, %v277, 0
        %v488 = vsel %vm350, %v278, 0
        %v490 = vsel %vm350, %v279, 0
        %v493 = vsel %vm375, %v234, 0
        %495 = vmatprep.subr.bf16.mxu0 0
        %496 = vmatpush1.bf16.msra.mxu0 %v493
        %497 = vmatprep.subr.bf16.mxu0 0
        %498 = vmatpush1.bf16.msra.mxu0 0
        %499 = vmatprep.subr.bf16.mxu0 0
        %500 = vmatpush1.bf16.msra.mxu0 0
        %501 = vmatprep.subr.bf16.mxu0 0
        %502 = vmatpush1.bf16.msra.mxu0 0
        %503 = vmatprep.subr.bf16.mxu0 0
        %504 = vmatpush1.bf16.msra.mxu0 0
        %505 = vmatprep.subr.bf16.mxu0 0
        %506 = vmatpush1.bf16.msra.mxu0 0
        %507 = vmatprep.subr.bf16.mxu0 0
        %508 = vmatpush1.bf16.msra.mxu0 0
        %509 = vmatprep.subr.bf16.mxu0 0
        %510 = vmatpush1.bf16.msra.mxu0 0
        %511 = vmatprep.subr.bf16.mxu0 0
        %512 = vmatpush1.bf16.msra.mxu0 0
        %513 = vmatprep.subr.bf16.mxu0 0
        %514 = vmatpush1.bf16.msra.mxu0 0
        %515 = vmatprep.subr.bf16.mxu0 0
        %516 = vmatpush1.bf16.msra.mxu0 0
        %517 = vmatprep.subr.bf16.mxu0 0
        %518 = vmatpush1.bf16.msra.mxu0 0
        %519 = vmatprep.subr.bf16.mxu0 0
        %520 = vmatpush1.bf16.msra.mxu0 0
        %521 = vmatprep.subr.bf16.mxu0 0
        %522 = vmatpush1.bf16.msra.mxu0 0
        %523 = vmatprep.subr.bf16.mxu0 0
        %524 = vmatpush1.bf16.msra.mxu0 0
        %525 = vmatprep.subr.bf16.mxu0 0
        %526 = vmatpush1.bf16.msra.mxu0 0
        %527 = vmatprep.mubr.bf16.mxu0 0
        %528 = vmatmul.mubr.bf16.gmra.mrb[0].mxu0 %v476
        %v529 = vpop.f32.mrb[0].mxu0
        %v530 = vadd.f32 %v414, %v529
        %v531 = vpop.f32.mrb[0].mxu0
        %v532 = vpop.f32.mrb[0].mxu0
        %v533 = vadd.f32 %v417, %v532
        %v534 = vpop.f32.mrb[0].mxu0
        %535 = vmatprep.mubr.bf16.mxu0 0
        %536 = vmatmul.mubr.bf16.gmra.mrb[0].mxu0 %v478
        %v537 = vpop.f32.mrb[0].mxu0
        %v538 = vadd.f32 %v422, %v537
        %v539 = vpop.f32.mrb[0].mxu0
        %v540 = vpop.f32.mrb[0].mxu0
        %v541 = vadd.f32 %v425, %v540
        %v542 = vpop.f32.mrb[0].mxu0
        %543 = vmatprep.mubr.bf16.mxu0 0
        %544 = vmatmul.mubr.bf16.gmra.mrb[0].mxu0 %v480
        %v545 = vpop.f32.mrb[0].mxu0
        %v546 = vadd.f32 %v430, %v545
        %v547 = vpop.f32.mrb[0].mxu0
        %v548 = vpop.f32.mrb[0].mxu0
        %v549 = vadd.f32 %v433, %v548
        %v550 = vpop.f32.mrb[0].mxu0
        %551 = vmatprep.mubr.bf16.mxu0 0
        %552 = vmatmul.mubr.bf16.gmra.mrb[0].mxu0 %v482
        %v553 = vpop.f32.mrb[0].mxu0
        %v554 = vadd.f32 %v438, %v553
        %v555 = vpop.f32.mrb[0].mxu0
        %v556 = vpop.f32.mrb[0].mxu0
        %v557 = vadd.f32 %v441, %v556
        %v558 = vpop.f32.mrb[0].mxu0
        %559 = vmatprep.mubr.bf16.mxu0 0
        %560 = vmatmul.mubr.bf16.gmra.mrb[0].mxu0 %v484
        %v561 = vpop.f32.mrb[0].mxu0
        %v562 = vadd.f32 %v446, %v561
        %v563 = vpop.f32.mrb[0].mxu0
        %v564 = vpop.f32.mrb[0].mxu0
        %v565 = vadd.f32 %v449, %v564
        %v566 = vpop.f32.mrb[0].mxu0
        %567 = vmatprep.mubr.bf16.mxu0 0
        %568 = vmatmul.mubr.bf16.gmra.mrb[0].mxu0 %v486
        %v569 = vpop.f32.mrb[0].mxu0
        %v570 = vadd.f32 %v454, %v569
        %v571 = vpop.f32.mrb[0].mxu0
        %v572 = vpop.f32.mrb[0].mxu0
        %v573 = vadd.f32 %v457, %v572
        %v574 = vpop.f32.mrb[0].mxu0
        %575 = vmatprep.mubr.bf16.mxu0 0
        %576 = vmatmul.mubr.bf16.gmra.mrb[0].mxu0 %v488
        %v577 = vpop.f32.mrb[0].mxu0
        %v578 = vadd.f32 %v462, %v577
        %v579 = vpop.f32.mrb[0].mxu0
        %v580 = vpop.f32.mrb[0].mxu0
        %v581 = vadd.f32 %v465, %v580
        %v582 = vpop.f32.mrb[0].mxu0
        %583 = vmatprep.mubr.bf16.mxu0 0
        %584 = vmatmul.mubr.bf16.gmra.mrb[0].mxu0 %v490
        %v585 = vpop.f32.mrb[0].mxu0
        %v586 = vadd.f32 %v470, %v585
        %v587 = vpop.f32.mrb[0].mxu0
        %v588 = vpop.f32.mrb[0].mxu0
        %v589 = vadd.f32 %v473, %v588
        %v590 = vpop.f32.mrb[0].mxu0
        %591 = vdwg.mxu0
        %v592 = vld [vmem:[%s208] sm:$0xe]
        %s593 = scalar_lea.vmem %s213, 8
        %v594 = vld [vmem:[%s593] sm:$0xf]
        %v596 = vunpack.c.l.b16 %v592
        %v597 = vpack.c.b16 %v256, %v596
        %vm598 = vcmask 1046528
        %v599 = vrot.slane %v597, 1
        %v600 = vrot.slane %v273, 1
        %v601 = vsel %vm598, %v599, %v600
        %v602 = vrot.slane %v274, 1
        %v603 = vsel %vm598, %v600, %v602
        %v604 = vrot.slane %v275, 1
        %v605 = vsel %vm598, %v602, %v604
        %v606 = vrot.slane %v276, 1
        %v607 = vsel %vm598, %v604, %v606
        %v608 = vrot.slane %v277, 1
        %v609 = vsel %vm598, %v606, %v608
        %v610 = vrot.slane %v278, 1
        %v611 = vsel %vm598, %v608, %v610
        %v612 = vrot.slane %v279, 1
        %v613 = vsel %vm598, %v610, %v612
        %v614 = vrot.slane %v280, 1
        %v615 = vsel %vm598, %v612, %v614
        %v617 = vsel %vm350, %v601, 0
        %v620 = vsel %vm350, %v603, 0
        %v623 = vsel %vm350, %v605, 0
        %v626 = vsel %vm350, %v607, 0
        %v629 = vsel %vm350, %v609, 0
        %v632 = vsel %vm350, %v611, 0
        %v635 = vsel %vm350, %v613, 0
        %v638 = vsel %vm350, %v615, 0
        %v641 = vsel %vm375, %v594, 0
        %643 = vmatprep.subr.bf16.mxu0 0
        %644 = vmatpush1.bf16.msra.mxu0 %v641
        %645 = vmatprep.subr.bf16.mxu0 0
        %646 = vmatpush1.bf16.msra.mxu0 0
        %647 = vmatprep.subr.bf16.mxu0 0
        %648 = vmatpush1.bf16.msra.mxu0 0
        %649 = vmatprep.subr.bf16.mxu0 0
        %650 = vmatpush1.bf16.msra.mxu0 0
        %651 = vmatprep.subr.bf16.mxu0 0
        %652 = vmatpush1.bf16.msra.mxu0 0
        %653 = vmatprep.subr.bf16.mxu0 0
        %654 = vmatpush1.bf16.msra.mxu0 0
        %655 = vmatprep.subr.bf16.mxu0 0
        %656 = vmatpush1.bf16.msra.mxu0 0
        %657 = vmatprep.subr.bf16.mxu0 0
        %658 = vmatpush1.bf16.msra.mxu0 0
        %659 = vmatprep.subr.bf16.mxu0 0
        %660 = vmatpush1.bf16.msra.mxu0 0
        %661 = vmatprep.subr.bf16.mxu0 0
        %662 = vmatpush1.bf16.msra.mxu0 0
        %663 = vmatprep.subr.bf16.mxu0 0
        %664 = vmatpush1.bf16.msra.mxu0 0
        %665 = vmatprep.subr.bf16.mxu0 0
        %666 = vmatpush1.bf16.msra.mxu0 0
        %667 = vmatprep.subr.bf16.mxu0 0
        %668 = vmatpush1.bf16.msra.mxu0 0
        %669 = vmatprep.subr.bf16.mxu0 0
        %670 = vmatpush1.bf16.msra.mxu0 0
        %671 = vmatprep.subr.bf16.mxu0 0
        %672 = vmatpush1.bf16.msra.mxu0 0
        %673 = vmatprep.subr.bf16.mxu0 0
        %674 = vmatpush1.bf16.msra.mxu0 0
        %675 = vmatprep.mubr.bf16.mxu0 0
        %676 = vmatmul.mubr.bf16.gmra.mrb[0].mxu0 %v617
        %v677 = vpop.f32.mrb[0].mxu0
        %v678 = vadd.f32 0.0, %v677
        %v679 = vpop.f32.mrb[0].mxu0
        %v680 = vpop.f32.mrb[0].mxu0
        %v681 = vadd.f32 0.0, %v680
        %v682 = vpop.f32.mrb[0].mxu0
        %683 = vmatprep.mubr.bf16.mxu0 0
        %684 = vmatmul.mubr.bf16.gmra.mrb[0].mxu0 %v620
        %v685 = vpop.f32.mrb[0].mxu0
        %v686 = vadd.f32 0.0, %v685
        %v687 = vpop.f32.mrb[0].mxu0
        %v688 = vpop.f32.mrb[0].mxu0
        %v689 = vadd.f32 0.0, %v688
        %v690 = vpop.f32.mrb[0].mxu0
        %691 = vmatprep.mubr.bf16.mxu0 0
        %692 = vmatmul.mubr.bf16.gmra.mrb[0].mxu0 %v623
        %v693 = vpop.f32.mrb[0].mxu0
        %v694 = vadd.f32 0.0, %v693
        %v695 = vpop.f32.mrb[0].mxu0
        %v696 = vpop.f32.mrb[0].mxu0
        %v697 = vadd.f32 0.0, %v696
        %v698 = vpop.f32.mrb[0].mxu0
        %699 = vmatprep.mubr.bf16.mxu0 0
        %700 = vmatmul.mubr.bf16.gmra.mrb[0].mxu0 %v626
        %v701 = vpop.f32.mrb[0].mxu0
        %v702 = vadd.f32 0.0, %v701
        %v703 = vpop.f32.mrb[0].mxu0
        %v704 = vpop.f32.mrb[0].mxu0
        %v705 = vadd.f32 0.0, %v704
        %v706 = vpop.f32.mrb[0].mxu0
        %707 = vmatprep.mubr.bf16.mxu0 0
        %708 = vmatmul.mubr.bf16.gmra.mrb[0].mxu0 %v629
        %v709 = vpop.f32.mrb[0].mxu0
        %v710 = vadd.f32 0.0, %v709
        %v711 = vpop.f32.mrb[0].mxu0
        %v712 = vpop.f32.mrb[0].mxu0
        %v713 = vadd.f32 0.0, %v712
        %v714 = vpop.f32.mrb[0].mxu0
        %715 = vmatprep.mubr.bf16.mxu0 0
        %716 = vmatmul.mubr.bf16.gmra.mrb[0].mxu0 %v632
        %v717 = vpop.f32.mrb[0].mxu0
        %v718 = vadd.f32 0.0, %v717
        %v719 = vpop.f32.mrb[0].mxu0
        %v720 = vpop.f32.mrb[0].mxu0
        %v721 = vadd.f32 0.0, %v720
        %v722 = vpop.f32.mrb[0].mxu0
        %723 = vmatprep.mubr.bf16.mxu0 0
        %724 = vmatmul.mubr.bf16.gmra.mrb[0].mxu0 %v635
        %v725 = vpop.f32.mrb[0].mxu0
        %v726 = vadd.f32 0.0, %v725
        %v727 = vpop.f32.mrb[0].mxu0
        %v728 = vpop.f32.mrb[0].mxu0
        %v729 = vadd.f32 0.0, %v728
        %v730 = vpop.f32.mrb[0].mxu0
        %731 = vmatprep.mubr.bf16.mxu0 0
        %732 = vmatmul.mubr.bf16.gmra.mrb[0].mxu0 %v638
        %v733 = vpop.f32.mrb[0].mxu0
        %v734 = vadd.f32 0.0, %v733
        %v735 = vpop.f32.mrb[0].mxu0
        %v736 = vpop.f32.mrb[0].mxu0
        %v737 = vadd.f32 0.0, %v736
        %v738 = vpop.f32.mrb[0].mxu0
        %739 = vdwg.mxu0
        %v740 = vadd.f32 %v530, %v678
        %v741 = vadd.f32 %v533, %v681
        %v742 = vadd.f32 %v538, %v686
        %v743 = vadd.f32 %v541, %v689
        %v744 = vadd.f32 %v546, %v694
        %v745 = vadd.f32 %v549, %v697
        %v746 = vadd.f32 %v554, %v702
        %v747 = vadd.f32 %v557, %v705
        %v748 = vadd.f32 %v562, %v710
        %v749 = vadd.f32 %v565, %v713
        %v750 = vadd.f32 %v570, %v718
        %v751 = vadd.f32 %v573, %v721
        %v752 = vadd.f32 %v578, %v726
        %v753 = vadd.f32 %v581, %v729
        %v754 = vadd.f32 %v586, %v734
        %v755 = vadd.f32 %v589, %v737
        %v756 = vld [vmem:[%s208 + $0x40] sm:$0x3]
        %s757 = scalar_lea.vmem %s213, 12
        %v758 = vld [vmem:[%s757] sm:$0xf]
        %v760 = vunpack.c.l.b16 %v756
        %v761 = vpack.c.b16 %v760, %v760
        %vm762 = vsmask.f32 6400
        %v764 = vshrl.u32 %v597, 16
        %v766 = vrot.slane %v764, 1
        %v767 = vshll.u32 %v597, 16
        %v769 = vrot.slane %v767, 2
        %v770 = vor.u32 %v766, %v769
        %v771 = vrot.slane %v294, 1
        %v772 = vrot.slane %v290, 2
        %v773 = vor.u32 %v771, %v772
        %v774 = vsel %vm762, %v770, %v773
        %v775 = vrot.slane %v302, 1
        %v776 = vrot.slane %v298, 2
        %v777 = vor.u32 %v775, %v776
        %v778 = vsel %vm762, %v773, %v777
        %v779 = vrot.slane %v310, 1
        %v780 = vrot.slane %v306, 2
        %v781 = vor.u32 %v779, %v780
        %v782 = vsel %vm762, %v777, %v781
        %v783 = vrot.slane %v318, 1
        %v784 = vrot.slane %v314, 2
        %v785 = vor.u32 %v783, %v784
        %v786 = vsel %vm762, %v781, %v785
        %v787 = vrot.slane %v326, 1
        %v788 = vrot.slane %v322, 2
        %v789 = vor.u32 %v787, %v788
        %v790 = vsel %vm762, %v785, %v789
        %v791 = vrot.slane %v334, 1
        %v792 = vrot.slane %v330, 2
        %v793 = vor.u32 %v791, %v792
        %v794 = vsel %vm762, %v789, %v793
        %v795 = vrot.slane %v342, 1
        %v796 = vrot.slane %v338, 2
        %v797 = vor.u32 %v795, %v796
        %v798 = vsel %vm762, %v793, %v797
        %v800 = vshrl.u32 %v761, 16
        %v802 = vrot.slane %v800, 1
        %v803 = vshll.u32 %v761, 16
        %v805 = vrot.slane %v803, 2
        %v806 = vor.u32 %v802, %v805
        %v807 = vsel %vm762, %v797, %v806
        %v809 = vsel %vm350, %v774, 0
        %v812 = vsel %vm350, %v778, 0
        %v815 = vsel %vm350, %v782, 0
        %v818 = vsel %vm350, %v786, 0
        %v821 = vsel %vm350, %v790, 0
        %v824 = vsel %vm350, %v794, 0
        %v827 = vsel %vm350, %v798, 0
        %v830 = vsel %vm350, %v807, 0
        %v833 = vsel %vm375, %v758, 0
        %835 = vmatprep.subr.bf16.mxu0 0
        %836 = vmatpush1.bf16.msra.mxu0 %v833
        %837 = vmatprep.subr.bf16.mxu0 0
        %838 = vmatpush1.bf16.msra.mxu0 0
        %839 = vmatprep.subr.bf16.mxu0 0
        %840 = vmatpush1.bf16.msra.mxu0 0
        %841 = vmatprep.subr.bf16.mxu0 0
        %842 = vmatpush1.bf16.msra.mxu0 0
        %843 = vmatprep.subr.bf16.mxu0 0
        %844 = vmatpush1.bf16.msra.mxu0 0
        %845 = vmatprep.subr.bf16.mxu0 0
        %846 = vmatpush1.bf16.msra.mxu0 0
        %847 = vmatprep.subr.bf16.mxu0 0
        %848 = vmatpush1.bf16.msra.mxu0 0
        %849 = vmatprep.subr.bf16.mxu0 0
        %850 = vmatpush1.bf16.msra.mxu0 0
        %851 = vmatprep.subr.bf16.mxu0 0
        %852 = vmatpush1.bf16.msra.mxu0 0
        %853 = vmatprep.subr.bf16.mxu0 0
        %854 = vmatpush1.bf16.msra.mxu0 0
        %855 = vmatprep.subr.bf16.mxu0 0
        %856 = vmatpush1.bf16.msra.mxu0 0
        %857 = vmatprep.subr.bf16.mxu0 0
        %858 = vmatpush1.bf16.msra.mxu0 0
        %859 = vmatprep.subr.bf16.mxu0 0
        %860 = vmatpush1.bf16.msra.mxu0 0
        %861 = vmatprep.subr.bf16.mxu0 0
        %862 = vmatpush1.bf16.msra.mxu0 0
        %863 = vmatprep.subr.bf16.mxu0 0
        %864 = vmatpush1.bf16.msra.mxu0 0
        %865 = vmatprep.subr.bf16.mxu0 0
        %866 = vmatpush1.bf16.msra.mxu0 0
        %867 = vmatprep.mubr.bf16.mxu0 0
        %868 = vmatmul.mubr.bf16.gmra.mrb[0].mxu0 %v809
        %v869 = vpop.f32.mrb[0].mxu0
        %v870 = vadd.f32 0.0, %v869
        %v871 = vpop.f32.mrb[0].mxu0
        %v872 = vpop.f32.mrb[0].mxu0
        %v873 = vadd.f32 0.0, %v872
        %v874 = vpop.f32.mrb[0].mxu0
        %875 = vmatprep.mubr.bf16.mxu0 0
        %876 = vmatmul.mubr.bf16.gmra.mrb[0].mxu0 %v812
        %v877 = vpop.f32.mrb[0].mxu0
        %v878 = vadd.f32 0.0, %v877
        %v879 = vpop.f32.mrb[0].mxu0
        %v880 = vpop.f32.mrb[0].mxu0
        %v881 = vadd.f32 0.0, %v880
        %v882 = vpop.f32.mrb[0].mxu0
        %883 = vmatprep.mubr.bf16.mxu0 0
        %884 = vmatmul.mubr.bf16.gmra.mrb[0].mxu0 %v815
        %v885 = vpop.f32.mrb[0].mxu0
        %v886 = vadd.f32 0.0, %v885
        %v887 = vpop.f32.mrb[0].mxu0
        %v888 = vpop.f32.mrb[0].mxu0
        %v889 = vadd.f32 0.0, %v888
        %v890 = vpop.f32.mrb[0].mxu0
        %891 = vmatprep.mubr.bf16.mxu0 0
        %892 = vmatmul.mubr.bf16.gmra.mrb[0].mxu0 %v818
        %v893 = vpop.f32.mrb[0].mxu0
        %v894 = vadd.f32 0.0, %v893
        %v895 = vpop.f32.mrb[0].mxu0
        %v896 = vpop.f32.mrb[0].mxu0
        %v897 = vadd.f32 0.0, %v896
        %v898 = vpop.f32.mrb[0].mxu0
        %899 = vmatprep.mubr.bf16.mxu0 0
        %900 = vmatmul.mubr.bf16.gmra.mrb[0].mxu0 %v821
        %v901 = vpop.f32.mrb[0].mxu0
        %v902 = vadd.f32 0.0, %v901
        %v903 = vpop.f32.mrb[0].mxu0
        %v904 = vpop.f32.mrb[0].mxu0
        %v905 = vadd.f32 0.0, %v904
        %v906 = vpop.f32.mrb[0].mxu0
        %907 = vmatprep.mubr.bf16.mxu0 0
        %908 = vmatmul.mubr.bf16.gmra.mrb[0].mxu0 %v824
        %v909 = vpop.f32.mrb[0].mxu0
        %v910 = vadd.f32 0.0, %v909
        %v911 = vpop.f32.mrb[0].mxu0
        %v912 = vpop.f32.mrb[0].mxu0
        %v913 = vadd.f32 0.0, %v912
        %v914 = vpop.f32.mrb[0].mxu0
        %915 = vmatprep.mubr.bf16.mxu0 0
        %916 = vmatmul.mubr.bf16.gmra.mrb[0].mxu0 %v827
        %v917 = vpop.f32.mrb[0].mxu0
        %v918 = vadd.f32 0.0, %v917
        %v919 = vpop.f32.mrb[0].mxu0
        %v920 = vpop.f32.mrb[0].mxu0
        %v921 = vadd.f32 0.0, %v920
        %v922 = vpop.f32.mrb[0].mxu0
        %923 = vmatprep.mubr.bf16.mxu0 0
        %924 = vmatmul.mubr.bf16.gmra.mrb[0].mxu0 %v830
        %v925 = vpop.f32.mrb[0].mxu0
        %v926 = vadd.f32 0.0, %v925
        %v927 = vpop.f32.mrb[0].mxu0
        %v928 = vpop.f32.mrb[0].mxu0
        %v929 = vadd.f32 0.0, %v928
        %v930 = vpop.f32.mrb[0].mxu0
        %931 = vdwg.mxu0
        %v932 = vadd.f32 %v740, %v870
        %v933 = vadd.f32 %v741, %v873
        %v934 = vadd.f32 %v742, %v878
        %v935 = vadd.f32 %v743, %v881
        %v936 = vadd.f32 %v744, %v886
        %v937 = vadd.f32 %v745, %v889
        %v938 = vadd.f32 %v746, %v894
        %v939 = vadd.f32 %v747, %v897
        %v940 = vadd.f32 %v748, %v902
        %v941 = vadd.f32 %v749, %v905
        %v942 = vadd.f32 %v750, %v910
        %v943 = vadd.f32 %v751, %v913
        %v944 = vadd.f32 %v752, %v918
        %v945 = vadd.f32 %v753, %v921
        %v946 = vadd.f32 %v754, %v926
        %v947 = vadd.f32 %v755, %v929
        %v948 = vld [vmem:[%s208] sm:$0xc]
        %s949 = scalar_lea.vmem %s213, 16
        %v950 = vld [vmem:[%s949] sm:$0xf]
        %v952 = vunpack.c.l.b16 %v948
        %v953 = vpack.c.b16 %v256, %v952
        %vm954 = vcmask 1045504
        %v955 = vrot.slane %v953, 2
        %v956 = vrot.slane %v273, 2
        %v957 = vsel %vm954, %v955, %v956
        %v958 = vrot.slane %v274, 2
        %v959 = vsel %vm954, %v956, %v958
        %v960 = vrot.slane %v275, 2
        %v961 = vsel %vm954, %v958, %v960
        %v962 = vrot.slane %v276, 2
        %v963 = vsel %vm954, %v960, %v962
        %v964 = vrot.slane %v277, 2
        %v965 = vsel %vm954, %v962, %v964
        %v966 = vrot.slane %v278, 2
        %v967 = vsel %vm954, %v964, %v966
        %v968 = vrot.slane %v279, 2
        %v969 = vsel %vm954, %v966, %v968
        %v970 = vrot.slane %v761, 2
        %v971 = vsel %vm954, %v968, %v970
        %v973 = vsel %vm350, %v957, 0
        %v976 = vsel %vm350, %v959, 0
        %v979 = vsel %vm350, %v961, 0
        %v982 = vsel %vm350, %v963, 0
        %v985 = vsel %vm350, %v965, 0
        %v988 = vsel %vm350, %v967, 0
        %v991 = vsel %vm350, %v969, 0
        %v994 = vsel %vm350, %v971, 0
        %v997 = vsel %vm375, %v950, 0
        %999 = vmatprep.subr.bf16.mxu0 0
        %1000 = vmatpush1.bf16.msra.mxu0 %v997
        %1001 = vmatprep.subr.bf16.mxu0 0
        %1002 = vmatpush1.bf16.msra.mxu0 0
        %1003 = vmatprep.subr.bf16.mxu0 0
        %1004 = vmatpush1.bf16.msra.mxu0 0
        %1005 = vmatprep.subr.bf16.mxu0 0
        %1006 = vmatpush1.bf16.msra.mxu0 0
        %1007 = vmatprep.subr.bf16.mxu0 0
        %1008 = vmatpush1.bf16.msra.mxu0 0
        %1009 = vmatprep.subr.bf16.mxu0 0
        %1010 = vmatpush1.bf16.msra.mxu0 0
        %1011 = vmatprep.subr.bf16.mxu0 0
        %1012 = vmatpush1.bf16.msra.mxu0 0
        %1013 = vmatprep.subr.bf16.mxu0 0
        %1014 = vmatpush1.bf16.msra.mxu0 0
        %1015 = vmatprep.subr.bf16.mxu0 0
        %1016 = vmatpush1.bf16.msra.mxu0 0
        %1017 = vmatprep.subr.bf16.mxu0 0
        %1018 = vmatpush1.bf16.msra.mxu0 0
        %1019 = vmatprep.subr.bf16.mxu0 0
        %1020 = vmatpush1.bf16.msra.mxu0 0
        %1021 = vmatprep.subr.bf16.mxu0 0
        %1022 = vmatpush1.bf16.msra.mxu0 0
        %1023 = vmatprep.subr.bf16.mxu0 0
        %1024 = vmatpush1.bf16.msra.mxu0 0
        %1025 = vmatprep.subr.bf16.mxu0 0
        %1026 = vmatpush1.bf16.msra.mxu0 0
        %1027 = vmatprep.subr.bf16.mxu0 0
        %1028 = vmatpush1.bf16.msra.mxu0 0
        %1029 = vmatprep.subr.bf16.mxu0 0
        %1030 = vmatpush1.bf16.msra.mxu0 0
        %1031 = vmatprep.mubr.bf16.mxu0 0
        %1032 = vmatmul.mubr.bf16.gmra.mrb[0].mxu0 %v973
        %v1033 = vpop.f32.mrb[0].mxu0
        %v1034 = vadd.f32 0.0, %v1033
        %v1035 = vpop.f32.mrb[0].mxu0
        %v1036 = vpop.f32.mrb[0].mxu0
        %v1037 = vadd.f32 0.0, %v1036
        %v1038 = vpop.f32.mrb[0].mxu0
        %1039 = vmatprep.mubr.bf16.mxu0 0
        %1040 = vmatmul.mubr.bf16.gmra.mrb[0].mxu0 %v976
        %v1041 = vpop.f32.mrb[0].mxu0
        %v1042 = vadd.f32 0.0, %v1041
        %v1043 = vpop.f32.mrb[0].mxu0
        %v1044 = vpop.f32.mrb[0].mxu0
        %v1045 = vadd.f32 0.0, %v1044
        %v1046 = vpop.f32.mrb[0].mxu0
        %1047 = vmatprep.mubr.bf16.mxu0 0
        %1048 = vmatmul.mubr.bf16.gmra.mrb[0].mxu0 %v979
        %v1049 = vpop.f32.mrb[0].mxu0
        %v1050 = vadd.f32 0.0, %v1049
        %v1051 = vpop.f32.mrb[0].mxu0
        %v1052 = vpop.f32.mrb[0].mxu0
        %v1053 = vadd.f32 0.0, %v1052
        %v1054 = vpop.f32.mrb[0].mxu0
        %1055 = vmatprep.mubr.bf16.mxu0 0
        %1056 = vmatmul.mubr.bf16.gmra.mrb[0].mxu0 %v982
        %v1057 = vpop.f32.mrb[0].mxu0
        %v1058 = vadd.f32 0.0, %v1057
        %v1059 = vpop.f32.mrb[0].mxu0
        %v1060 = vpop.f32.mrb[0].mxu0
        %v1061 = vadd.f32 0.0, %v1060
        %v1062 = vpop.f32.mrb[0].mxu0
        %1063 = vmatprep.mubr.bf16.mxu0 0
        %1064 = vmatmul.mubr.bf16.gmra.mrb[0].mxu0 %v985
        %v1065 = vpop.f32.mrb[0].mxu0
        %v1066 = vadd.f32 0.0, %v1065
        %v1067 = vpop.f32.mrb[0].mxu0
        %v1068 = vpop.f32.mrb[0].mxu0
        %v1069 = vadd.f32 0.0, %v1068
        %v1070 = vpop.f32.mrb[0].mxu0
        %1071 = vmatprep.mubr.bf16.mxu0 0
        %1072 = vmatmul.mubr.bf16.gmra.mrb[0].mxu0 %v988
        %v1073 = vpop.f32.mrb[0].mxu0
        %v1074 = vadd.f32 0.0, %v1073
        %v1075 = vpop.f32.mrb[0].mxu0
        %v1076 = vpop.f32.mrb[0].mxu0
        %v1077 = vadd.f32 0.0, %v1076
        %v1078 = vpop.f32.mrb[0].mxu0
        %1079 = vmatprep.mubr.bf16.mxu0 0
        %1080 = vmatmul.mubr.bf16.gmra.mrb[0].mxu0 %v991
        %v1081 = vpop.f32.mrb[0].mxu0
        %v1082 = vadd.f32 0.0, %v1081
        %v1083 = vpop.f32.mrb[0].mxu0
        %v1084 = vpop.f32.mrb[0].mxu0
        %v1085 = vadd.f32 0.0, %v1084
        %v1086 = vpop.f32.mrb[0].mxu0
        %1087 = vmatprep.mubr.bf16.mxu0 0
        %1088 = vmatmul.mubr.bf16.gmra.mrb[0].mxu0 %v994
        %v1089 = vpop.f32.mrb[0].mxu0
        %v1090 = vadd.f32 0.0, %v1089
        %v1091 = vpop.f32.mrb[0].mxu0
        %v1092 = vpop.f32.mrb[0].mxu0
        %v1093 = vadd.f32 0.0, %v1092
        %v1094 = vpop.f32.mrb[0].mxu0
        %1095 = vdwg.mxu0
        %v1096 = vadd.f32 %v932, %v1034
        %v1097 = vadd.f32 %v933, %v1037
        %v1098 = vadd.f32 %v934, %v1042
        %v1099 = vadd.f32 %v935, %v1045
        %v1100 = vadd.f32 %v936, %v1050
        %v1101 = vadd.f32 %v937, %v1053
        %v1102 = vadd.f32 %v938, %v1058
        %v1103 = vadd.f32 %v939, %v1061
        %v1104 = vadd.f32 %v940, %v1066
        %v1105 = vadd.f32 %v941, %v1069
        %v1106 = vadd.f32 %v942, %v1074
        %v1107 = vadd.f32 %v943, %v1077
        %v1108 = vadd.f32 %v944, %v1082
        %v1109 = vadd.f32 %v945, %v1085
        %v1110 = vadd.f32 %v946, %v1090
        %v1111 = vadd.f32 %v947, %v1093
        %v1112 = vld [vmem:[%s208 + $0x40] sm:$0x7]
        %s1113 = scalar_lea.vmem %s213, 20
        %v1114 = vld [vmem:[%s1113] sm:$0xf]
        %v1116 = vunpack.c.l.b16 %v1112
        %v1117 = vpack.c.b16 %v1116, %v1116
        %vm1118 = vsmask.f32 5376
        %v1120 = vshrl.u32 %v953, 16
        %v1122 = vrot.slane %v1120, 2
        %v1123 = vshll.u32 %v953, 16
        %v1125 = vrot.slane %v1123, 3
        %v1126 = vor.u32 %v1122, %v1125
        %v1127 = vrot.slane %v294, 2
        %v1128 = vrot.slane %v290, 3
        %v1129 = vor.u32 %v1127, %v1128
        %v1130 = vsel %vm1118, %v1126, %v1129
        %v1131 = vrot.slane %v302, 2
        %v1132 = vrot.slane %v298, 3
        %v1133 = vor.u32 %v1131, %v1132
        %v1134 = vsel %vm1118, %v1129, %v1133
        %v1135 = vrot.slane %v310, 2
        %v1136 = vrot.slane %v306, 3
        %v1137 = vor.u32 %v1135, %v1136
        %v1138 = vsel %vm1118, %v1133, %v1137
        %v1139 = vrot.slane %v318, 2
        %v1140 = vrot.slane %v314, 3
        %v1141 = vor.u32 %v1139, %v1140
        %v1142 = vsel %vm1118, %v1137, %v1141
        %v1143 = vrot.slane %v326, 2
        %v1144 = vrot.slane %v322, 3
        %v1145 = vor.u32 %v1143, %v1144
        %v1146 = vsel %vm1118, %v1141, %v1145
        %v1147 = vrot.slane %v334, 2
        %v1148 = vrot.slane %v330, 3
        %v1149 = vor.u32 %v1147, %v1148
        %v1150 = vsel %vm1118, %v1145, %v1149
        %v1151 = vrot.slane %v342, 2
        %v1152 = vrot.slane %v338, 3
        %v1153 = vor.u32 %v1151, %v1152
        %v1154 = vsel %vm1118, %v1149, %v1153
        %v1156 = vshrl.u32 %v1117, 16
        %v1158 = vrot.slane %v1156, 2
        %v1159 = vshll.u32 %v1117, 16
        %v1161 = vrot.slane %v1159, 3
        %v1162 = vor.u32 %v1158, %v1161
        %v1163 = vsel %vm1118, %v1153, %v1162
        %v1165 = vsel %vm350, %v1130, 0
        %v1168 = vsel %vm350, %v1134, 0
        %v1171 = vsel %vm350, %v1138, 0
        %v1174 = vsel %vm350, %v1142, 0
        %v1177 = vsel %vm350, %v1146, 0
        %v1180 = vsel %vm350, %v1150, 0
        %v1183 = vsel %vm350, %v1154, 0
        %v1186 = vsel %vm350, %v1163, 0
        %v1189 = vsel %vm375, %v1114, 0
        %1191 = vmatprep.subr.bf16.mxu0 0
        %1192 = vmatpush1.bf16.msra.mxu0 %v1189
        %1193 = vmatprep.subr.bf16.mxu0 0
        %1194 = vmatpush1.bf16.msra.mxu0 0
        %1195 = vmatprep.subr.bf16.mxu0 0
        %1196 = vmatpush1.bf16.msra.mxu0 0
        %1197 = vmatprep.subr.bf16.mxu0 0
        %1198 = vmatpush1.bf16.msra.mxu0 0
        %1199 = vmatprep.subr.bf16.mxu0 0
        %1200 = vmatpush1.bf16.msra.mxu0 0
        %1201 = vmatprep.subr.bf16.mxu0 0
        %1202 = vmatpush1.bf16.msra.mxu0 0
        %1203 = vmatprep.subr.bf16.mxu0 0
        %1204 = vmatpush1.bf16.msra.mxu0 0
        %1205 = vmatprep.subr.bf16.mxu0 0
        %1206 = vmatpush1.bf16.msra.mxu0 0
        %1207 = vmatprep.subr.bf16.mxu0 0
        %1208 = vmatpush1.bf16.msra.mxu0 0
        %1209 = vmatprep.subr.bf16.mxu0 0
        %1210 = vmatpush1.bf16.msra.mxu0 0
        %1211 = vmatprep.subr.bf16.mxu0 0
        %1212 = vmatpush1.bf16.msra.mxu0 0
        %1213 = vmatprep.subr.bf16.mxu0 0
        %1214 = vmatpush1.bf16.msra.mxu0 0
        %1215 = vmatprep.subr.bf16.mxu0 0
        %1216 = vmatpush1.bf16.msra.mxu0 0
        %1217 = vmatprep.subr.bf16.mxu0 0
        %1218 = vmatpush1.bf16.msra.mxu0 0
        %1219 = vmatprep.subr.bf16.mxu0 0
        %1220 = vmatpush1.bf16.msra.mxu0 0
        %1221 = vmatprep.subr.bf16.mxu0 0
        %1222 = vmatpush1.bf16.msra.mxu0 0
        %1223 = vmatprep.mubr.bf16.mxu0 0
        %1224 = vmatmul.mubr.bf16.gmra.mrb[0].mxu0 %v1165
        %v1225 = vpop.f32.mrb[0].mxu0
        %v1226 = vadd.f32 0.0, %v1225
        %v1227 = vpop.f32.mrb[0].mxu0
        %v1228 = vpop.f32.mrb[0].mxu0
        %v1229 = vadd.f32 0.0, %v1228
        %v1230 = vpop.f32.mrb[0].mxu0
        %1231 = vmatprep.mubr.bf16.mxu0 0
        %1232 = vmatmul.mubr.bf16.gmra.mrb[0].mxu0 %v1168
        %v1233 = vpop.f32.mrb[0].mxu0
        %v1234 = vadd.f32 0.0, %v1233
        %v1235 = vpop.f32.mrb[0].mxu0
        %v1236 = vpop.f32.mrb[0].mxu0
        %v1237 = vadd.f32 0.0, %v1236
        %v1238 = vpop.f32.mrb[0].mxu0
        %1239 = vmatprep.mubr.bf16.mxu0 0
        %1240 = vmatmul.mubr.bf16.gmra.mrb[0].mxu0 %v1171
        %v1241 = vpop.f32.mrb[0].mxu0
        %v1242 = vadd.f32 0.0, %v1241
        %v1243 = vpop.f32.mrb[0].mxu0
        %v1244 = vpop.f32.mrb[0].mxu0
        %v1245 = vadd.f32 0.0, %v1244
        %v1246 = vpop.f32.mrb[0].mxu0
        %1247 = vmatprep.mubr.bf16.mxu0 0
        %1248 = vmatmul.mubr.bf16.gmra.mrb[0].mxu0 %v1174
        %v1249 = vpop.f32.mrb[0].mxu0
        %v1250 = vadd.f32 0.0, %v1249
        %v1251 = vpop.f32.mrb[0].mxu0
        %v1252 = vpop.f32.mrb[0].mxu0
        %v1253 = vadd.f32 0.0, %v1252
        %v1254 = vpop.f32.mrb[0].mxu0
        %1255 = vmatprep.mubr.bf16.mxu0 0
        %1256 = vmatmul.mubr.bf16.gmra.mrb[0].mxu0 %v1177
        %v1257 = vpop.f32.mrb[0].mxu0
        %v1258 = vadd.f32 0.0, %v1257
        %v1259 = vpop.f32.mrb[0].mxu0
        %v1260 = vpop.f32.mrb[0].mxu0
        %v1261 = vadd.f32 0.0, %v1260
        %v1262 = vpop.f32.mrb[0].mxu0
        %1263 = vmatprep.mubr.bf16.mxu0 0
        %1264 = vmatmul.mubr.bf16.gmra.mrb[0].mxu0 %v1180
        %v1265 = vpop.f32.mrb[0].mxu0
        %v1266 = vadd.f32 0.0, %v1265
        %v1267 = vpop.f32.mrb[0].mxu0
        %v1268 = vpop.f32.mrb[0].mxu0
        %v1269 = vadd.f32 0.0, %v1268
        %v1270 = vpop.f32.mrb[0].mxu0
        %1271 = vmatprep.mubr.bf16.mxu0 0
        %1272 = vmatmul.mubr.bf16.gmra.mrb[0].mxu0 %v1183
        %v1273 = vpop.f32.mrb[0].mxu0
        %v1274 = vadd.f32 0.0, %v1273
        %v1275 = vpop.f32.mrb[0].mxu0
        %v1276 = vpop.f32.mrb[0].mxu0
        %v1277 = vadd.f32 0.0, %v1276
        %v1278 = vpop.f32.mrb[0].mxu0
        %1279 = vmatprep.mubr.bf16.mxu0 0
        %1280 = vmatmul.mubr.bf16.gmra.mrb[0].mxu0 %v1186
        %v1281 = vpop.f32.mrb[0].mxu0
        %v1282 = vadd.f32 0.0, %v1281
        %v1283 = vpop.f32.mrb[0].mxu0
        %v1284 = vpop.f32.mrb[0].mxu0
        %v1285 = vadd.f32 0.0, %v1284
        %v1286 = vpop.f32.mrb[0].mxu0
        %1287 = vdwg.mxu0
        %v1288 = vadd.f32 %v1096, %v1226
        %v1289 = vadd.f32 %v1097, %v1229
        %v1290 = vadd.f32 %v1098, %v1234
        %v1291 = vadd.f32 %v1099, %v1237
        %v1292 = vadd.f32 %v1100, %v1242
        %v1293 = vadd.f32 %v1101, %v1245
        %v1294 = vadd.f32 %v1102, %v1250
        %v1295 = vadd.f32 %v1103, %v1253
        %v1296 = vadd.f32 %v1104, %v1258
        %v1297 = vadd.f32 %v1105, %v1261
        %v1298 = vadd.f32 %v1106, %v1266
        %v1299 = vadd.f32 %v1107, %v1269
        %v1300 = vadd.f32 %v1108, %v1274
        %v1301 = vadd.f32 %v1109, %v1277
        %v1302 = vadd.f32 %v1110, %v1282
        %v1303 = vadd.f32 %v1111, %v1285
        %v1304 = vld [vmem:[%s208] sm:$0x8]
        %s1305 = scalar_lea.vmem %s213, 24
        %v1306 = vld [vmem:[%s1305] sm:$0xf]
        %v1308 = vunpack.c.l.b16 %v1304
        %v1309 = vpack.c.b16 %v256, %v1308
        %vm1310 = vcmask 1044480
        %v1311 = vrot.slane %v1309, 3
        %v1312 = vrot.slane %v273, 3
        %v1313 = vsel %vm1310, %v1311, %v1312
        %v1314 = vrot.slane %v274, 3
        %v1315 = vsel %vm1310, %v1312, %v1314
        %v1316 = vrot.slane %v275, 3
        %v1317 = vsel %vm1310, %v1314, %v1316
        %v1318 = vrot.slane %v276, 3
        %v1319 = vsel %vm1310, %v1316, %v1318
        %v1320 = vrot.slane %v277, 3
        %v1321 = vsel %vm1310, %v1318, %v1320
        %v1322 = vrot.slane %v278, 3
        %v1323 = vsel %vm1310, %v1320, %v1322
        %v1324 = vrot.slane %v279, 3
        %v1325 = vsel %vm1310, %v1322, %v1324
        %v1326 = vrot.slane %v1117, 3
        %v1327 = vsel %vm1310, %v1324, %v1326
        %v1329 = vsel %vm350, %v1313, 0
        %v1332 = vsel %vm350, %v1315, 0
        %v1335 = vsel %vm350, %v1317, 0
        %v1338 = vsel %vm350, %v1319, 0
        %v1341 = vsel %vm350, %v1321, 0
        %v1344 = vsel %vm350, %v1323, 0
        %v1347 = vsel %vm350, %v1325, 0
        %v1350 = vsel %vm350, %v1327, 0
        %v1353 = vsel %vm375, %v1306, 0
        %1355 = vmatprep.subr.bf16.mxu0 0
        %1356 = vmatpush1.bf16.msra.mxu0 %v1353
        %1357 = vmatprep.subr.bf16.mxu0 0
        %1358 = vmatpush1.bf16.msra.mxu0 0
        %1359 = vmatprep.subr.bf16.mxu0 0
        %1360 = vmatpush1.bf16.msra.mxu0 0
        %1361 = vmatprep.subr.bf16.mxu0 0
        %1362 = vmatpush1.bf16.msra.mxu0 0
        %1363 = vmatprep.subr.bf16.mxu0 0
        %1364 = vmatpush1.bf16.msra.mxu0 0
        %1365 = vmatprep.subr.bf16.mxu0 0
        %1366 = vmatpush1.bf16.msra.mxu0 0
        %1367 = vmatprep.subr.bf16.mxu0 0
        %1368 = vmatpush1.bf16.msra.mxu0 0
        %1369 = vmatprep.subr.bf16.mxu0 0
        %1370 = vmatpush1.bf16.msra.mxu0 0
        %1371 = vmatprep.subr.bf16.mxu0 0
        %1372 = vmatpush1.bf16.msra.mxu0 0
        %1373 = vmatprep.subr.bf16.mxu0 0
        %1374 = vmatpush1.bf16.msra.mxu0 0
        %1375 = vmatprep.subr.bf16.mxu0 0
        %1376 = vmatpush1.bf16.msra.mxu0 0
        %1377 = vmatprep.subr.bf16.mxu0 0
        %1378 = vmatpush1.bf16.msra.mxu0 0
        %1379 = vmatprep.subr.bf16.mxu0 0
        %1380 = vmatpush1.bf16.msra.mxu0 0
        %1381 = vmatprep.subr.bf16.mxu0 0
        %1382 = vmatpush1.bf16.msra.mxu0 0
        %1383 = vmatprep.subr.bf16.mxu0 0
        %1384 = vmatpush1.bf16.msra.mxu0 0
        %1385 = vmatprep.subr.bf16.mxu0 0
        %1386 = vmatpush1.bf16.msra.mxu0 0
        %1387 = vmatprep.mubr.bf16.mxu0 0
        %1388 = vmatmul.mubr.bf16.gmra.mrb[0].mxu0 %v1329
        %v1389 = vpop.f32.mrb[0].mxu0
        %v1390 = vadd.f32 0.0, %v1389
        %v1391 = vpop.f32.mrb[0].mxu0
        %v1392 = vpop.f32.mrb[0].mxu0
        %v1393 = vadd.f32 0.0, %v1392
        %v1394 = vpop.f32.mrb[0].mxu0
        %1395 = vmatprep.mubr.bf16.mxu0 0
        %1396 = vmatmul.mubr.bf16.gmra.mrb[0].mxu0 %v1332
        %v1397 = vpop.f32.mrb[0].mxu0
        %v1398 = vadd.f32 0.0, %v1397
        %v1399 = vpop.f32.mrb[0].mxu0
        %v1400 = vpop.f32.mrb[0].mxu0
        %v1401 = vadd.f32 0.0, %v1400
        %v1402 = vpop.f32.mrb[0].mxu0
        %1403 = vmatprep.mubr.bf16.mxu0 0
        %1404 = vmatmul.mubr.bf16.gmra.mrb[0].mxu0 %v1335
        %v1405 = vpop.f32.mrb[0].mxu0
        %v1406 = vadd.f32 0.0, %v1405
        %v1407 = vpop.f32.mrb[0].mxu0
        %v1408 = vpop.f32.mrb[0].mxu0
        %v1409 = vadd.f32 0.0, %v1408
        %v1410 = vpop.f32.mrb[0].mxu0
        %1411 = vmatprep.mubr.bf16.mxu0 0
        %1412 = vmatmul.mubr.bf16.gmra.mrb[0].mxu0 %v1338
        %v1413 = vpop.f32.mrb[0].mxu0
        %v1414 = vadd.f32 0.0, %v1413
        %v1415 = vpop.f32.mrb[0].mxu0
        %v1416 = vpop.f32.mrb[0].mxu0
        %v1417 = vadd.f32 0.0, %v1416
        %v1418 = vpop.f32.mrb[0].mxu0
        %1419 = vmatprep.mubr.bf16.mxu0 0
        %1420 = vmatmul.mubr.bf16.gmra.mrb[0].mxu0 %v1341
        %v1421 = vpop.f32.mrb[0].mxu0
        %v1422 = vadd.f32 0.0, %v1421
        %v1423 = vpop.f32.mrb[0].mxu0
        %v1424 = vpop.f32.mrb[0].mxu0
        %v1425 = vadd.f32 0.0, %v1424
        %v1426 = vpop.f32.mrb[0].mxu0
        %1427 = vmatprep.mubr.bf16.mxu0 0
        %1428 = vmatmul.mubr.bf16.gmra.mrb[0].mxu0 %v1344
        %v1429 = vpop.f32.mrb[0].mxu0
        %v1430 = vadd.f32 0.0, %v1429
        %v1431 = vpop.f32.mrb[0].mxu0
        %v1432 = vpop.f32.mrb[0].mxu0
        %v1433 = vadd.f32 0.0, %v1432
        %v1434 = vpop.f32.mrb[0].mxu0
        %1435 = vmatprep.mubr.bf16.mxu0 0
        %1436 = vmatmul.mubr.bf16.gmra.mrb[0].mxu0 %v1347
        %v1437 = vpop.f32.mrb[0].mxu0
        %v1438 = vadd.f32 0.0, %v1437
        %v1439 = vpop.f32.mrb[0].mxu0
        %v1440 = vpop.f32.mrb[0].mxu0
        %v1441 = vadd.f32 0.0, %v1440
        %v1442 = vpop.f32.mrb[0].mxu0
        %1443 = vmatprep.mubr.bf16.mxu0 0
        %1444 = vmatmul.mubr.bf16.gmra.mrb[0].mxu0 %v1350
        %v1445 = vpop.f32.mrb[0].mxu0
        %v1446 = vadd.f32 0.0, %v1445
        %v1447 = vpop.f32.mrb[0].mxu0
        %v1448 = vpop.f32.mrb[0].mxu0
        %v1449 = vadd.f32 0.0, %v1448
        %v1450 = vpop.f32.mrb[0].mxu0
        %1451 = vdwg.mxu0
        %v1452 = vadd.f32 %v1288, %v1390
        %v1453 = vadd.f32 %v1289, %v1393
        %v1454 = vadd.f32 %v1290, %v1398
        %v1455 = vadd.f32 %v1291, %v1401
        %v1456 = vadd.f32 %v1292, %v1406
        %v1457 = vadd.f32 %v1293, %v1409
        %v1458 = vadd.f32 %v1294, %v1414
        %v1459 = vadd.f32 %v1295, %v1417
        %v1460 = vadd.f32 %v1296, %v1422
        %v1461 = vadd.f32 %v1297, %v1425
        %v1462 = vadd.f32 %v1298, %v1430
        %v1463 = vadd.f32 %v1299, %v1433
        %v1464 = vadd.f32 %v1300, %v1438
        %v1465 = vadd.f32 %v1301, %v1441
        %v1466 = vadd.f32 %v1302, %v1446
        %v1467 = vadd.f32 %v1303, %v1449
        %v1468 = vld [vmem:[%s208 + $0x40] sm:$0xf]
        %s1469 = scalar_lea.vmem %s213, 28
        %v1470 = vld [vmem:[%s1469] sm:$0xf]
        %v1472 = vunpack.c.l.b16 %v1468
        %v1473 = vpack.c.b16 %v1472, %v1472
        %vm1474 = vsmask.f32 4352
        %v1476 = vshrl.u32 %v1309, 16
        %v1478 = vrot.slane %v1476, 3
        %v1479 = vshll.u32 %v1309, 16
        %v1481 = vrot.slane %v1479, 4
        %v1482 = vor.u32 %v1478, %v1481
        %v1483 = vrot.slane %v294, 3
        %v1484 = vrot.slane %v290, 4
        %v1485 = vor.u32 %v1483, %v1484
        %v1486 = vsel %vm1474, %v1482, %v1485
        %v1487 = vrot.slane %v302, 3
        %v1488 = vrot.slane %v298, 4
        %v1489 = vor.u32 %v1487, %v1488
        %v1490 = vsel %vm1474, %v1485, %v1489
        %v1491 = vrot.slane %v310, 3
        %v1492 = vrot.slane %v306, 4
        %v1493 = vor.u32 %v1491, %v1492
        %v1494 = vsel %vm1474, %v1489, %v1493
        %v1495 = vrot.slane %v318, 3
        %v1496 = vrot.slane %v314, 4
        %v1497 = vor.u32 %v1495, %v1496
        %v1498 = vsel %vm1474, %v1493, %v1497
        %v1499 = vrot.slane %v326, 3
        %v1500 = vrot.slane %v322, 4
        %v1501 = vor.u32 %v1499, %v1500
        %v1502 = vsel %vm1474, %v1497, %v1501
        %v1503 = vrot.slane %v334, 3
        %v1504 = vrot.slane %v330, 4
        %v1505 = vor.u32 %v1503, %v1504
        %v1506 = vsel %vm1474, %v1501, %v1505
        %v1507 = vrot.slane %v342, 3
        %v1508 = vrot.slane %v338, 4
        %v1509 = vor.u32 %v1507, %v1508
        %v1510 = vsel %vm1474, %v1505, %v1509
        %v1512 = vshrl.u32 %v1473, 16
        %v1514 = vrot.slane %v1512, 3
        %v1515 = vshll.u32 %v1473, 16
        %v1517 = vrot.slane %v1515, 4
        %v1518 = vor.u32 %v1514, %v1517
        %v1519 = vsel %vm1474, %v1509, %v1518
        %v1521 = vsel %vm350, %v1486, 0
        %v1524 = vsel %vm350, %v1490, 0
        %v1527 = vsel %vm350, %v1494, 0
        %v1530 = vsel %vm350, %v1498, 0
        %v1533 = vsel %vm350, %v1502, 0
        %v1536 = vsel %vm350, %v1506, 0
        %v1539 = vsel %vm350, %v1510, 0
        %v1542 = vsel %vm350, %v1519, 0
        %v1545 = vsel %vm375, %v1470, 0
        %1547 = vmatprep.subr.bf16.mxu0 0
        %1548 = vmatpush1.bf16.msra.mxu0 %v1545
        %1549 = vmatprep.subr.bf16.mxu0 0
        %1550 = vmatpush1.bf16.msra.mxu0 0
        %1551 = vmatprep.subr.bf16.mxu0 0
        %1552 = vmatpush1.bf16.msra.mxu0 0
        %1553 = vmatprep.subr.bf16.mxu0 0
        %1554 = vmatpush1.bf16.msra.mxu0 0
        %1555 = vmatprep.subr.bf16.mxu0 0
        %1556 = vmatpush1.bf16.msra.mxu0 0
        %1557 = vmatprep.subr.bf16.mxu0 0
        %1558 = vmatpush1.bf16.msra.mxu0 0
        %1559 = vmatprep.subr.bf16.mxu0 0
        %1560 = vmatpush1.bf16.msra.mxu0 0
        %1561 = vmatprep.subr.bf16.mxu0 0
        %1562 = vmatpush1.bf16.msra.mxu0 0
        %1563 = vmatprep.subr.bf16.mxu0 0
        %1564 = vmatpush1.bf16.msra.mxu0 0
        %1565 = vmatprep.subr.bf16.mxu0 0
        %1566 = vmatpush1.bf16.msra.mxu0 0
        %1567 = vmatprep.subr.bf16.mxu0 0
        %1568 = vmatpush1.bf16.msra.mxu0 0
        %1569 = vmatprep.subr.bf16.mxu0 0
        %1570 = vmatpush1.bf16.msra.mxu0 0
        %1571 = vmatprep.subr.bf16.mxu0 0
        %1572 = vmatpush1.bf16.msra.mxu0 0
        %1573 = vmatprep.subr.bf16.mxu0 0
        %1574 = vmatpush1.bf16.msra.mxu0 0
        %1575 = vmatprep.subr.bf16.mxu0 0
        %1576 = vmatpush1.bf16.msra.mxu0 0
        %1577 = vmatprep.subr.bf16.mxu0 0
        %1578 = vmatpush1.bf16.msra.mxu0 0
        %1579 = vmatprep.mubr.bf16.mxu0 0
        %1580 = vmatmul.mubr.bf16.gmra.mrb[0].mxu0 %v1521
        %v1581 = vpop.f32.mrb[0].mxu0
        %v1582 = vadd.f32 0.0, %v1581
        %v1583 = vpop.f32.mrb[0].mxu0
        %v1584 = vpop.f32.mrb[0].mxu0
        %v1585 = vadd.f32 0.0, %v1584
        %v1586 = vpop.f32.mrb[0].mxu0
        %1587 = vmatprep.mubr.bf16.mxu0 0
        %1588 = vmatmul.mubr.bf16.gmra.mrb[0].mxu0 %v1524
        %v1589 = vpop.f32.mrb[0].mxu0
        %v1590 = vadd.f32 0.0, %v1589
        %v1591 = vpop.f32.mrb[0].mxu0
        %v1592 = vpop.f32.mrb[0].mxu0
        %v1593 = vadd.f32 0.0, %v1592
        %v1594 = vpop.f32.mrb[0].mxu0
        %1595 = vmatprep.mubr.bf16.mxu0 0
        %1596 = vmatmul.mubr.bf16.gmra.mrb[0].mxu0 %v1527
        %v1597 = vpop.f32.mrb[0].mxu0
        %v1598 = vadd.f32 0.0, %v1597
        %v1599 = vpop.f32.mrb[0].mxu0
        %v1600 = vpop.f32.mrb[0].mxu0
        %v1601 = vadd.f32 0.0, %v1600
        %v1602 = vpop.f32.mrb[0].mxu0
        %1603 = vmatprep.mubr.bf16.mxu0 0
        %1604 = vmatmul.mubr.bf16.gmra.mrb[0].mxu0 %v1530
        %v1605 = vpop.f32.mrb[0].mxu0
        %v1606 = vadd.f32 0.0, %v1605
        %v1607 = vpop.f32.mrb[0].mxu0
        %v1608 = vpop.f32.mrb[0].mxu0
        %v1609 = vadd.f32 0.0, %v1608
        %v1610 = vpop.f32.mrb[0].mxu0
        %1611 = vmatprep.mubr.bf16.mxu0 0
        %1612 = vmatmul.mubr.bf16.gmra.mrb[0].mxu0 %v1533
        %v1613 = vpop.f32.mrb[0].mxu0
        %v1614 = vadd.f32 0.0, %v1613
        %v1615 = vpop.f32.mrb[0].mxu0
        %v1616 = vpop.f32.mrb[0].mxu0
        %v1617 = vadd.f32 0.0, %v1616
        %v1618 = vpop.f32.mrb[0].mxu0
        %1619 = vmatprep.mubr.bf16.mxu0 0
        %1620 = vmatmul.mubr.bf16.gmra.mrb[0].mxu0 %v1536
        %v1621 = vpop.f32.mrb[0].mxu0
        %v1622 = vadd.f32 0.0, %v1621
        %v1623 = vpop.f32.mrb[0].mxu0
        %v1624 = vpop.f32.mrb[0].mxu0
        %v1625 = vadd.f32 0.0, %v1624
        %v1626 = vpop.f32.mrb[0].mxu0
        %1627 = vmatprep.mubr.bf16.mxu0 0
        %1628 = vmatmul.mubr.bf16.gmra.mrb[0].mxu0 %v1539
        %v1629 = vpop.f32.mrb[0].mxu0
        %v1630 = vadd.f32 0.0, %v1629
        %v1631 = vpop.f32.mrb[0].mxu0
        %v1632 = vpop.f32.mrb[0].mxu0
        %v1633 = vadd.f32 0.0, %v1632
        %v1634 = vpop.f32.mrb[0].mxu0
        %1635 = vmatprep.mubr.bf16.mxu0 0
        %1636 = vmatmul.mubr.bf16.gmra.mrb[0].mxu0 %v1542
        %v1637 = vpop.f32.mrb[0].mxu0
        %v1638 = vadd.f32 0.0, %v1637
        %v1639 = vpop.f32.mrb[0].mxu0
        %v1640 = vpop.f32.mrb[0].mxu0
        %v1641 = vadd.f32 0.0, %v1640
        %v1642 = vpop.f32.mrb[0].mxu0
        %1643 = vdwg.mxu0
        %v1644 = vadd.f32 %v1452, %v1582
        %v1645 = vadd.f32 %v1453, %v1585
        %v1646 = vadd.f32 %v1454, %v1590
        %v1647 = vadd.f32 %v1455, %v1593
        %v1648 = vadd.f32 %v1456, %v1598
        %v1649 = vadd.f32 %v1457, %v1601
        %v1650 = vadd.f32 %v1458, %v1606
        %v1651 = vadd.f32 %v1459, %v1609
        %v1652 = vadd.f32 %v1460, %v1614
        %v1653 = vadd.f32 %v1461, %v1617
        %v1654 = vadd.f32 %v1462, %v1622
        %v1655 = vadd.f32 %v1463, %v1625
        %v1656 = vadd.f32 %v1464, %v1630
        %v1657 = vadd.f32 %v1465, %v1633
        %v1658 = vadd.f32 %v1466, %v1638
        %v1659 = vadd.f32 %v1467, %v1641
        %s1660 = scalar_lea.vmem %s213, 32
        %v1661 = vld [vmem:[%s1660] sm:$0xf]
        %v1662 = vpack.c.b16 %v257, %v256
        %v1663 = vpack.c.b16 %v259, %v258
        %v1664 = vpack.c.b16 %v261, %v260
        %v1665 = vpack.c.b16 %v263, %v262
        %v1666 = vpack.c.b16 %v265, %v264
        %v1667 = vpack.c.b16 %v267, %v266
        %v1668 = vpack.c.b16 %v269, %v268
        %v1669 = vpack.c.b16 %v1472, %v270
        %v1671 = vsel %vm350, %v1662, 0
        %v1674 = vsel %vm350, %v1663, 0
        %v1677 = vsel %vm350, %v1664, 0
        %v1680 = vsel %vm350, %v1665, 0
        %v1683 = vsel %vm350, %v1666, 0
        %v1686 = vsel %vm350, %v1667, 0
        %v1689 = vsel %vm350, %v1668, 0
        %v1692 = vsel %vm350, %v1669, 0
        %v1695 = vsel %vm375, %v1661, 0
        %1697 = vmatprep.subr.bf16.mxu0 0
        %1698 = vmatpush1.bf16.msra.mxu0 %v1695
        %1699 = vmatprep.subr.bf16.mxu0 0
        %1700 = vmatpush1.bf16.msra.mxu0 0
        %1701 = vmatprep.subr.bf16.mxu0 0
        %1702 = vmatpush1.bf16.msra.mxu0 0
        %1703 = vmatprep.subr.bf16.mxu0 0
        %1704 = vmatpush1.bf16.msra.mxu0 0
        %1705 = vmatprep.subr.bf16.mxu0 0
        %1706 = vmatpush1.bf16.msra.mxu0 0
        %1707 = vmatprep.subr.bf16.mxu0 0
        %1708 = vmatpush1.bf16.msra.mxu0 0
        %1709 = vmatprep.subr.bf16.mxu0 0
        %1710 = vmatpush1.bf16.msra.mxu0 0
        %1711 = vmatprep.subr.bf16.mxu0 0
        %1712 = vmatpush1.bf16.msra.mxu0 0
        %1713 = vmatprep.subr.bf16.mxu0 0
        %1714 = vmatpush1.bf16.msra.mxu0 0
        %1715 = vmatprep.subr.bf16.mxu0 0
        %1716 = vmatpush1.bf16.msra.mxu0 0
        %1717 = vmatprep.subr.bf16.mxu0 0
        %1718 = vmatpush1.bf16.msra.mxu0 0
        %1719 = vmatprep.subr.bf16.mxu0 0
        %1720 = vmatpush1.bf16.msra.mxu0 0
        %1721 = vmatprep.subr.bf16.mxu0 0
        %1722 = vmatpush1.bf16.msra.mxu0 0
        %1723 = vmatprep.subr.bf16.mxu0 0
        %1724 = vmatpush1.bf16.msra.mxu0 0
        %1725 = vmatprep.subr.bf16.mxu0 0
        %1726 = vmatpush1.bf16.msra.mxu0 0
        %1727 = vmatprep.subr.bf16.mxu0 0
        %1728 = vmatpush1.bf16.msra.mxu0 0
        %1729 = vmatprep.mubr.bf16.mxu0 0
        %1730 = vmatmul.mubr.bf16.gmra.mrb[0].mxu0 %v1671
        %v1731 = vpop.f32.mrb[0].mxu0
        %v1732 = vadd.f32 0.0, %v1731
        %v1733 = vpop.f32.mrb[0].mxu0
        %v1734 = vpop.f32.mrb[0].mxu0
        %v1735 = vadd.f32 0.0, %v1734
        %v1736 = vpop.f32.mrb[0].mxu0
        %1737 = vmatprep.mubr.bf16.mxu0 0
        %1738 = vmatmul.mubr.bf16.gmra.mrb[0].mxu0 %v1674
        %v1739 = vpop.f32.mrb[0].mxu0
        %v1740 = vadd.f32 0.0, %v1739
        %v1741 = vpop.f32.mrb[0].mxu0
        %v1742 = vpop.f32.mrb[0].mxu0
        %v1743 = vadd.f32 0.0, %v1742
        %v1744 = vpop.f32.mrb[0].mxu0
        %1745 = vmatprep.mubr.bf16.mxu0 0
        %1746 = vmatmul.mubr.bf16.gmra.mrb[0].mxu0 %v1677
        %v1747 = vpop.f32.mrb[0].mxu0
        %v1748 = vadd.f32 0.0, %v1747
        %v1749 = vpop.f32.mrb[0].mxu0
        %v1750 = vpop.f32.mrb[0].mxu0
        %v1751 = vadd.f32 0.0, %v1750
        %v1752 = vpop.f32.mrb[0].mxu0
        %1753 = vmatprep.mubr.bf16.mxu0 0
        %1754 = vmatmul.mubr.bf16.gmra.mrb[0].mxu0 %v1680
        %v1755 = vpop.f32.mrb[0].mxu0
        %v1756 = vadd.f32 0.0, %v1755
        %v1757 = vpop.f32.mrb[0].mxu0
        %v1758 = vpop.f32.mrb[0].mxu0
        %v1759 = vadd.f32 0.0, %v1758
        %v1760 = vpop.f32.mrb[0].mxu0
        %1761 = vmatprep.mubr.bf16.mxu0 0
        %1762 = vmatmul.mubr.bf16.gmra.mrb[0].mxu0 %v1683
        %v1763 = vpop.f32.mrb[0].mxu0
        %v1764 = vadd.f32 0.0, %v1763
        %v1765 = vpop.f32.mrb[0].mxu0
        %v1766 = vpop.f32.mrb[0].mxu0
        %v1767 = vadd.f32 0.0, %v1766
        %v1768 = vpop.f32.mrb[0].mxu0
        %1769 = vmatprep.mubr.bf16.mxu0 0
        %1770 = vmatmul.mubr.bf16.gmra.mrb[0].mxu0 %v1686
        %v1771 = vpop.f32.mrb[0].mxu0
        %v1772 = vadd.f32 0.0, %v1771
        %v1773 = vpop.f32.mrb[0].mxu0
        %v1774 = vpop.f32.mrb[0].mxu0
        %v1775 = vadd.f32 0.0, %v1774
        %v1776 = vpop.f32.mrb[0].mxu0
        %1777 = vmatprep.mubr.bf16.mxu0 0
        %1778 = vmatmul.mubr.bf16.gmra.mrb[0].mxu0 %v1689
        %v1779 = vpop.f32.mrb[0].mxu0
        %v1780 = vadd.f32 0.0, %v1779
        %v1781 = vpop.f32.mrb[0].mxu0
        %v1782 = vpop.f32.mrb[0].mxu0
        %v1783 = vadd.f32 0.0, %v1782
        %v1784 = vpop.f32.mrb[0].mxu0
        %1785 = vmatprep.mubr.bf16.mxu0 0
        %1786 = vmatmul.mubr.bf16.gmra.mrb[0].mxu0 %v1692
        %v1787 = vpop.f32.mrb[0].mxu0
        %v1788 = vadd.f32 0.0, %v1787
        %v1789 = vpop.f32.mrb[0].mxu0
        %v1790 = vpop.f32.mrb[0].mxu0
        %v1791 = vadd.f32 0.0, %v1790
        %v1792 = vpop.f32.mrb[0].mxu0
        %1793 = vdwg.mxu0
        %v1794 = vadd.f32 %v1644, %v1732
        %v1795 = vadd.f32 %v1645, %v1735
        %v1796 = vadd.f32 %v1646, %v1740
        %v1797 = vadd.f32 %v1647, %v1743
        %v1798 = vadd.f32 %v1648, %v1748
        %v1799 = vadd.f32 %v1649, %v1751
        %v1800 = vadd.f32 %v1650, %v1756
        %v1801 = vadd.f32 %v1651, %v1759
        %v1802 = vadd.f32 %v1652, %v1764
        %v1803 = vadd.f32 %v1653, %v1767
        %v1804 = vadd.f32 %v1654, %v1772
        %v1805 = vadd.f32 %v1655, %v1775
        %v1806 = vadd.f32 %v1656, %v1780
        %v1807 = vadd.f32 %v1657, %v1783
        %v1808 = vadd.f32 %v1658, %v1788
        %v1809 = vadd.f32 %v1659, %v1791
        %v1810 = vld [vmem:[%s208 + $0x4] sm:$0xf]
        %v1811 = vld [vmem:[%s208 + $0x8] sm:$0xf]
        %v1812 = vld [vmem:[%s208 + $0xc] sm:$0xf]
        %v1813 = vld [vmem:[%s208 + $0x10] sm:$0xf]
        %v1814 = vld [vmem:[%s208 + $0x14] sm:$0xf]
        %v1815 = vld [vmem:[%s208 + $0x18] sm:$0xf]
        %v1816 = vld [vmem:[%s208 + $0x1c] sm:$0xf]
        %v1817 = vld [vmem:[%s208 + $0x20] sm:$0xf]
        %v1818 = vld [vmem:[%s208 + $0x24] sm:$0xf]
        %v1819 = vld [vmem:[%s208 + $0x28] sm:$0xf]
        %v1820 = vld [vmem:[%s208 + $0x2c] sm:$0xf]
        %v1821 = vld [vmem:[%s208 + $0x30] sm:$0xf]
        %v1822 = vld [vmem:[%s208 + $0x34] sm:$0xf]
        %v1823 = vld [vmem:[%s208 + $0x38] sm:$0xf]
        %v1824 = vld [vmem:[%s208 + $0x3c] sm:$0xf]
        %v1825 = vld [vmem:[%s208 + $0x40] sm:$0xf]
        %v1826 = vld [vmem:[%s208 + $0x44] sm:$0x1]
        %s1827 = scalar_lea.vmem %s213, 36
        %v1828 = vld [vmem:[%s1827] sm:$0xf]
        %v1846 = vunpack.c.l.b16 %v1810
        %v1847 = vunpack.c.l.b16 %v1811
        %v1848 = vunpack.c.l.b16 %v1812
        %v1849 = vunpack.c.l.b16 %v1813
        %v1850 = vunpack.c.l.b16 %v1814
        %v1851 = vunpack.c.l.b16 %v1815
        %v1852 = vunpack.c.l.b16 %v1816
        %v1853 = vunpack.c.l.b16 %v1817
        %v1854 = vunpack.c.l.b16 %v1818
        %v1855 = vunpack.c.l.b16 %v1819
        %v1856 = vunpack.c.l.b16 %v1820
        %v1857 = vunpack.c.l.b16 %v1821
        %v1858 = vunpack.c.l.b16 %v1822
        %v1859 = vunpack.c.l.b16 %v1823
        %v1860 = vunpack.c.l.b16 %v1824
        %v1861 = vunpack.c.l.b16 %v1825
        %v1862 = vunpack.c.l.b16 %v1826
        %v1863 = vpack.c.b16 %v1847, %v1846
        %v1864 = vpack.c.b16 %v1849, %v1848
        %v1865 = vpack.c.b16 %v1851, %v1850
        %v1866 = vpack.c.b16 %v1853, %v1852
        %v1867 = vpack.c.b16 %v1855, %v1854
        %v1868 = vpack.c.b16 %v1857, %v1856
        %v1869 = vpack.c.b16 %v1859, %v1858
        %v1870 = vpack.c.b16 %v1861, %v1860
        %v1871 = vpack.c.b16 %v1862, %v1862
        %v1873 = vshrl.u32 %v1863, 16
        %v1875 = vshll.u32 %v1863, 16
        %v1877 = vrot.slane %v1875, 1
        %v1878 = vor.u32 %v1873, %v1877
        %v1880 = vshll.u32 %v1864, 16
        %v1882 = vrot.slane %v1880, 1
        %v1883 = vsel %vm281, %v1878, %v1882
        %v1884 = vshrl.u32 %v1864, 16
        %v1886 = vor.u32 %v1884, %v1882
        %v1888 = vshll.u32 %v1865, 16
        %v1890 = vrot.slane %v1888, 1
        %v1891 = vsel %vm281, %v1886, %v1890
        %v1892 = vshrl.u32 %v1865, 16
        %v1894 = vor.u32 %v1892, %v1890
        %v1896 = vshll.u32 %v1866, 16
        %v1898 = vrot.slane %v1896, 1
        %v1899 = vsel %vm281, %v1894, %v1898
        %v1900 = vshrl.u32 %v1866, 16
        %v1902 = vor.u32 %v1900, %v1898
        %v1904 = vshll.u32 %v1867, 16
        %v1906 = vrot.slane %v1904, 1
        %v1907 = vsel %vm281, %v1902, %v1906
        %v1908 = vshrl.u32 %v1867, 16
        %v1910 = vor.u32 %v1908, %v1906
        %v1912 = vshll.u32 %v1868, 16
        %v1914 = vrot.slane %v1912, 1
        %v1915 = vsel %vm281, %v1910, %v1914
        %v1916 = vshrl.u32 %v1868, 16
        %v1918 = vor.u32 %v1916, %v1914
        %v1920 = vshll.u32 %v1869, 16
        %v1922 = vrot.slane %v1920, 1
        %v1923 = vsel %vm281, %v1918, %v1922
        %v1924 = vshrl.u32 %v1869, 16
        %v1926 = vor.u32 %v1924, %v1922
        %v1928 = vshll.u32 %v1870, 16
        %v1930 = vrot.slane %v1928, 1
        %v1931 = vsel %vm281, %v1926, %v1930
        %v1932 = vshrl.u32 %v1870, 16
        %v1934 = vor.u32 %v1932, %v1930
        %v1936 = vshll.u32 %v1871, 16
        %v1938 = vrot.slane %v1936, 1
        %v1939 = vsel %vm281, %v1934, %v1938
        %v1941 = vsel %vm350, %v1883, 0
        %v1944 = vsel %vm350, %v1891, 0
        %v1947 = vsel %vm350, %v1899, 0
        %v1950 = vsel %vm350, %v1907, 0
        %v1953 = vsel %vm350, %v1915, 0
        %v1956 = vsel %vm350, %v1923, 0
        %v1959 = vsel %vm350, %v1931, 0
        %v1962 = vsel %vm350, %v1939, 0
        %v1965 = vsel %vm375, %v1828, 0
        %1967 = vmatprep.subr.bf16.mxu0 0
        %1968 = vmatpush1.bf16.msra.mxu0 %v1965
        %1969 = vmatprep.subr.bf16.mxu0 0
        %1970 = vmatpush1.bf16.msra.mxu0 0
        %1971 = vmatprep.subr.bf16.mxu0 0
        %1972 = vmatpush1.bf16.msra.mxu0 0
        %1973 = vmatprep.subr.bf16.mxu0 0
        %1974 = vmatpush1.bf16.msra.mxu0 0
        %1975 = vmatprep.subr.bf16.mxu0 0
        %1976 = vmatpush1.bf16.msra.mxu0 0
        %1977 = vmatprep.subr.bf16.mxu0 0
        %1978 = vmatpush1.bf16.msra.mxu0 0
        %1979 = vmatprep.subr.bf16.mxu0 0
        %1980 = vmatpush1.bf16.msra.mxu0 0
        %1981 = vmatprep.subr.bf16.mxu0 0
        %1982 = vmatpush1.bf16.msra.mxu0 0
        %1983 = vmatprep.subr.bf16.mxu0 0
        %1984 = vmatpush1.bf16.msra.mxu0 0
        %1985 = vmatprep.subr.bf16.mxu0 0
        %1986 = vmatpush1.bf16.msra.mxu0 0
        %1987 = vmatprep.subr.bf16.mxu0 0
        %1988 = vmatpush1.bf16.msra.mxu0 0
        %1989 = vmatprep.subr.bf16.mxu0 0
        %1990 = vmatpush1.bf16.msra.mxu0 0
        %1991 = vmatprep.subr.bf16.mxu0 0
        %1992 = vmatpush1.bf16.msra.mxu0 0
        %1993 = vmatprep.subr.bf16.mxu0 0
        %1994 = vmatpush1.bf16.msra.mxu0 0
        %1995 = vmatprep.subr.bf16.mxu0 0
        %1996 = vmatpush1.bf16.msra.mxu0 0
        %1997 = vmatprep.subr.bf16.mxu0 0
        %1998 = vmatpush1.bf16.msra.mxu0 0
        %1999 = vmatprep.mubr.bf16.mxu0 0
        %2000 = vmatmul.mubr.bf16.gmra.mrb[0].mxu0 %v1941
        %v2001 = vpop.f32.mrb[0].mxu0
        %v2002 = vadd.f32 0.0, %v2001
        %v2003 = vpop.f32.mrb[0].mxu0
        %v2004 = vpop.f32.mrb[0].mxu0
        %v2005 = vadd.f32 0.0, %v2004
        %v2006 = vpop.f32.mrb[0].mxu0
        %2007 = vmatprep.mubr.bf16.mxu0 0
        %2008 = vmatmul.mubr.bf16.gmra.mrb[0].mxu0 %v1944
        %v2009 = vpop.f32.mrb[0].mxu0
        %v2010 = vadd.f32 0.0, %v2009
        %v2011 = vpop.f32.mrb[0].mxu0
        %v2012 = vpop.f32.mrb[0].mxu0
        %v2013 = vadd.f32 0.0, %v2012
        %v2014 = vpop.f32.mrb[0].mxu0
        %2015 = vmatprep.mubr.bf16.mxu0 0
        %2016 = vmatmul.mubr.bf16.gmra.mrb[0].mxu0 %v1947
        %v2017 = vpop.f32.mrb[0].mxu0
        %v2018 = vadd.f32 0.0, %v2017
        %v2019 = vpop.f32.mrb[0].mxu0
        %v2020 = vpop.f32.mrb[0].mxu0
        %v2021 = vadd.f32 0.0, %v2020
        %v2022 = vpop.f32.mrb[0].mxu0
        %2023 = vmatprep.mubr.bf16.mxu0 0
        %2024 = vmatmul.mubr.bf16.gmra.mrb[0].mxu0 %v1950
        %v2025 = vpop.f32.mrb[0].mxu0
        %v2026 = vadd.f32 0.0, %v2025
        %v2027 = vpop.f32.mrb[0].mxu0
        %v2028 = vpop.f32.mrb[0].mxu0
        %v2029 = vadd.f32 0.0, %v2028
        %v2030 = vpop.f32.mrb[0].mxu0
        %2031 = vmatprep.mubr.bf16.mxu0 0
        %2032 = vmatmul.mubr.bf16.gmra.mrb[0].mxu0 %v1953
        %v2033 = vpop.f32.mrb[0].mxu0
        %v2034 = vadd.f32 0.0, %v2033
        %v2035 = vpop.f32.mrb[0].mxu0
        %v2036 = vpop.f32.mrb[0].mxu0
        %v2037 = vadd.f32 0.0, %v2036
        %v2038 = vpop.f32.mrb[0].mxu0
        %2039 = vmatprep.mubr.bf16.mxu0 0
        %2040 = vmatmul.mubr.bf16.gmra.mrb[0].mxu0 %v1956
        %v2041 = vpop.f32.mrb[0].mxu0
        %v2042 = vadd.f32 0.0, %v2041
        %v2043 = vpop.f32.mrb[0].mxu0
        %v2044 = vpop.f32.mrb[0].mxu0
        %v2045 = vadd.f32 0.0, %v2044
        %v2046 = vpop.f32.mrb[0].mxu0
        %2047 = vmatprep.mubr.bf16.mxu0 0
        %2048 = vmatmul.mubr.bf16.gmra.mrb[0].mxu0 %v1959
        %v2049 = vpop.f32.mrb[0].mxu0
        %v2050 = vadd.f32 0.0, %v2049
        %v2051 = vpop.f32.mrb[0].mxu0
        %v2052 = vpop.f32.mrb[0].mxu0
        %v2053 = vadd.f32 0.0, %v2052
        %v2054 = vpop.f32.mrb[0].mxu0
        %2055 = vmatprep.mubr.bf16.mxu0 0
        %2056 = vmatmul.mubr.bf16.gmra.mrb[0].mxu0 %v1962
        %v2057 = vpop.f32.mrb[0].mxu0
        %v2058 = vadd.f32 0.0, %v2057
        %v2059 = vpop.f32.mrb[0].mxu0
        %v2060 = vpop.f32.mrb[0].mxu0
        %v2061 = vadd.f32 0.0, %v2060
        %v2062 = vpop.f32.mrb[0].mxu0
        %2063 = vdwg.mxu0
        %v2064 = vadd.f32 %v1794, %v2002
        %v2065 = vadd.f32 %v1795, %v2005
        %v2066 = vadd.f32 %v1796, %v2010
        %v2067 = vadd.f32 %v1797, %v2013
        %v2068 = vadd.f32 %v1798, %v2018
        %v2069 = vadd.f32 %v1799, %v2021
        %v2070 = vadd.f32 %v1800, %v2026
        %v2071 = vadd.f32 %v1801, %v2029
        %v2072 = vadd.f32 %v1802, %v2034
        %v2073 = vadd.f32 %v1803, %v2037
        %v2074 = vadd.f32 %v1804, %v2042
        %v2075 = vadd.f32 %v1805, %v2045
        %v2076 = vadd.f32 %v1806, %v2050
        %v2077 = vadd.f32 %v1807, %v2053
        %v2078 = vadd.f32 %v1808, %v2058
        %v2079 = vadd.f32 %v1809, %v2061
        %v2080 = vld [vmem:[%s208 + $0x4] sm:$0xe]
        %s2081 = scalar_lea.vmem %s213, 40
        %v2082 = vld [vmem:[%s2081] sm:$0xf]
        %v2084 = vunpack.c.l.b16 %v2080
        %v2085 = vpack.c.b16 %v1847, %v2084
        %v2086 = vrot.slane %v2085, 1
        %v2087 = vrot.slane %v1864, 1
        %v2088 = vsel %vm598, %v2086, %v2087
        %v2089 = vrot.slane %v1865, 1
        %v2090 = vsel %vm598, %v2087, %v2089
        %v2091 = vrot.slane %v1866, 1
        %v2092 = vsel %vm598, %v2089, %v2091
        %v2093 = vrot.slane %v1867, 1
        %v2094 = vsel %vm598, %v2091, %v2093
        %v2095 = vrot.slane %v1868, 1
        %v2096 = vsel %vm598, %v2093, %v2095
        %v2097 = vrot.slane %v1869, 1
        %v2098 = vsel %vm598, %v2095, %v2097
        %v2099 = vrot.slane %v1870, 1
        %v2100 = vsel %vm598, %v2097, %v2099
        %v2101 = vrot.slane %v1871, 1
        %v2102 = vsel %vm598, %v2099, %v2101
        %v2104 = vsel %vm350, %v2088, 0
        %v2107 = vsel %vm350, %v2090, 0
        %v2110 = vsel %vm350, %v2092, 0
        %v2113 = vsel %vm350, %v2094, 0
        %v2116 = vsel %vm350, %v2096, 0
        %v2119 = vsel %vm350, %v2098, 0
        %v2122 = vsel %vm350, %v2100, 0
        %v2125 = vsel %vm350, %v2102, 0
        %v2128 = vsel %vm375, %v2082, 0
        %2130 = vmatprep.subr.bf16.mxu0 0
        %2131 = vmatpush1.bf16.msra.mxu0 %v2128
        %2132 = vmatprep.subr.bf16.mxu0 0
        %2133 = vmatpush1.bf16.msra.mxu0 0
        %2134 = vmatprep.subr.bf16.mxu0 0
        %2135 = vmatpush1.bf16.msra.mxu0 0
        %2136 = vmatprep.subr.bf16.mxu0 0
        %2137 = vmatpush1.bf16.msra.mxu0 0
        %2138 = vmatprep.subr.bf16.mxu0 0
        %2139 = vmatpush1.bf16.msra.mxu0 0
        %2140 = vmatprep.subr.bf16.mxu0 0
        %2141 = vmatpush1.bf16.msra.mxu0 0
        %2142 = vmatprep.subr.bf16.mxu0 0
        %2143 = vmatpush1.bf16.msra.mxu0 0
        %2144 = vmatprep.subr.bf16.mxu0 0
        %2145 = vmatpush1.bf16.msra.mxu0 0
        %2146 = vmatprep.subr.bf16.mxu0 0
        %2147 = vmatpush1.bf16.msra.mxu0 0
        %2148 = vmatprep.subr.bf16.mxu0 0
        %2149 = vmatpush1.bf16.msra.mxu0 0
        %2150 = vmatprep.subr.bf16.mxu0 0
        %2151 = vmatpush1.bf16.msra.mxu0 0
        %2152 = vmatprep.subr.bf16.mxu0 0
        %2153 = vmatpush1.bf16.msra.mxu0 0
        %2154 = vmatprep.subr.bf16.mxu0 0
        %2155 = vmatpush1.bf16.msra.mxu0 0
        %2156 = vmatprep.subr.bf16.mxu0 0
        %2157 = vmatpush1.bf16.msra.mxu0 0
        %2158 = vmatprep.subr.bf16.mxu0 0
        %2159 = vmatpush1.bf16.msra.mxu0 0
        %2160 = vmatprep.subr.bf16.mxu0 0
        %2161 = vmatpush1.bf16.msra.mxu0 0
        %2162 = vmatprep.mubr.bf16.mxu0 0
        %2163 = vmatmul.mubr.bf16.gmra.mrb[0].mxu0 %v2104
        %v2164 = vpop.f32.mrb[0].mxu0
        %v2165 = vadd.f32 0.0, %v2164
        %v2166 = vpop.f32.mrb[0].mxu0
        %v2167 = vpop.f32.mrb[0].mxu0
        %v2168 = vadd.f32 0.0, %v2167
        %v2169 = vpop.f32.mrb[0].mxu0
        %2170 = vmatprep.mubr.bf16.mxu0 0
        %2171 = vmatmul.mubr.bf16.gmra.mrb[0].mxu0 %v2107
        %v2172 = vpop.f32.mrb[0].mxu0
        %v2173 = vadd.f32 0.0, %v2172
        %v2174 = vpop.f32.mrb[0].mxu0
        %v2175 = vpop.f32.mrb[0].mxu0
        %v2176 = vadd.f32 0.0, %v2175
        %v2177 = vpop.f32.mrb[0].mxu0
        %2178 = vmatprep.mubr.bf16.mxu0 0
        %2179 = vmatmul.mubr.bf16.gmra.mrb[0].mxu0 %v2110
        %v2180 = vpop.f32.mrb[0].mxu0
        %v2181 = vadd.f32 0.0, %v2180
        %v2182 = vpop.f32.mrb[0].mxu0
        %v2183 = vpop.f32.mrb[0].mxu0
        %v2184 = vadd.f32 0.0, %v2183
        %v2185 = vpop.f32.mrb[0].mxu0
        %2186 = vmatprep.mubr.bf16.mxu0 0
        %2187 = vmatmul.mubr.bf16.gmra.mrb[0].mxu0 %v2113
        %v2188 = vpop.f32.mrb[0].mxu0
        %v2189 = vadd.f32 0.0, %v2188
        %v2190 = vpop.f32.mrb[0].mxu0
        %v2191 = vpop.f32.mrb[0].mxu0
        %v2192 = vadd.f32 0.0, %v2191
        %v2193 = vpop.f32.mrb[0].mxu0
        %2194 = vmatprep.mubr.bf16.mxu0 0
        %2195 = vmatmul.mubr.bf16.gmra.mrb[0].mxu0 %v2116
        %v2196 = vpop.f32.mrb[0].mxu0
        %v2197 = vadd.f32 0.0, %v2196
        %v2198 = vpop.f32.mrb[0].mxu0
        %v2199 = vpop.f32.mrb[0].mxu0
        %v2200 = vadd.f32 0.0, %v2199
        %v2201 = vpop.f32.mrb[0].mxu0
        %2202 = vmatprep.mubr.bf16.mxu0 0
        %2203 = vmatmul.mubr.bf16.gmra.mrb[0].mxu0 %v2119
        %v2204 = vpop.f32.mrb[0].mxu0
        %v2205 = vadd.f32 0.0, %v2204
        %v2206 = vpop.f32.mrb[0].mxu0
        %v2207 = vpop.f32.mrb[0].mxu0
        %v2208 = vadd.f32 0.0, %v2207
        %v2209 = vpop.f32.mrb[0].mxu0
        %2210 = vmatprep.mubr.bf16.mxu0 0
        %2211 = vmatmul.mubr.bf16.gmra.mrb[0].mxu0 %v2122
        %v2212 = vpop.f32.mrb[0].mxu0
        %v2213 = vadd.f32 0.0, %v2212
        %v2214 = vpop.f32.mrb[0].mxu0
        %v2215 = vpop.f32.mrb[0].mxu0
        %v2216 = vadd.f32 0.0, %v2215
        %v2217 = vpop.f32.mrb[0].mxu0
        %2218 = vmatprep.mubr.bf16.mxu0 0
        %2219 = vmatmul.mubr.bf16.gmra.mrb[0].mxu0 %v2125
        %v2220 = vpop.f32.mrb[0].mxu0
        %v2221 = vadd.f32 0.0, %v2220
        %v2222 = vpop.f32.mrb[0].mxu0
        %v2223 = vpop.f32.mrb[0].mxu0
        %v2224 = vadd.f32 0.0, %v2223
        %v2225 = vpop.f32.mrb[0].mxu0
        %2226 = vdwg.mxu0
        %v2227 = vadd.f32 %v2064, %v2165
        %v2228 = vadd.f32 %v2065, %v2168
        %v2229 = vadd.f32 %v2066, %v2173
        %v2230 = vadd.f32 %v2067, %v2176
        %v2231 = vadd.f32 %v2068, %v2181
        %v2232 = vadd.f32 %v2069, %v2184
        %v2233 = vadd.f32 %v2070, %v2189
        %v2234 = vadd.f32 %v2071, %v2192
        %v2235 = vadd.f32 %v2072, %v2197
        %v2236 = vadd.f32 %v2073, %v2200
        %v2237 = vadd.f32 %v2074, %v2205
        %v2238 = vadd.f32 %v2075, %v2208
        %v2239 = vadd.f32 %v2076, %v2213
        %v2240 = vadd.f32 %v2077, %v2216
        %v2241 = vadd.f32 %v2078, %v2221
        %v2242 = vadd.f32 %v2079, %v2224
        %v2243 = vld [vmem:[%s208 + $0x44] sm:$0x3]
        %s2244 = scalar_lea.vmem %s213, 44
        %v2245 = vld [vmem:[%s2244] sm:$0xf]
        %v2247 = vunpack.c.l.b16 %v2243
        %v2248 = vpack.c.b16 %v2247, %v2247
        %v2250 = vshrl.u32 %v2085, 16
        %v2252 = vrot.slane %v2250, 1
        %v2253 = vshll.u32 %v2085, 16
        %v2255 = vrot.slane %v2253, 2
        %v2256 = vor.u32 %v2252, %v2255
        %v2257 = vrot.slane %v1884, 1
        %v2258 = vrot.slane %v1880, 2
        %v2259 = vor.u32 %v2257, %v2258
        %v2260 = vsel %vm762, %v2256, %v2259
        %v2261 = vrot.slane %v1892, 1
        %v2262 = vrot.slane %v1888, 2
        %v2263 = vor.u32 %v2261, %v2262
        %v2264 = vsel %vm762, %v2259, %v2263
        %v2265 = vrot.slane %v1900, 1
        %v2266 = vrot.slane %v1896, 2
        %v2267 = vor.u32 %v2265, %v2266
        %v2268 = vsel %vm762, %v2263, %v2267
        %v2269 = vrot.slane %v1908, 1
        %v2270 = vrot.slane %v1904, 2
        %v2271 = vor.u32 %v2269, %v2270
        %v2272 = vsel %vm762, %v2267, %v2271
        %v2273 = vrot.slane %v1916, 1
        %v2274 = vrot.slane %v1912, 2
        %v2275 = vor.u32 %v2273, %v2274
        %v2276 = vsel %vm762, %v2271, %v2275
        %v2277 = vrot.slane %v1924, 1
        %v2278 = vrot.slane %v1920, 2
        %v2279 = vor.u32 %v2277, %v2278
        %v2280 = vsel %vm762, %v2275, %v2279
        %v2281 = vrot.slane %v1932, 1
        %v2282 = vrot.slane %v1928, 2
        %v2283 = vor.u32 %v2281, %v2282
        %v2284 = vsel %vm762, %v2279, %v2283
        %v2286 = vshrl.u32 %v2248, 16
        %v2288 = vrot.slane %v2286, 1
        %v2289 = vshll.u32 %v2248, 16
        %v2291 = vrot.slane %v2289, 2
        %v2292 = vor.u32 %v2288, %v2291
        %v2293 = vsel %vm762, %v2283, %v2292
        %v2295 = vsel %vm350, %v2260, 0
        %v2298 = vsel %vm350, %v2264, 0
        %v2301 = vsel %vm350, %v2268, 0
        %v2304 = vsel %vm350, %v2272, 0
        %v2307 = vsel %vm350, %v2276, 0
        %v2310 = vsel %vm350, %v2280, 0
        %v2313 = vsel %vm350, %v2284, 0
        %v2316 = vsel %vm350, %v2293, 0
        %v2319 = vsel %vm375, %v2245, 0
        %2321 = vmatprep.subr.bf16.mxu0 0
        %2322 = vmatpush1.bf16.msra.mxu0 %v2319
        %2323 = vmatprep.subr.bf16.mxu0 0
        %2324 = vmatpush1.bf16.msra.mxu0 0
        %2325 = vmatprep.subr.bf16.mxu0 0
        %2326 = vmatpush1.bf16.msra.mxu0 0
        %2327 = vmatprep.subr.bf16.mxu0 0
        %2328 = vmatpush1.bf16.msra.mxu0 0
        %2329 = vmatprep.subr.bf16.mxu0 0
        %2330 = vmatpush1.bf16.msra.mxu0 0
        %2331 = vmatprep.subr.bf16.mxu0 0
        %2332 = vmatpush1.bf16.msra.mxu0 0
        %2333 = vmatprep.subr.bf16.mxu0 0
        %2334 = vmatpush1.bf16.msra.mxu0 0
        %2335 = vmatprep.subr.bf16.mxu0 0
        %2336 = vmatpush1.bf16.msra.mxu0 0
        %2337 = vmatprep.subr.bf16.mxu0 0
        %2338 = vmatpush1.bf16.msra.mxu0 0
        %2339 = vmatprep.subr.bf16.mxu0 0
        %2340 = vmatpush1.bf16.msra.mxu0 0
        %2341 = vmatprep.subr.bf16.mxu0 0
        %2342 = vmatpush1.bf16.msra.mxu0 0
        %2343 = vmatprep.subr.bf16.mxu0 0
        %2344 = vmatpush1.bf16.msra.mxu0 0
        %2345 = vmatprep.subr.bf16.mxu0 0
        %2346 = vmatpush1.bf16.msra.mxu0 0
        %2347 = vmatprep.subr.bf16.mxu0 0
        %2348 = vmatpush1.bf16.msra.mxu0 0
        %2349 = vmatprep.subr.bf16.mxu0 0
        %2350 = vmatpush1.bf16.msra.mxu0 0
        %2351 = vmatprep.subr.bf16.mxu0 0
        %2352 = vmatpush1.bf16.msra.mxu0 0
        %2353 = vmatprep.mubr.bf16.mxu0 0
        %2354 = vmatmul.mubr.bf16.gmra.mrb[0].mxu0 %v2295
        %v2355 = vpop.f32.mrb[0].mxu0
        %v2356 = vadd.f32 0.0, %v2355
        %v2357 = vpop.f32.mrb[0].mxu0
        %v2358 = vpop.f32.mrb[0].mxu0
        %v2359 = vadd.f32 0.0, %v2358
        %v2360 = vpop.f32.mrb[0].mxu0
        %2361 = vmatprep.mubr.bf16.mxu0 0
        %2362 = vmatmul.mubr.bf16.gmra.mrb[0].mxu0 %v2298
        %v2363 = vpop.f32.mrb[0].mxu0
        %v2364 = vadd.f32 0.0, %v2363
        %v2365 = vpop.f32.mrb[0].mxu0
        %v2366 = vpop.f32.mrb[0].mxu0
        %v2367 = vadd.f32 0.0, %v2366
        %v2368 = vpop.f32.mrb[0].mxu0
        %2369 = vmatprep.mubr.bf16.mxu0 0
        %2370 = vmatmul.mubr.bf16.gmra.mrb[0].mxu0 %v2301
        %v2371 = vpop.f32.mrb[0].mxu0
        %v2372 = vadd.f32 0.0, %v2371
        %v2373 = vpop.f32.mrb[0].mxu0
        %v2374 = vpop.f32.mrb[0].mxu0
        %v2375 = vadd.f32 0.0, %v2374
        %v2376 = vpop.f32.mrb[0].mxu0
        %2377 = vmatprep.mubr.bf16.mxu0 0
        %2378 = vmatmul.mubr.bf16.gmra.mrb[0].mxu0 %v2304
        %v2379 = vpop.f32.mrb[0].mxu0
        %v2380 = vadd.f32 0.0, %v2379
        %v2381 = vpop.f32.mrb[0].mxu0
        %v2382 = vpop.f32.mrb[0].mxu0
        %v2383 = vadd.f32 0.0, %v2382
        %v2384 = vpop.f32.mrb[0].mxu0
        %2385 = vmatprep.mubr.bf16.mxu0 0
        %2386 = vmatmul.mubr.bf16.gmra.mrb[0].mxu0 %v2307
        %v2387 = vpop.f32.mrb[0].mxu0
        %v2388 = vadd.f32 0.0, %v2387
        %v2389 = vpop.f32.mrb[0].mxu0
        %v2390 = vpop.f32.mrb[0].mxu0
        %v2391 = vadd.f32 0.0, %v2390
        %v2392 = vpop.f32.mrb[0].mxu0
        %2393 = vmatprep.mubr.bf16.mxu0 0
        %2394 = vmatmul.mubr.bf16.gmra.mrb[0].mxu0 %v2310
        %v2395 = vpop.f32.mrb[0].mxu0
        %v2396 = vadd.f32 0.0, %v2395
        %v2397 = vpop.f32.mrb[0].mxu0
        %v2398 = vpop.f32.mrb[0].mxu0
        %v2399 = vadd.f32 0.0, %v2398
        %v2400 = vpop.f32.mrb[0].mxu0
        %2401 = vmatprep.mubr.bf16.mxu0 0
        %2402 = vmatmul.mubr.bf16.gmra.mrb[0].mxu0 %v2313
        %v2403 = vpop.f32.mrb[0].mxu0
        %v2404 = vadd.f32 0.0, %v2403
        %v2405 = vpop.f32.mrb[0].mxu0
        %v2406 = vpop.f32.mrb[0].mxu0
        %v2407 = vadd.f32 0.0, %v2406
        %v2408 = vpop.f32.mrb[0].mxu0
        %2409 = vmatprep.mubr.bf16.mxu0 0
        %2410 = vmatmul.mubr.bf16.gmra.mrb[0].mxu0 %v2316
        %v2411 = vpop.f32.mrb[0].mxu0
        %v2412 = vadd.f32 0.0, %v2411
        %v2413 = vpop.f32.mrb[0].mxu0
        %v2414 = vpop.f32.mrb[0].mxu0
        %v2415 = vadd.f32 0.0, %v2414
        %v2416 = vpop.f32.mrb[0].mxu0
        %2417 = vdwg.mxu0
        %v2418 = vadd.f32 %v2227, %v2356
        %v2419 = vadd.f32 %v2228, %v2359
        %v2420 = vadd.f32 %v2229, %v2364
        %v2421 = vadd.f32 %v2230, %v2367
        %v2422 = vadd.f32 %v2231, %v2372
        %v2423 = vadd.f32 %v2232, %v2375
        %v2424 = vadd.f32 %v2233, %v2380
        %v2425 = vadd.f32 %v2234, %v2383
        %v2426 = vadd.f32 %v2235, %v2388
        %v2427 = vadd.f32 %v2236, %v2391
        %v2428 = vadd.f32 %v2237, %v2396
        %v2429 = vadd.f32 %v2238, %v2399
        %v2430 = vadd.f32 %v2239, %v2404
        %v2431 = vadd.f32 %v2240, %v2407
        %v2432 = vadd.f32 %v2241, %v2412
        %v2433 = vadd.f32 %v2242, %v2415
        %v2434 = vld [vmem:[%s208 + $0x4] sm:$0xc]
        %s2435 = scalar_lea.vmem %s213, 48
        %v2436 = vld [vmem:[%s2435] sm:$0xf]
        %v2438 = vunpack.c.l.b16 %v2434
        %v2439 = vpack.c.b16 %v1847, %v2438
        %v2440 = vrot.slane %v2439, 2
        %v2441 = vrot.slane %v1864, 2
        %v2442 = vsel %vm954, %v2440, %v2441
        %v2443 = vrot.slane %v1865, 2
        %v2444 = vsel %vm954, %v2441, %v2443
        %v2445 = vrot.slane %v1866, 2
        %v2446 = vsel %vm954, %v2443, %v2445
        %v2447 = vrot.slane %v1867, 2
        %v2448 = vsel %vm954, %v2445, %v2447
        %v2449 = vrot.slane %v1868, 2
        %v2450 = vsel %vm954, %v2447, %v2449
        %v2451 = vrot.slane %v1869, 2
        %v2452 = vsel %vm954, %v2449, %v2451
        %v2453 = vrot.slane %v1870, 2
        %v2454 = vsel %vm954, %v2451, %v2453
        %v2455 = vrot.slane %v2248, 2
        %v2456 = vsel %vm954, %v2453, %v2455
        %v2458 = vsel %vm350, %v2442, 0
        %v2461 = vsel %vm350, %v2444, 0
        %v2464 = vsel %vm350, %v2446, 0
        %v2467 = vsel %vm350, %v2448, 0
        %v2470 = vsel %vm350, %v2450, 0
        %v2473 = vsel %vm350, %v2452, 0
        %v2476 = vsel %vm350, %v2454, 0
        %v2479 = vsel %vm350, %v2456, 0
        %v2482 = vsel %vm375, %v2436, 0
        %2484 = vmatprep.subr.bf16.mxu0 0
        %2485 = vmatpush1.bf16.msra.mxu0 %v2482
        %2486 = vmatprep.subr.bf16.mxu0 0
        %2487 = vmatpush1.bf16.msra.mxu0 0
        %2488 = vmatprep.subr.bf16.mxu0 0
        %2489 = vmatpush1.bf16.msra.mxu0 0
        %2490 = vmatprep.subr.bf16.mxu0 0
        %2491 = vmatpush1.bf16.msra.mxu0 0
        %2492 = vmatprep.subr.bf16.mxu0 0
        %2493 = vmatpush1.bf16.msra.mxu0 0
        %2494 = vmatprep.subr.bf16.mxu0 0
        %2495 = vmatpush1.bf16.msra.mxu0 0
        %2496 = vmatprep.subr.bf16.mxu0 0
        %2497 = vmatpush1.bf16.msra.mxu0 0
        %2498 = vmatprep.subr.bf16.mxu0 0
        %2499 = vmatpush1.bf16.msra.mxu0 0
        %2500 = vmatprep.subr.bf16.mxu0 0
        %2501 = vmatpush1.bf16.msra.mxu0 0
        %2502 = vmatprep.subr.bf16.mxu0 0
        %2503 = vmatpush1.bf16.msra.mxu0 0
        %2504 = vmatprep.subr.bf16.mxu0 0
        %2505 = vmatpush1.bf16.msra.mxu0 0
        %2506 = vmatprep.subr.bf16.mxu0 0
        %2507 = vmatpush1.bf16.msra.mxu0 0
        %2508 = vmatprep.subr.bf16.mxu0 0
        %2509 = vmatpush1.bf16.msra.mxu0 0
        %2510 = vmatprep.subr.bf16.mxu0 0
        %2511 = vmatpush1.bf16.msra.mxu0 0
        %2512 = vmatprep.subr.bf16.mxu0 0
        %2513 = vmatpush1.bf16.msra.mxu0 0
        %2514 = vmatprep.subr.bf16.mxu0 0
        %2515 = vmatpush1.bf16.msra.mxu0 0
        %2516 = vmatprep.mubr.bf16.mxu0 0
        %2517 = vmatmul.mubr.bf16.gmra.mrb[0].mxu0 %v2458
        %v2518 = vpop.f32.mrb[0].mxu0
        %v2519 = vadd.f32 0.0, %v2518
        %v2520 = vpop.f32.mrb[0].mxu0
        %v2521 = vpop.f32.mrb[0].mxu0
        %v2522 = vadd.f32 0.0, %v2521
        %v2523 = vpop.f32.mrb[0].mxu0
        %2524 = vmatprep.mubr.bf16.mxu0 0
        %2525 = vmatmul.mubr.bf16.gmra.mrb[0].mxu0 %v2461
        %v2526 = vpop.f32.mrb[0].mxu0
        %v2527 = vadd.f32 0.0, %v2526
        %v2528 = vpop.f32.mrb[0].mxu0
        %v2529 = vpop.f32.mrb[0].mxu0
        %v2530 = vadd.f32 0.0, %v2529
        %v2531 = vpop.f32.mrb[0].mxu0
        %2532 = vmatprep.mubr.bf16.mxu0 0
        %2533 = vmatmul.mubr.bf16.gmra.mrb[0].mxu0 %v2464
        %v2534 = vpop.f32.mrb[0].mxu0
        %v2535 = vadd.f32 0.0, %v2534
        %v2536 = vpop.f32.mrb[0].mxu0
        %v2537 = vpop.f32.mrb[0].mxu0
        %v2538 = vadd.f32 0.0, %v2537
        %v2539 = vpop.f32.mrb[0].mxu0
        %2540 = vmatprep.mubr.bf16.mxu0 0
        %2541 = vmatmul.mubr.bf16.gmra.mrb[0].mxu0 %v2467
        %v2542 = vpop.f32.mrb[0].mxu0
        %v2543 = vadd.f32 0.0, %v2542
        %v2544 = vpop.f32.mrb[0].mxu0
        %v2545 = vpop.f32.mrb[0].mxu0
        %v2546 = vadd.f32 0.0, %v2545
        %v2547 = vpop.f32.mrb[0].mxu0
        %2548 = vmatprep.mubr.bf16.mxu0 0
        %2549 = vmatmul.mubr.bf16.gmra.mrb[0].mxu0 %v2470
        %v2550 = vpop.f32.mrb[0].mxu0
        %v2551 = vadd.f32 0.0, %v2550
        %v2552 = vpop.f32.mrb[0].mxu0
        %v2553 = vpop.f32.mrb[0].mxu0
        %v2554 = vadd.f32 0.0, %v2553
        %v2555 = vpop.f32.mrb[0].mxu0
        %2556 = vmatprep.mubr.bf16.mxu0 0
        %2557 = vmatmul.mubr.bf16.gmra.mrb[0].mxu0 %v2473
        %v2558 = vpop.f32.mrb[0].mxu0
        %v2559 = vadd.f32 0.0, %v2558
        %v2560 = vpop.f32.mrb[0].mxu0
        %v2561 = vpop.f32.mrb[0].mxu0
        %v2562 = vadd.f32 0.0, %v2561
        %v2563 = vpop.f32.mrb[0].mxu0
        %2564 = vmatprep.mubr.bf16.mxu0 0
        %2565 = vmatmul.mubr.bf16.gmra.mrb[0].mxu0 %v2476
        %v2566 = vpop.f32.mrb[0].mxu0
        %v2567 = vadd.f32 0.0, %v2566
        %v2568 = vpop.f32.mrb[0].mxu0
        %v2569 = vpop.f32.mrb[0].mxu0
        %v2570 = vadd.f32 0.0, %v2569
        %v2571 = vpop.f32.mrb[0].mxu0
        %2572 = vmatprep.mubr.bf16.mxu0 0
        %2573 = vmatmul.mubr.bf16.gmra.mrb[0].mxu0 %v2479
        %v2574 = vpop.f32.mrb[0].mxu0
        %v2575 = vadd.f32 0.0, %v2574
        %v2576 = vpop.f32.mrb[0].mxu0
        %v2577 = vpop.f32.mrb[0].mxu0
        %v2578 = vadd.f32 0.0, %v2577
        %v2579 = vpop.f32.mrb[0].mxu0
        %2580 = vdwg.mxu0
        %v2581 = vadd.f32 %v2418, %v2519
        %v2582 = vadd.f32 %v2419, %v2522
        %v2583 = vadd.f32 %v2420, %v2527
        %v2584 = vadd.f32 %v2421, %v2530
        %v2585 = vadd.f32 %v2422, %v2535
        %v2586 = vadd.f32 %v2423, %v2538
        %v2587 = vadd.f32 %v2424, %v2543
        %v2588 = vadd.f32 %v2425, %v2546
        %v2589 = vadd.f32 %v2426, %v2551
        %v2590 = vadd.f32 %v2427, %v2554
        %v2591 = vadd.f32 %v2428, %v2559
        %v2592 = vadd.f32 %v2429, %v2562
        %v2593 = vadd.f32 %v2430, %v2567
        %v2594 = vadd.f32 %v2431, %v2570
        %v2595 = vadd.f32 %v2432, %v2575
        %v2596 = vadd.f32 %v2433, %v2578
        %v2597 = vld [vmem:[%s208 + $0x44] sm:$0x7]
        %s2598 = scalar_lea.vmem %s213, 52
        %v2599 = vld [vmem:[%s2598] sm:$0xf]
        %v2601 = vunpack.c.l.b16 %v2597
        %v2602 = vpack.c.b16 %v2601, %v2601
        %v2604 = vshrl.u32 %v2439, 16
        %v2606 = vrot.slane %v2604, 2
        %v2607 = vshll.u32 %v2439, 16
        %v2609 = vrot.slane %v2607, 3
        %v2610 = vor.u32 %v2606, %v2609
        %v2611 = vrot.slane %v1884, 2
        %v2612 = vrot.slane %v1880, 3
        %v2613 = vor.u32 %v2611, %v2612
        %v2614 = vsel %vm1118, %v2610, %v2613
        %v2615 = vrot.slane %v1892, 2
        %v2616 = vrot.slane %v1888, 3
        %v2617 = vor.u32 %v2615, %v2616
        %v2618 = vsel %vm1118, %v2613, %v2617
        %v2619 = vrot.slane %v1900, 2
        %v2620 = vrot.slane %v1896, 3
        %v2621 = vor.u32 %v2619, %v2620
        %v2622 = vsel %vm1118, %v2617, %v2621
        %v2623 = vrot.slane %v1908, 2
        %v2624 = vrot.slane %v1904, 3
        %v2625 = vor.u32 %v2623, %v2624
        %v2626 = vsel %vm1118, %v2621, %v2625
        %v2627 = vrot.slane %v1916, 2
        %v2628 = vrot.slane %v1912, 3
        %v2629 = vor.u32 %v2627, %v2628
        %v2630 = vsel %vm1118, %v2625, %v2629
        %v2631 = vrot.slane %v1924, 2
        %v2632 = vrot.slane %v1920, 3
        %v2633 = vor.u32 %v2631, %v2632
        %v2634 = vsel %vm1118, %v2629, %v2633
        %v2635 = vrot.slane %v1932, 2
        %v2636 = vrot.slane %v1928, 3
        %v2637 = vor.u32 %v2635, %v2636
        %v2638 = vsel %vm1118, %v2633, %v2637
        %v2640 = vshrl.u32 %v2602, 16
        %v2642 = vrot.slane %v2640, 2
        %v2643 = vshll.u32 %v2602, 16
        %v2645 = vrot.slane %v2643, 3
        %v2646 = vor.u32 %v2642, %v2645
        %v2647 = vsel %vm1118, %v2637, %v2646
        %v2649 = vsel %vm350, %v2614, 0
        %v2652 = vsel %vm350, %v2618, 0
        %v2655 = vsel %vm350, %v2622, 0
        %v2658 = vsel %vm350, %v2626, 0
        %v2661 = vsel %vm350, %v2630, 0
        %v2664 = vsel %vm350, %v2634, 0
        %v2667 = vsel %vm350, %v2638, 0
        %v2670 = vsel %vm350, %v2647, 0
        %v2673 = vsel %vm375, %v2599, 0
        %2675 = vmatprep.subr.bf16.mxu0 0
        %2676 = vmatpush1.bf16.msra.mxu0 %v2673
        %2677 = vmatprep.subr.bf16.mxu0 0
        %2678 = vmatpush1.bf16.msra.mxu0 0
        %2679 = vmatprep.subr.bf16.mxu0 0
        %2680 = vmatpush1.bf16.msra.mxu0 0
        %2681 = vmatprep.subr.bf16.mxu0 0
        %2682 = vmatpush1.bf16.msra.mxu0 0
        %2683 = vmatprep.subr.bf16.mxu0 0
        %2684 = vmatpush1.bf16.msra.mxu0 0
        %2685 = vmatprep.subr.bf16.mxu0 0
        %2686 = vmatpush1.bf16.msra.mxu0 0
        %2687 = vmatprep.subr.bf16.mxu0 0
        %2688 = vmatpush1.bf16.msra.mxu0 0
        %2689 = vmatprep.subr.bf16.mxu0 0
        %2690 = vmatpush1.bf16.msra.mxu0 0
        %2691 = vmatprep.subr.bf16.mxu0 0
        %2692 = vmatpush1.bf16.msra.mxu0 0
        %2693 = vmatprep.subr.bf16.mxu0 0
        %2694 = vmatpush1.bf16.msra.mxu0 0
        %2695 = vmatprep.subr.bf16.mxu0 0
        %2696 = vmatpush1.bf16.msra.mxu0 0
        %2697 = vmatprep.subr.bf16.mxu0 0
        %2698 = vmatpush1.bf16.msra.mxu0 0
        %2699 = vmatprep.subr.bf16.mxu0 0
        %2700 = vmatpush1.bf16.msra.mxu0 0
        %2701 = vmatprep.subr.bf16.mxu0 0
        %2702 = vmatpush1.bf16.msra.mxu0 0
        %2703 = vmatprep.subr.bf16.mxu0 0
        %2704 = vmatpush1.bf16.msra.mxu0 0
        %2705 = vmatprep.subr.bf16.mxu0 0
        %2706 = vmatpush1.bf16.msra.mxu0 0
        %2707 = vmatprep.mubr.bf16.mxu0 0
        %2708 = vmatmul.mubr.bf16.gmra.mrb[0].mxu0 %v2649
        %v2709 = vpop.f32.mrb[0].mxu0
        %v2710 = vadd.f32 0.0, %v2709
        %v2711 = vpop.f32.mrb[0].mxu0
        %v2712 = vpop.f32.mrb[0].mxu0
        %v2713 = vadd.f32 0.0, %v2712
        %v2714 = vpop.f32.mrb[0].mxu0
        %2715 = vmatprep.mubr.bf16.mxu0 0
        %2716 = vmatmul.mubr.bf16.gmra.mrb[0].mxu0 %v2652
        %v2717 = vpop.f32.mrb[0].mxu0
        %v2718 = vadd.f32 0.0, %v2717
        %v2719 = vpop.f32.mrb[0].mxu0
        %v2720 = vpop.f32.mrb[0].mxu0
        %v2721 = vadd.f32 0.0, %v2720
        %v2722 = vpop.f32.mrb[0].mxu0
        %2723 = vmatprep.mubr.bf16.mxu0 0
        %2724 = vmatmul.mubr.bf16.gmra.mrb[0].mxu0 %v2655
        %v2725 = vpop.f32.mrb[0].mxu0
        %v2726 = vadd.f32 0.0, %v2725
        %v2727 = vpop.f32.mrb[0].mxu0
        %v2728 = vpop.f32.mrb[0].mxu0
        %v2729 = vadd.f32 0.0, %v2728
        %v2730 = vpop.f32.mrb[0].mxu0
        %2731 = vmatprep.mubr.bf16.mxu0 0
        %2732 = vmatmul.mubr.bf16.gmra.mrb[0].mxu0 %v2658
        %v2733 = vpop.f32.mrb[0].mxu0
        %v2734 = vadd.f32 0.0, %v2733
        %v2735 = vpop.f32.mrb[0].mxu0
        %v2736 = vpop.f32.mrb[0].mxu0
        %v2737 = vadd.f32 0.0, %v2736
        %v2738 = vpop.f32.mrb[0].mxu0
        %2739 = vmatprep.mubr.bf16.mxu0 0
        %2740 = vmatmul.mubr.bf16.gmra.mrb[0].mxu0 %v2661
        %v2741 = vpop.f32.mrb[0].mxu0
        %v2742 = vadd.f32 0.0, %v2741
        %v2743 = vpop.f32.mrb[0].mxu0
        %v2744 = vpop.f32.mrb[0].mxu0
        %v2745 = vadd.f32 0.0, %v2744
        %v2746 = vpop.f32.mrb[0].mxu0
        %2747 = vmatprep.mubr.bf16.mxu0 0
        %2748 = vmatmul.mubr.bf16.gmra.mrb[0].mxu0 %v2664
        %v2749 = vpop.f32.mrb[0].mxu0
        %v2750 = vadd.f32 0.0, %v2749
        %v2751 = vpop.f32.mrb[0].mxu0
        %v2752 = vpop.f32.mrb[0].mxu0
        %v2753 = vadd.f32 0.0, %v2752
        %v2754 = vpop.f32.mrb[0].mxu0
        %2755 = vmatprep.mubr.bf16.mxu0 0
        %2756 = vmatmul.mubr.bf16.gmra.mrb[0].mxu0 %v2667
        %v2757 = vpop.f32.mrb[0].mxu0
        %v2758 = vadd.f32 0.0, %v2757
        %v2759 = vpop.f32.mrb[0].mxu0
        %v2760 = vpop.f32.mrb[0].mxu0
        %v2761 = vadd.f32 0.0, %v2760
        %v2762 = vpop.f32.mrb[0].mxu0
        %2763 = vmatprep.mubr.bf16.mxu0 0
        %2764 = vmatmul.mubr.bf16.gmra.mrb[0].mxu0 %v2670
        %v2765 = vpop.f32.mrb[0].mxu0
        %v2766 = vadd.f32 0.0, %v2765
        %v2767 = vpop.f32.mrb[0].mxu0
        %v2768 = vpop.f32.mrb[0].mxu0
        %v2769 = vadd.f32 0.0, %v2768
        %v2770 = vpop.f32.mrb[0].mxu0
        %2771 = vdwg.mxu0
        %v2772 = vadd.f32 %v2581, %v2710
        %v2773 = vadd.f32 %v2582, %v2713
        %v2774 = vadd.f32 %v2583, %v2718
        %v2775 = vadd.f32 %v2584, %v2721
        %v2776 = vadd.f32 %v2585, %v2726
        %v2777 = vadd.f32 %v2586, %v2729
        %v2778 = vadd.f32 %v2587, %v2734
        %v2779 = vadd.f32 %v2588, %v2737
        %v2780 = vadd.f32 %v2589, %v2742
        %v2781 = vadd.f32 %v2590, %v2745
        %v2782 = vadd.f32 %v2591, %v2750
        %v2783 = vadd.f32 %v2592, %v2753
        %v2784 = vadd.f32 %v2593, %v2758
        %v2785 = vadd.f32 %v2594, %v2761
        %v2786 = vadd.f32 %v2595, %v2766
        %v2787 = vadd.f32 %v2596, %v2769
        %v2788 = vld [vmem:[%s208 + $0x4] sm:$0x8]
        %s2789 = scalar_lea.vmem %s213, 56
        %v2790 = vld [vmem:[%s2789] sm:$0xf]
        %v2792 = vunpack.c.l.b16 %v2788
        %v2793 = vpack.c.b16 %v1847, %v2792
        %v2794 = vrot.slane %v2793, 3
        %v2795 = vrot.slane %v1864, 3
        %v2796 = vsel %vm1310, %v2794, %v2795
        %v2797 = vrot.slane %v1865, 3
        %v2798 = vsel %vm1310, %v2795, %v2797
        %v2799 = vrot.slane %v1866, 3
        %v2800 = vsel %vm1310, %v2797, %v2799
        %v2801 = vrot.slane %v1867, 3
        %v2802 = vsel %vm1310, %v2799, %v2801
        %v2803 = vrot.slane %v1868, 3
        %v2804 = vsel %vm1310, %v2801, %v2803
        %v2805 = vrot.slane %v1869, 3
        %v2806 = vsel %vm1310, %v2803, %v2805
        %v2807 = vrot.slane %v1870, 3
        %v2808 = vsel %vm1310, %v2805, %v2807
        %v2809 = vrot.slane %v2602, 3
        %v2810 = vsel %vm1310, %v2807, %v2809
        %v2812 = vsel %vm350, %v2796, 0
        %v2815 = vsel %vm350, %v2798, 0
        %v2818 = vsel %vm350, %v2800, 0
        %v2821 = vsel %vm350, %v2802, 0
        %v2824 = vsel %vm350, %v2804, 0
        %v2827 = vsel %vm350, %v2806, 0
        %v2830 = vsel %vm350, %v2808, 0
        %v2833 = vsel %vm350, %v2810, 0
        %v2836 = vsel %vm375, %v2790, 0
        %2838 = vmatprep.subr.bf16.mxu0 0
        %2839 = vmatpush1.bf16.msra.mxu0 %v2836
        %2840 = vmatprep.subr.bf16.mxu0 0
        %2841 = vmatpush1.bf16.msra.mxu0 0
        %2842 = vmatprep.subr.bf16.mxu0 0
        %2843 = vmatpush1.bf16.msra.mxu0 0
        %2844 = vmatprep.subr.bf16.mxu0 0
        %2845 = vmatpush1.bf16.msra.mxu0 0
        %2846 = vmatprep.subr.bf16.mxu0 0
        %2847 = vmatpush1.bf16.msra.mxu0 0
        %2848 = vmatprep.subr.bf16.mxu0 0
        %2849 = vmatpush1.bf16.msra.mxu0 0
        %2850 = vmatprep.subr.bf16.mxu0 0
        %2851 = vmatpush1.bf16.msra.mxu0 0
        %2852 = vmatprep.subr.bf16.mxu0 0
        %2853 = vmatpush1.bf16.msra.mxu0 0
        %2854 = vmatprep.subr.bf16.mxu0 0
        %2855 = vmatpush1.bf16.msra.mxu0 0
        %2856 = vmatprep.subr.bf16.mxu0 0
        %2857 = vmatpush1.bf16.msra.mxu0 0
        %2858 = vmatprep.subr.bf16.mxu0 0
        %2859 = vmatpush1.bf16.msra.mxu0 0
        %2860 = vmatprep.subr.bf16.mxu0 0
        %2861 = vmatpush1.bf16.msra.mxu0 0
        %2862 = vmatprep.subr.bf16.mxu0 0
        %2863 = vmatpush1.bf16.msra.mxu0 0
        %2864 = vmatprep.subr.bf16.mxu0 0
        %2865 = vmatpush1.bf16.msra.mxu0 0
        %2866 = vmatprep.subr.bf16.mxu0 0
        %2867 = vmatpush1.bf16.msra.mxu0 0
        %2868 = vmatprep.subr.bf16.mxu0 0
        %2869 = vmatpush1.bf16.msra.mxu0 0
        %2870 = vmatprep.mubr.bf16.mxu0 0
        %2871 = vmatmul.mubr.bf16.gmra.mrb[0].mxu0 %v2812
        %v2872 = vpop.f32.mrb[0].mxu0
        %v2873 = vadd.f32 0.0, %v2872
        %v2874 = vpop.f32.mrb[0].mxu0
        %v2875 = vpop.f32.mrb[0].mxu0
        %v2876 = vadd.f32 0.0, %v2875
        %v2877 = vpop.f32.mrb[0].mxu0
        %2878 = vmatprep.mubr.bf16.mxu0 0
        %2879 = vmatmul.mubr.bf16.gmra.mrb[0].mxu0 %v2815
        %v2880 = vpop.f32.mrb[0].mxu0
        %v2881 = vadd.f32 0.0, %v2880
        %v2882 = vpop.f32.mrb[0].mxu0
        %v2883 = vpop.f32.mrb[0].mxu0
        %v2884 = vadd.f32 0.0, %v2883
        %v2885 = vpop.f32.mrb[0].mxu0
        %2886 = vmatprep.mubr.bf16.mxu0 0
        %2887 = vmatmul.mubr.bf16.gmra.mrb[0].mxu0 %v2818
        %v2888 = vpop.f32.mrb[0].mxu0
        %v2889 = vadd.f32 0.0, %v2888
        %v2890 = vpop.f32.mrb[0].mxu0
        %v2891 = vpop.f32.mrb[0].mxu0
        %v2892 = vadd.f32 0.0, %v2891
        %v2893 = vpop.f32.mrb[0].mxu0
        %2894 = vmatprep.mubr.bf16.mxu0 0
        %2895 = vmatmul.mubr.bf16.gmra.mrb[0].mxu0 %v2821
        %v2896 = vpop.f32.mrb[0].mxu0
        %v2897 = vadd.f32 0.0, %v2896
        %v2898 = vpop.f32.mrb[0].mxu0
        %v2899 = vpop.f32.mrb[0].mxu0
        %v2900 = vadd.f32 0.0, %v2899
        %v2901 = vpop.f32.mrb[0].mxu0
        %2902 = vmatprep.mubr.bf16.mxu0 0
        %2903 = vmatmul.mubr.bf16.gmra.mrb[0].mxu0 %v2824
        %v2904 = vpop.f32.mrb[0].mxu0
        %v2905 = vadd.f32 0.0, %v2904
        %v2906 = vpop.f32.mrb[0].mxu0
        %v2907 = vpop.f32.mrb[0].mxu0
        %v2908 = vadd.f32 0.0, %v2907
        %v2909 = vpop.f32.mrb[0].mxu0
        %2910 = vmatprep.mubr.bf16.mxu0 0
        %2911 = vmatmul.mubr.bf16.gmra.mrb[0].mxu0 %v2827
        %v2912 = vpop.f32.mrb[0].mxu0
        %v2913 = vadd.f32 0.0, %v2912
        %v2914 = vpop.f32.mrb[0].mxu0
        %v2915 = vpop.f32.mrb[0].mxu0
        %v2916 = vadd.f32 0.0, %v2915
        %v2917 = vpop.f32.mrb[0].mxu0
        %2918 = vmatprep.mubr.bf16.mxu0 0
        %2919 = vmatmul.mubr.bf16.gmra.mrb[0].mxu0 %v2830
        %v2920 = vpop.f32.mrb[0].mxu0
        %v2921 = vadd.f32 0.0, %v2920
        %v2922 = vpop.f32.mrb[0].mxu0
        %v2923 = vpop.f32.mrb[0].mxu0
        %v2924 = vadd.f32 0.0, %v2923
        %v2925 = vpop.f32.mrb[0].mxu0
        %2926 = vmatprep.mubr.bf16.mxu0 0
        %2927 = vmatmul.mubr.bf16.gmra.mrb[0].mxu0 %v2833
        %v2928 = vpop.f32.mrb[0].mxu0
        %v2929 = vadd.f32 0.0, %v2928
        %v2930 = vpop.f32.mrb[0].mxu0
        %v2931 = vpop.f32.mrb[0].mxu0
        %v2932 = vadd.f32 0.0, %v2931
        %v2933 = vpop.f32.mrb[0].mxu0
        %2934 = vdwg.mxu0
        %v2935 = vadd.f32 %v2772, %v2873
        %v2936 = vadd.f32 %v2773, %v2876
        %v2937 = vadd.f32 %v2774, %v2881
        %v2938 = vadd.f32 %v2775, %v2884
        %v2939 = vadd.f32 %v2776, %v2889
        %v2940 = vadd.f32 %v2777, %v2892
        %v2941 = vadd.f32 %v2778, %v2897
        %v2942 = vadd.f32 %v2779, %v2900
        %v2943 = vadd.f32 %v2780, %v2905
        %v2944 = vadd.f32 %v2781, %v2908
        %v2945 = vadd.f32 %v2782, %v2913
        %v2946 = vadd.f32 %v2783, %v2916
        %v2947 = vadd.f32 %v2784, %v2921
        %v2948 = vadd.f32 %v2785, %v2924
        %v2949 = vadd.f32 %v2786, %v2929
        %v2950 = vadd.f32 %v2787, %v2932
        %v2951 = vld [vmem:[%s216] sm:$0x1]
        %v2953 = vlaneseq
        %v2954 = vshrl.u32 %v2953, 7
        %v2955 = vsub.s32 0, %v2954
        %v2956 = vrot.slane %v2951, %v2955
        %v2958 = vadd.f32 %v2935, %v2956
        %v2959 = vadd.f32 %v2936, %v2956
        %v2960 = vadd.f32 %v2937, %v2956
        %v2961 = vadd.f32 %v2938, %v2956
        %v2962 = vadd.f32 %v2939, %v2956
        %v2963 = vadd.f32 %v2940, %v2956
        %v2964 = vadd.f32 %v2941, %v2956
        %v2965 = vadd.f32 %v2942, %v2956
        %v2966 = vadd.f32 %v2943, %v2956
        %v2967 = vadd.f32 %v2944, %v2956
        %v2968 = vadd.f32 %v2945, %v2956
        %v2969 = vadd.f32 %v2946, %v2956
        %v2970 = vadd.f32 %v2947, %v2956
        %v2971 = vadd.f32 %v2948, %v2956
        %v2972 = vadd.f32 %v2949, %v2956
        %v2973 = vadd.f32 %v2950, %v2956
        %vm2974 = vcmp.ge.f32.partialorder %v2958, 0.0
        %vm2975 = vcmp.ge.f32.partialorder %v2959, 0.0
        %vm2976 = vcmp.ge.f32.partialorder %v2960, 0.0
        %vm2977 = vcmp.ge.f32.partialorder %v2961, 0.0
        %vm2978 = vcmp.ge.f32.partialorder %v2962, 0.0
        %vm2979 = vcmp.ge.f32.partialorder %v2963, 0.0
        %vm2980 = vcmp.ge.f32.partialorder %v2964, 0.0
        %vm2981 = vcmp.ge.f32.partialorder %v2965, 0.0
        %vm2982 = vcmp.ge.f32.partialorder %v2966, 0.0
        %vm2983 = vcmp.ge.f32.partialorder %v2967, 0.0
        %vm2984 = vcmp.ge.f32.partialorder %v2968, 0.0
        %vm2985 = vcmp.ge.f32.partialorder %v2969, 0.0
        %vm2986 = vcmp.ge.f32.partialorder %v2970, 0.0
        %vm2987 = vcmp.ge.f32.partialorder %v2971, 0.0
        %vm2988 = vcmp.ge.f32.partialorder %v2972, 0.0
        %vm2989 = vcmp.ge.f32.partialorder %v2973, 0.0
        %v2990 = vmul.f32 %v2958, 0.1
        %v2991 = vmul.f32 %v2959, 0.1
        %v2992 = vmul.f32 %v2960, 0.1
        %v2993 = vmul.f32 %v2961, 0.1
        %v2994 = vmul.f32 %v2962, 0.1
        %v2995 = vmul.f32 %v2963, 0.1
        %v2996 = vmul.f32 %v2964, 0.1
        %v2997 = vmul.f32 %v2965, 0.1
        %v2998 = vmul.f32 %v2966, 0.1
        %v2999 = vmul.f32 %v2967, 0.1
        %v3000 = vmul.f32 %v2968, 0.1
        %v3001 = vmul.f32 %v2969, 0.1
        %v3002 = vmul.f32 %v2970, 0.1
        %v3003 = vmul.f32 %v2971, 0.1
        %v3004 = vmul.f32 %v2972, 0.1
        %v3005 = vmul.f32 %v2973, 0.1
        %v3006 = vsel %vm2974, %v2958, %v2990
        %v3007 = vsel %vm2975, %v2959, %v2991
        %v3008 = vsel %vm2976, %v2960, %v2992
        %v3009 = vsel %vm2977, %v2961, %v2993
        %v3010 = vsel %vm2978, %v2962, %v2994
        %v3011 = vsel %vm2979, %v2963, %v2995
        %v3012 = vsel %vm2980, %v2964, %v2996
        %v3013 = vsel %vm2981, %v2965, %v2997
        %v3014 = vsel %vm2982, %v2966, %v2998
        %v3015 = vsel %vm2983, %v2967, %v2999
        %v3016 = vsel %vm2984, %v2968, %v3000
        %v3017 = vsel %vm2985, %v2969, %v3001
        %v3018 = vsel %vm2986, %v2970, %v3002
        %v3019 = vsel %vm2987, %v2971, %v3003
        %v3020 = vsel %vm2988, %v2972, %v3004
        %v3021 = vsel %vm2989, %v2973, %v3005
        %v3022 = vpack.c.bf16 %v3007, %v3006
        %v3023 = vpack.c.bf16 %v3009, %v3008
        %v3024 = vpack.c.bf16 %v3011, %v3010
        %v3025 = vpack.c.bf16 %v3013, %v3012
        %v3026 = vpack.c.bf16 %v3015, %v3014
        %v3027 = vpack.c.bf16 %v3017, %v3016
        %v3028 = vpack.c.bf16 %v3019, %v3018
        %v3029 = vpack.c.bf16 %v3021, %v3020
        %v3038 = vunpack.c.l.b16 %v3022
        %v3039 = vunpack.c.h.b16 %v3022
        %v3040 = vunpack.c.l.b16 %v3023
        %v3041 = vunpack.c.h.b16 %v3023
        %v3042 = vunpack.c.l.b16 %v3024
        %v3043 = vunpack.c.h.b16 %v3024
        %v3044 = vunpack.c.l.b16 %v3025
        %v3045 = vunpack.c.h.b16 %v3025
        %v3046 = vunpack.c.l.b16 %v3026
        %v3047 = vunpack.c.h.b16 %v3026
        %v3048 = vunpack.c.l.b16 %v3027
        %v3049 = vunpack.c.h.b16 %v3027
        %v3050 = vunpack.c.l.b16 %v3028
        %v3051 = vunpack.c.h.b16 %v3028
        %v3052 = vunpack.c.l.b16 %v3029
        %v3053 = vunpack.c.h.b16 %v3029
        %v3054 = vpack.c.b16 %v3038, %v3038
        %v3055 = vpack.c.b16 %v3039, %v3039
        %v3056 = vpack.c.b16 %v3040, %v3040
        %v3057 = vpack.c.b16 %v3041, %v3041
        %v3058 = vpack.c.b16 %v3042, %v3042
        %v3059 = vpack.c.b16 %v3043, %v3043
        %v3060 = vpack.c.b16 %v3044, %v3044
        %v3061 = vpack.c.b16 %v3045, %v3045
        %v3062 = vpack.c.b16 %v3046, %v3046
        %v3063 = vpack.c.b16 %v3047, %v3047
        %v3064 = vpack.c.b16 %v3048, %v3048
        %v3065 = vpack.c.b16 %v3049, %v3049
        %v3066 = vpack.c.b16 %v3050, %v3050
        %v3067 = vpack.c.b16 %v3051, %v3051
        %v3068 = vpack.c.b16 %v3052, %v3052
        %v3069 = vpack.c.b16 %v3053, %v3053
        %3086 = vst [vmem:[%s203] sm:$0xf] %v3054
        %3087 = vst [vmem:[%s203 + $0x4] sm:$0xf] %v3055
        %3088 = vst [vmem:[%s203 + $0x8] sm:$0xf] %v3056
        %3089 = vst [vmem:[%s203 + $0xc] sm:$0xf] %v3057
        %3090 = vst [vmem:[%s203 + $0x10] sm:$0xf] %v3058
        %3091 = vst [vmem:[%s203 + $0x14] sm:$0xf] %v3059
        %3092 = vst [vmem:[%s203 + $0x18] sm:$0xf] %v3060
        %3093 = vst [vmem:[%s203 + $0x1c] sm:$0xf] %v3061
        %3094 = vst [vmem:[%s203 + $0x20] sm:$0xf] %v3062
        %3095 = vst [vmem:[%s203 + $0x24] sm:$0xf] %v3063
        %3096 = vst [vmem:[%s203 + $0x28] sm:$0xf] %v3064
        %3097 = vst [vmem:[%s203 + $0x2c] sm:$0xf] %v3065
        %3098 = vst [vmem:[%s203 + $0x30] sm:$0xf] %v3066
        %3099 = vst [vmem:[%s203 + $0x34] sm:$0xf] %v3067
        %3100 = vst [vmem:[%s203 + $0x38] sm:$0xf] %v3068
        %3101 = vst [vmem:[%s203 + $0x3c] sm:$0xf] %v3069
        %s3102 = sand.u32 %s117, 1
        %s3103 = scalar_lea.sflag [#allocation3], %s3102
        %s3104 = sand.u32 %s117, 1
        %s3105 = smul.addr %s3104, 64
        %s3106 = scalar_lea.vmem [#allocation2], %s3105
        // Predicated region
        $region33: #{tpu_custom_call.1} parent=31 // pred_check
          %p3107 = pneg %p127
        $region34: #{tpu_custom_call.1} parent=31 // pred_check_branch
          %3109 = sbr.rel (%p3107) target = $region36
        $region35: #{tpu_custom_call.1} parent=31 // pred_region
          %s3111 = ssub.s32 1024, 1024
          %3112 = vsyncadd %s3103, %s3111
          %s3113 = smul.addr %s22, 16
          %s3114 = sadd.s32 %s21, %s3113
          %s3115 = smul.addr %s3114, 64
          %s3116 = scalar_lea.hbm %s3, %s3115
          %s3117 = sshll.u32 %s3106, 4
          %s3118 = int_to_ptr.vmem [resolvable:$true] %s3117
          %3123 = dma.vmem_to_hbm [thread:$0]  %s3118, 1024, %s3116, %s3103, 64, 64, 4
        $region36: #{tpu_custom_call.1} parent=31 // pred_fallthru
          _
      $region32: #{tpu_custom_call.1} parent=5 // pred_fallthru
        _
      %p3124 = scmp.le.s32.totalorder 2, %s12
      // Predicated region
      $region37: #{tpu_custom_call.1} parent=5 // pred_check
        %p3125 = pneg %p3124
      $region38: #{tpu_custom_call.1} parent=5 // pred_check_branch
        %3127 = sbr.rel (%p3125) target = $region40
      $region39: #{tpu_custom_call.1} parent=5 // pred_region
        %s3128 = ssub.s32 %s12, 2
        // Predicated region
        $region41: #{tpu_custom_call.1} parent=39 // pred_check
          %p3129 = pneg %p133
        $region42: #{tpu_custom_call.1} parent=39 // pred_check_branch
          %3131 = sbr.rel (%p3129) target = $region44
        $region43: #{tpu_custom_call.1} parent=39 // pred_region
          %s3132 = sand.u32 %s118, 1
          %s3133 = scalar_lea.sflag [#allocation3], %s3132
          %s3134 = sand.u32 %s118, 1
          %s3135 = smul.addr %s3134, 64
          %s3136 = scalar_lea.vmem [#allocation2], %s3135
          %3137 = dma.done %s3133, 1024
        $region44: #{tpu_custom_call.1} parent=39 // pred_fallthru
          _
      $region40: #{tpu_custom_call.1} parent=5 // pred_fallthru
        _
    $region6: #{tpu_custom_call.1} parent=1 // loop_footer
      %s16 = sadd.s32 1, %s12
    $region7: #{tpu_custom_call.1} parent=1 // loop_footer_branch
      %11 = sbr.rel target = $region3
    $region8: #{tpu_custom_call.1} parent=1 // loop_exit
      _
    %3138 = vsyncpa [#allocation3], 1
    %s3139 = scalar_lea.sflag [#allocation3], 1
    %3140 = vsyncpa %s3139, 1

</llo_original>
